<compile_context>
chip_gen: v7x
topology: tpu7x:2x2x1
jax: 0.10.0
libtpu: 0.0.40
codegen_flags: <defaults>
</compile_context>

<pallas_src>
import jax
import jax.numpy as jnp
from jax.experimental import pallas as pl
from jax.experimental.pallas import tpu as pltpu

K_IN = 784           # input feature dim
H = 256              # hidden width


def _round_up(n, m):
    return ((n + m - 1) // m) * m


def _choose_tb(B, max_tb=1024):
    """Batch tile: multiple of 128 (lane-dense output relayout), >= 2 grid
    steps when possible (v7x megacore), capped for v5e scoped VMEM."""
    tb = _round_up(pl.cdiv(B, 2), 128)
    return max(128, min(max_tb, tb))


def _leaky_relu(x, slope=0.2):
    return jnp.where(x > 0, x, slope * x)


def discriminator_kernel(x_ref, w1_ref, b1_ref, w2_ref, b2_ref, w3_ref, b3_ref,
                         o_ref):
    # x tile: (TB, 784), streamed from HBM in its native dtype; bf16 cast is
    # VPU filler hidden under DMA/MXU (no-op if x is already bf16).
    x = x_ref[...].astype(jnp.bfloat16)

    # Layer 1: (TB,784) @ (784,256) on the MXU, bf16 inputs / f32 accumulate.
    h = jnp.dot(x, w1_ref[...], preferred_element_type=jnp.float32)
    h = _leaky_relu(h + b1_ref[...])                        # f32 VPU path

    # Layer 2: (TB,256) @ (256,256), bf16 MXU inputs / f32 accumulate.
    h = jnp.dot(h.astype(jnp.bfloat16), w2_ref[...],
                preferred_element_type=jnp.float32)
    h = _leaky_relu(h + b2_ref[...])                        # f32 VPU path

    # Layer 3: 256 -> 1 as VPU multiply + XLU lane reduction (skips a 1-column
    # MXU pass); bias comes from SMEM as a scalar.
    logit = jnp.sum(h * w3_ref[...], axis=-1, keepdims=True) + b3_ref[0, 0]

    # Exact sigmoid (exp on the EUP): guaranteed within [0, 1].
    prob = 1.0 / (1.0 + jnp.exp(-logit))                    # (TB, 1) f32

    # Lane-dense store: relay the (TB, 1) column into a (1, TB//128, 128) slab
    # so the output writeback uses unmasked full-width vector stores.
    tb = prob.shape[0]
    o_ref[...] = prob.reshape(1, tb // 128, 128).astype(o_ref.dtype)


def prepare_params(params):
    """One-time weight layout/dtype prep (hoisted out of the per-call path)."""
    return dict(
        w1=params["w1"].T.astype(jnp.bfloat16),              # (784, 256)
        b1=params["b1"].reshape(1, H).astype(jnp.float32),    # (1, 256)
        w2=params["w2"].T.astype(jnp.bfloat16),               # (256, 256)
        b2=params["b2"].reshape(1, H).astype(jnp.float32),    # (1, 256)
        w3=params["w3"].reshape(1, H).astype(jnp.float32),     # (1, 256) VPU
        b3=params["b3"].reshape(1, 1).astype(jnp.float32),     # SMEM scalar
    )


def discriminator_forward(x, prep, *, max_tb=1024):
    """x: (B, 784) float32 (or bfloat16). prep: output of prepare_params()."""
    B, f_in = x.shape
    assert f_in == K_IN, f_in

    TB = _choose_tb(B, max_tb)
    n_tiles = pl.cdiv(B, TB)
    rows = TB // 128                     # sublane rows per lane-dense out slab

    out = pl.pallas_call(
        discriminator_kernel,
        # Lane-dense output: (n_tiles, TB//128, 128) f32; reshaped to (B,1)
        # by the wrapper below.
        out_shape=jax.ShapeDtypeStruct((n_tiles, rows, 128), jnp.float32),
        grid=(n_tiles,),
        in_specs=[
            # Streamed per-tile x (last block may be partial; padded rows'
            # outputs are discarded by the wrapper slice).
            pl.BlockSpec((TB, K_IN), lambda i: (i, 0)),
            # Weights / biases: full-extent, constant index maps -> VMEM
            # resident across all grid steps (no re-DMA).
            pl.BlockSpec((K_IN, H), lambda i: (0, 0)),
            pl.BlockSpec((1, H), lambda i: (0, 0)),
            pl.BlockSpec((H, H), lambda i: (0, 0)),
            pl.BlockSpec((1, H), lambda i: (0, 0)),
            pl.BlockSpec((1, H), lambda i: (0, 0)),
            # Final bias as an SMEM scalar.
            pl.BlockSpec((1, 1), lambda i: (0, 0),
                         memory_space=pltpu.MemorySpace.SMEM),
        ],
        out_specs=pl.BlockSpec((1, rows, 128), lambda i: (i, 0, 0)),
        compiler_params=pltpu.CompilerParams(
            dimension_semantics=("parallel",)),
    )(x, prep["w1"], prep["b1"], prep["w2"], prep["b2"], prep["w3"], prep["b3"])

    # (n_tiles, TB//128, 128) row-major flatten == global row order.
    return out.reshape(n_tiles * TB, 1)[:B]


def init_params(key):
    """Deterministic init mirroring PyTorch nn.Linear default U(-1/sqrt(in), 1/sqrt(in))."""
    ks = jax.random.split(key, 6)

    def linear(kw, kb, fan_in, fan_out):
        bound = 1.0 / jnp.sqrt(fan_in)
        w = jax.random.uniform(kw, (fan_out, fan_in), jnp.float32, -bound, bound)
        b = jax.random.uniform(kb, (fan_out,), jnp.float32, -bound, bound)
        return w, b

    w1, b1 = linear(ks[0], ks[1], 784, 256)
    w2, b2 = linear(ks[2], ks[3], 256, 256)
    w3, b3 = linear(ks[4], ks[5], 256, 1)
    return {"w1": w1, "b1": b1, "w2": w2, "b2": b2, "w3": w3, "b3": b3}


def _reference(x, p):
    h = x @ p["w1"].T + p["b1"]
    h = jnp.where(h > 0, h, 0.2 * h)
    h = h @ p["w2"].T + p["b2"]
    h = jnp.where(h > 0, h, 0.2 * h)
    h = h @ p["w3"].T + p["b3"]
    return jax.nn.sigmoid(h)


if __name__ == "__main__":
    key = jax.random.PRNGKey(0)
    k_param, k_x = jax.random.split(key)

    params = init_params(k_param)
    prep = prepare_params(params)

    # B chosen to exercise 2 grid steps (TB=256) AND the ragged last tile
    # (300 rows -> tile 0 full, tile 1 partial).
    B = 300
    x = jax.random.normal(k_x, (B, 784), jnp.float32)

    out = jax.block_until_ready(discriminator_forward(x, prep))

    ref = _reference(x, params)
    assert out.shape == (B, 1), out.shape
    err = float(jnp.max(jnp.abs(out - ref)))
    # bf16 MXU inputs vs. pure-f32 reference.
    assert err < 2e-2, f"max abs err {err}"
    assert bool(jnp.all((out >= 0.0) & (out <= 1.0)))

    print("KERNEL_OK")
</pallas_src>

<mosaic_0001>
module attributes {stable_mosaic.version = 11 : i64} {
  func.func @discriminator_kernel(%arg0: i32, %arg1: memref<256x784xf32, #tpu.memory_space<vmem>>, %arg2: memref<784x256xbf16, #tpu.memory_space<vmem>>, %arg3: memref<1x256xf32, #tpu.memory_space<vmem>>, %arg4: memref<256x256xbf16, #tpu.memory_space<vmem>>, %arg5: memref<1x256xf32, #tpu.memory_space<vmem>>, %arg6: memref<1x256xf32, #tpu.memory_space<vmem>>, %arg7: memref<1x1xf32, #tpu.memory_space<smem>>, %arg8: memref<1x2x128xf32, #tpu.memory_space<vmem>>) attributes {dimension_semantics = [#tpu.dimension_semantics<parallel>], iteration_bounds = array<i64: 2>, scalar_prefetch = 0 : i64, scratch_operands = 0 : i64, tpu.core_type = #tpu.core_type<tc>, window_params = [{transform_indices = @transform_0, window_bounds = array<i64: 256, 784>}, {pipeline_mode = #tpu.pipeline_mode<synchronous>, transform_indices = @transform_1, window_bounds = array<i64: 784, 256>}, {pipeline_mode = #tpu.pipeline_mode<synchronous>, transform_indices = @transform_2, window_bounds = array<i64: 1, 256>}, {pipeline_mode = #tpu.pipeline_mode<synchronous>, transform_indices = @transform_3, window_bounds = array<i64: 256, 256>}, {pipeline_mode = #tpu.pipeline_mode<synchronous>, transform_indices = @transform_4, window_bounds = array<i64: 1, 256>}, {pipeline_mode = #tpu.pipeline_mode<synchronous>, transform_indices = @transform_5, window_bounds = array<i64: 1, 256>}, {transform_indices = @transform_6, window_bounds = array<i64: 1, 1>}, {transform_indices = @transform_7, window_bounds = array<i64: 1, 2, 128>}]} {
    %c0 = arith.constant 0 : index
    %c0_0 = arith.constant 0 : index
    %0 = vector.load %arg1[%c0, %c0_0] : memref<256x784xf32, #tpu.memory_space<vmem>>, vector<256x784xf32>
    %1 = arith.truncf %0 : vector<256x784xf32> to vector<256x784xbf16>
    %c0_1 = arith.constant 0 : index
    %c0_2 = arith.constant 0 : index
    %2 = vector.load %arg2[%c0_1, %c0_2] : memref<784x256xbf16, #tpu.memory_space<vmem>>, vector<784x256xbf16>
    %cst = arith.constant dense<0.000000e+00> : vector<256x256xf32>
    %3 = tpu.matmul %1, %2, %cst {dimension_numbers = #tpu.dot_dimension_numbers<[1], [0], [0], [1], [0, 0, 1, 1], [], []>} : vector<256x784xbf16>, vector<784x256xbf16>, vector<256x256xf32> -> vector<256x256xf32>
    %c0_3 = arith.constant 0 : index
    %c0_4 = arith.constant 0 : index
    %4 = vector.load %arg3[%c0_3, %c0_4] : memref<1x256xf32, #tpu.memory_space<vmem>>, vector<1x256xf32>
    %5 = vector.broadcast %4 : vector<1x256xf32> to vector<256x256xf32>
    %6 = arith.addf %3, %5 : vector<256x256xf32>
    %cst_5 = arith.constant 0.000000e+00 : f32
    %7 = vector.broadcast %cst_5 : f32 to vector<256x256xf32>
    %8 = arith.cmpf ogt, %6, %7 : vector<256x256xf32>
    %cst_6 = arith.constant 2.000000e-01 : f32
    %9 = vector.broadcast %cst_6 : f32 to vector<256x256xf32>
    %10 = arith.mulf %9, %6 : vector<256x256xf32>
    %11 = arith.select %8, %6, %10 : vector<256x256xi1>, vector<256x256xf32>
    %12 = arith.truncf %11 : vector<256x256xf32> to vector<256x256xbf16>
    %c0_7 = arith.constant 0 : index
    %c0_8 = arith.constant 0 : index
    %13 = vector.load %arg4[%c0_7, %c0_8] : memref<256x256xbf16, #tpu.memory_space<vmem>>, vector<256x256xbf16>
    %cst_9 = arith.constant dense<0.000000e+00> : vector<256x256xf32>
    %14 = tpu.matmul %12, %13, %cst_9 {dimension_numbers = #tpu.dot_dimension_numbers<[1], [0], [0], [1], [0, 0, 1, 1], [], []>} : vector<256x256xbf16>, vector<256x256xbf16>, vector<256x256xf32> -> vector<256x256xf32>
    %c0_10 = arith.constant 0 : index
    %c0_11 = arith.constant 0 : index
    %15 = vector.load %arg5[%c0_10, %c0_11] : memref<1x256xf32, #tpu.memory_space<vmem>>, vector<1x256xf32>
    %16 = vector.broadcast %15 : vector<1x256xf32> to vector<256x256xf32>
    %17 = arith.addf %14, %16 : vector<256x256xf32>
    %cst_12 = arith.constant 0.000000e+00 : f32
    %18 = vector.broadcast %cst_12 : f32 to vector<256x256xf32>
    %19 = arith.cmpf ogt, %17, %18 : vector<256x256xf32>
    %cst_13 = arith.constant 2.000000e-01 : f32
    %20 = vector.broadcast %cst_13 : f32 to vector<256x256xf32>
    %21 = arith.mulf %20, %17 : vector<256x256xf32>
    %22 = arith.select %19, %17, %21 : vector<256x256xi1>, vector<256x256xf32>
    %c0_14 = arith.constant 0 : index
    %c0_15 = arith.constant 0 : index
    %23 = vector.load %arg6[%c0_14, %c0_15] : memref<1x256xf32, #tpu.memory_space<vmem>>, vector<1x256xf32>
    %24 = vector.broadcast %23 : vector<1x256xf32> to vector<256x256xf32>
    %25 = arith.mulf %22, %24 : vector<256x256xf32>
    %cst_16 = arith.constant dense<0.000000e+00> : vector<256xf32>
    %26 = vector.multi_reduction <add>, %25, %cst_16 [1] : vector<256x256xf32> to vector<256xf32>
    %27 = vector.shape_cast %26 : vector<256xf32> to vector<256x1xf32>
    %c0_17 = arith.constant 0 : index
    %c0_18 = arith.constant 0 : index
    %28 = memref.load %arg7[%c0_17, %c0_18] : memref<1x1xf32, #tpu.memory_space<smem>>
    %29 = vector.broadcast %28 : f32 to vector<256x1xf32>
    %30 = arith.addf %27, %29 : vector<256x1xf32>
    %cst_19 = arith.constant 0.000000e+00 : f32
    %31 = vector.broadcast %cst_19 : f32 to vector<256x1xf32>
    %32 = arith.subf %31, %30 : vector<256x1xf32>
    %33 = math.exp %32 : vector<256x1xf32>
    %cst_20 = arith.constant 1.000000e+00 : f32
    %34 = vector.broadcast %cst_20 : f32 to vector<256x1xf32>
    %35 = arith.addf %34, %33 : vector<256x1xf32>
    %cst_21 = arith.constant 1.000000e+00 : f32
    %36 = vector.broadcast %cst_21 : f32 to vector<256x1xf32>
    %37 = arith.divf %36, %35 : vector<256x1xf32>
    %38 = vector.shape_cast %37 : vector<256x1xf32> to vector<1x2x128xf32>
    %c0_22 = arith.constant 0 : index
    %c0_23 = arith.constant 0 : index
    %c0_24 = arith.constant 0 : index
    %39 = vector.load %arg8[%c0_22, %c0_23, %c0_24] : memref<1x2x128xf32, #tpu.memory_space<vmem>>, vector<1x2x128xf32>
    tpu.vector_store %arg8[%c0_22, %c0_23, %c0_24], %38 {strides = array<i32>} : memref<1x2x128xf32, #tpu.memory_space<vmem>>, vector<1x2x128xf32>,
    return
  }
  func.func @transform_0(%arg0: i32) -> (i32, i32) {
    %c0_i32 = arith.constant 0 : i32
    %c0_i32_0 = arith.constant 0 : i32
    return %arg0, %c0_i32 : i32, i32
  }
  func.func @transform_1(%arg0: i32) -> (i32, i32) {
    %c0_i32 = arith.constant 0 : i32
    %c0_i32_0 = arith.constant 0 : i32
    %c0_i32_1 = arith.constant 0 : i32
    return %c0_i32, %c0_i32_0 : i32, i32
  }
  func.func @transform_2(%arg0: i32) -> (i32, i32) {
    %c0_i32 = arith.constant 0 : i32
    %c0_i32_0 = arith.constant 0 : i32
    %c0_i32_1 = arith.constant 0 : i32
    return %c0_i32, %c0_i32_0 : i32, i32
  }
  func.func @transform_3(%arg0: i32) -> (i32, i32) {
    %c0_i32 = arith.constant 0 : i32
    %c0_i32_0 = arith.constant 0 : i32
    %c0_i32_1 = arith.constant 0 : i32
    return %c0_i32, %c0_i32_0 : i32, i32
  }
  func.func @transform_4(%arg0: i32) -> (i32, i32) {
    %c0_i32 = arith.constant 0 : i32
    %c0_i32_0 = arith.constant 0 : i32
    %c0_i32_1 = arith.constant 0 : i32
    return %c0_i32, %c0_i32_0 : i32, i32
  }
  func.func @transform_5(%arg0: i32) -> (i32, i32) {
    %c0_i32 = arith.constant 0 : i32
    %c0_i32_0 = arith.constant 0 : i32
    %c0_i32_1 = arith.constant 0 : i32
    return %c0_i32, %c0_i32_0 : i32, i32
  }
  func.func @transform_6(%arg0: i32) -> (i32, i32) {
    %c0_i32 = arith.constant 0 : i32
    %c0_i32_0 = arith.constant 0 : i32
    %c0_i32_1 = arith.constant 0 : i32
    return %c0_i32, %c0_i32_0 : i32, i32
  }
  func.func @transform_7(%arg0: i32) -> (i32, i32, i32) {
    %c0_i32 = arith.constant 0 : i32
    %c0_i32_0 = arith.constant 0 : i32
    %c0_i32_1 = arith.constant 0 : i32
    return %arg0, %c0_i32, %c0_i32_0 : i32, i32, i32
  }
}

</mosaic_0001>

<llo_original>
// kernel: tpu_custom_call.1
$region0: #{tpu_custom_call.1}
  #allocation0 [shape = 'u32[]', space=smem, size = 0x4, offset = 0x4, fixed_abs, tag = 'smem constant byte address 0x4 - core index']
  #allocation1 [shape = 'u32[144,128]{1,0:T(1,128)}', space=vmem, size = 0x12000, scoped, tag = 'internal scratch']
  #allocation2 [shape = 'f32[1,1]{1,0:T(1,128)S(6)}', space=smem, size = 0x200, scoped, tag = 'scoped memory for tpu_custom_call.1']
  %s0 = inlined_call_operand.hbm [shape: f32[300,784], index: 0, kind: input, shape index: {}]
  %s1 = inlined_call_operand.hbm [shape: bf16[784,256], index: 1, kind: input, shape index: {}]
  %s2 = inlined_call_operand.hbm [shape: f32[1,256], index: 2, kind: input, shape index: {}]
  %s3 = inlined_call_operand.hbm [shape: bf16[256,256], index: 3, kind: input, shape index: {}]
  %s4 = inlined_call_operand.hbm [shape: f32[1,256], index: 4, kind: input, shape index: {}]
  %s5 = inlined_call_operand.hbm [shape: f32[1,256], index: 5, kind: input, shape index: {}]
  %s6 = inlined_call_operand.<no memory space> [shape: f32[1,1], index: 6, kind: input, shape index: {}]
  %s7 = inlined_call_operand.hbm [shape: f32[2,2,128], index: 7, kind: output, shape index: {}]
  %s8 = sld [smem:[#allocation0]]
  $region85: #{tpu_custom_call.1} parent=0
    _
  %s10 = ssub.s32 1, %s8
  %s11 = scalar_select 0, %s10, %s8
  %12 = sst [smem:[#allocation2]] %s6
  $region1: #{tpu_custom_call.1} parent=0
    #allocation3 [shape = 'u8[1835008]{0}', space=vmem, size = 0x1c0000, scoped, tag = 'input window, operand 0']
    #allocation4 [shape = 's32[2]{0}', space=sflag, size = 0x8, scoped, tag = 'scoped memory for tpu_custom_call.1']
    #allocation5 [shape = 's32[2]{0}', space=sflag, size = 0x8, scoped, tag = 'scoped memory for tpu_custom_call.1']
    #allocation6 [shape = 'u8[401408]{0}', space=vmem, size = 0x62000, scoped, tag = 'input window, operand 1, single buffered']
    #allocation7 [shape = 's32[1]{0}', space=sflag, size = 0x4, scoped, tag = 'scoped memory for tpu_custom_call.1']
    #allocation8 [shape = 'u8[1024]{0}', space=vmem, size = 0x400, scoped, tag = 'input window, operand 2, single buffered']
    #allocation9 [shape = 'u8[131072]{0}', space=vmem, size = 0x20000, scoped, tag = 'input window, operand 3, single buffered']
    #allocation10 [shape = 's32[1]{0}', space=sflag, size = 0x4, scoped, tag = 'scoped memory for tpu_custom_call.1']
    #allocation11 [shape = 'u8[1024]{0}', space=vmem, size = 0x400, scoped, tag = 'input window, operand 4, single buffered']
    #allocation12 [shape = 'u8[1024]{0}', space=vmem, size = 0x400, scoped, tag = 'input window, operand 5, single buffered']
    #allocation13 [shape = 's32[1]{0}', space=sflag, size = 0x4, scoped, tag = 'scoped memory for tpu_custom_call.1']
    #allocation14 [shape = 'u8[2048]{0}', space=vmem, size = 0x800, scoped, tag = 'output window, operand 0']
    %13 = vsyncpa [#allocation4], 0
    %s14 = scalar_lea.sflag [#allocation4], 1
    %15 = vsyncpa %s14, 0
    %16 = vsyncpa [#allocation7], 0
    %17 = vsyncpa [#allocation10], 0
    %18 = vsyncpa [#allocation13], 0
    %19 = vsyncpa [#allocation5], 0
    %s20 = scalar_lea.sflag [#allocation5], 1
    %21 = vsyncpa %s20, 0
    loop: start=0, step=1, limit=4
    $region2: #{tpu_custom_call.1} parent=1 // loop_pre_header
      _
    $region3: #{tpu_custom_call.1} parent=1 // loop_header
      %s23 = sphi 0, %s27
      %p24 = scmp.ge.s32.totalorder %s23, 4
      %s33 = sphi 0, %s35
      %s36 = sphi 0, %s33
      %s37 = sphi 0, %s36
      %s53 = sphi 0, %s37
      %s57 = sphi 0, %s57
      %s59 = sphi 0, %s57
      %s60 = sphi 0, %s59
      %s74 = sphi 0, %s60
      %s78 = sphi 0, %s78
      %s80 = sphi 0, %s78
      %s81 = sphi 0, %s80
      %s95 = sphi 0, %s81
      %s99 = sphi 0, %s99
      %s101 = sphi 0, %s99
      %s102 = sphi 0, %s101
      %s116 = sphi 0, %s102
      %s120 = sphi 0, %s120
      %s122 = sphi 0, %s120
      %s123 = sphi 0, %s122
      %s137 = sphi 0, %s123
      %s141 = sphi 0, %s141
      %s143 = sphi 0, %s141
      %s144 = sphi 0, %s143
      %s158 = sphi 0, %s144
      %s162 = sphi 0, %s162
      %s164 = sphi 0, %s162
      %s165 = sphi 0, %s164
      %s179 = sphi 0, %s165
      %s185 = sphi 0, %s187
      %s188 = sphi 0, %s185
      %s189 = sphi 0, %s188
      %s205 = sphi 0, %s189
    $region4: #{tpu_custom_call.1} parent=1 // loop_header_branch
      %26 = sbr.rel (%p24) target = $region8
    $region5: #{tpu_custom_call.1} parent=1 // loop_body
      %s28 = ssub.s32 %s23, 1
      %s29 = ssub.s32 %s23, 2
      %s30 = sadd.s32 %s23, 1
      %s31 = ssub.s32 %s23, %s30
      %p32 = scmp.eq.s32.totalorder %s31, 0
      %s34 = sadd.s32 %s33, 1
      %s35 = scalar_select %p32, %s33, %s34
      %p38 = pneg %p32
      %p39 = scmp.eq.s32.totalorder %s23, 1
      %p40 = por %p38, %p39
      %p41 = scmp.ne.s32.totalorder %s33, %s36
      %p42 = scmp.eq.s32.totalorder %s23, 0
      %p43 = por %p41, %p42
      %p44 = scmp.ne.s32.totalorder %s33, %s36
      %p45 = scmp.eq.s32.totalorder %s28, 1
      %p46 = por %p44, %p45
      %p47 = scmp.ne.s32.totalorder %s36, %s37
      %p48 = scmp.eq.s32.totalorder %s28, 0
      %p49 = por %p47, %p48
      %p50 = scmp.ne.s32.totalorder %s36, %s37
      %p51 = scmp.eq.s32.totalorder %s29, 1
      %p52 = por %p50, %p51
      %p54 = scmp.ne.s32.totalorder %s37, %s53
      %p55 = scmp.eq.s32.totalorder %s29, 0
      %p56 = por %p54, %p55
      %s58 = sadd.s32 %s57, 1
      %p61 = scmp.eq.s32.totalorder %s23, 1
      %p62 = scmp.ne.s32.totalorder %s57, %s59
      %p63 = scmp.eq.s32.totalorder %s23, 0
      %p64 = por %p62, %p63
      %p65 = scmp.ne.s32.totalorder %s57, %s59
      %p66 = scmp.eq.s32.totalorder %s28, 1
      %p67 = por %p65, %p66
      %p68 = scmp.ne.s32.totalorder %s59, %s60
      %p69 = scmp.eq.s32.totalorder %s28, 0
      %p70 = por %p68, %p69
      %p71 = scmp.ne.s32.totalorder %s59, %s60
      %p72 = scmp.eq.s32.totalorder %s29, 1
      %p73 = por %p71, %p72
      %p75 = scmp.ne.s32.totalorder %s60, %s74
      %p76 = scmp.eq.s32.totalorder %s29, 0
      %p77 = por %p75, %p76
      %s79 = sadd.s32 %s78, 1
      %p82 = scmp.eq.s32.totalorder %s23, 1
      %p83 = scmp.ne.s32.totalorder %s78, %s80
      %p84 = scmp.eq.s32.totalorder %s23, 0
      %p85 = por %p83, %p84
      %p86 = scmp.ne.s32.totalorder %s78, %s80
      %p87 = scmp.eq.s32.totalorder %s28, 1
      %p88 = por %p86, %p87
      %p89 = scmp.ne.s32.totalorder %s80, %s81
      %p90 = scmp.eq.s32.totalorder %s28, 0
      %p91 = por %p89, %p90
      %p92 = scmp.ne.s32.totalorder %s80, %s81
      %p93 = scmp.eq.s32.totalorder %s29, 1
      %p94 = por %p92, %p93
      %p96 = scmp.ne.s32.totalorder %s81, %s95
      %p97 = scmp.eq.s32.totalorder %s29, 0
      %p98 = por %p96, %p97
      %s100 = sadd.s32 %s99, 1
      %p103 = scmp.eq.s32.totalorder %s23, 1
      %p104 = scmp.ne.s32.totalorder %s99, %s101
      %p105 = scmp.eq.s32.totalorder %s23, 0
      %p106 = por %p104, %p105
      %p107 = scmp.ne.s32.totalorder %s99, %s101
      %p108 = scmp.eq.s32.totalorder %s28, 1
      %p109 = por %p107, %p108
      %p110 = scmp.ne.s32.totalorder %s101, %s102
      %p111 = scmp.eq.s32.totalorder %s28, 0
      %p112 = por %p110, %p111
      %p113 = scmp.ne.s32.totalorder %s101, %s102
      %p114 = scmp.eq.s32.totalorder %s29, 1
      %p115 = por %p113, %p114
      %p117 = scmp.ne.s32.totalorder %s102, %s116
      %p118 = scmp.eq.s32.totalorder %s29, 0
      %p119 = por %p117, %p118
      %s121 = sadd.s32 %s120, 1
      %p124 = scmp.eq.s32.totalorder %s23, 1
      %p125 = scmp.ne.s32.totalorder %s120, %s122
      %p126 = scmp.eq.s32.totalorder %s23, 0
      %p127 = por %p125, %p126
      %p128 = scmp.ne.s32.totalorder %s120, %s122
      %p129 = scmp.eq.s32.totalorder %s28, 1
      %p130 = por %p128, %p129
      %p131 = scmp.ne.s32.totalorder %s122, %s123
      %p132 = scmp.eq.s32.totalorder %s28, 0
      %p133 = por %p131, %p132
      %p134 = scmp.ne.s32.totalorder %s122, %s123
      %p135 = scmp.eq.s32.totalorder %s29, 1
      %p136 = por %p134, %p135
      %p138 = scmp.ne.s32.totalorder %s123, %s137
      %p139 = scmp.eq.s32.totalorder %s29, 0
      %p140 = por %p138, %p139
      %s142 = sadd.s32 %s141, 1
      %p145 = scmp.eq.s32.totalorder %s23, 1
      %p146 = scmp.ne.s32.totalorder %s141, %s143
      %p147 = scmp.eq.s32.totalorder %s23, 0
      %p148 = por %p146, %p147
      %p149 = scmp.ne.s32.totalorder %s141, %s143
      %p150 = scmp.eq.s32.totalorder %s28, 1
      %p151 = por %p149, %p150
      %p152 = scmp.ne.s32.totalorder %s143, %s144
      %p153 = scmp.eq.s32.totalorder %s28, 0
      %p154 = por %p152, %p153
      %p155 = scmp.ne.s32.totalorder %s143, %s144
      %p156 = scmp.eq.s32.totalorder %s29, 1
      %p157 = por %p155, %p156
      %p159 = scmp.ne.s32.totalorder %s144, %s158
      %p160 = scmp.eq.s32.totalorder %s29, 0
      %p161 = por %p159, %p160
      %s163 = sadd.s32 %s162, 1
      %p166 = scmp.eq.s32.totalorder %s23, 1
      %p167 = scmp.ne.s32.totalorder %s162, %s164
      %p168 = scmp.eq.s32.totalorder %s23, 0
      %p169 = por %p167, %p168
      %p170 = scmp.ne.s32.totalorder %s162, %s164
      %p171 = scmp.eq.s32.totalorder %s28, 1
      %p172 = por %p170, %p171
      %p173 = scmp.ne.s32.totalorder %s164, %s165
      %p174 = scmp.eq.s32.totalorder %s28, 0
      %p175 = por %p173, %p174
      %p176 = scmp.ne.s32.totalorder %s164, %s165
      %p177 = scmp.eq.s32.totalorder %s29, 1
      %p178 = por %p176, %p177
      %p180 = scmp.ne.s32.totalorder %s165, %s179
      %p181 = scmp.eq.s32.totalorder %s29, 0
      %p182 = por %p180, %p181
      %s183 = ssub.s32 %s23, %s30
      %p184 = scmp.eq.s32.totalorder %s183, 0
      %s186 = sadd.s32 %s185, 1
      %s187 = scalar_select %p184, %s185, %s186
      %p190 = pneg %p184
      %p191 = scmp.eq.s32.totalorder %s23, 1
      %p192 = por %p190, %p191
      %p193 = scmp.ne.s32.totalorder %s185, %s188
      %p194 = scmp.eq.s32.totalorder %s23, 0
      %p195 = por %p193, %p194
      %p196 = scmp.ne.s32.totalorder %s185, %s188
      %p197 = scmp.eq.s32.totalorder %s28, 1
      %p198 = por %p196, %p197
      %p199 = scmp.ne.s32.totalorder %s188, %s189
      %p200 = scmp.eq.s32.totalorder %s28, 0
      %p201 = por %p199, %p200
      %p202 = scmp.ne.s32.totalorder %s188, %s189
      %p203 = scmp.eq.s32.totalorder %s29, 1
      %p204 = por %p202, %p203
      %p206 = scmp.ne.s32.totalorder %s189, %s205
      %p207 = scmp.eq.s32.totalorder %s29, 0
      %p208 = por %p206, %p207
      %p209 = scmp.le.s32.totalorder 1, %s23
      %p210 = scmp.lt.s32.totalorder %s23, 3
      %p211 = pnand %p209, %p210
      %p212 = pneg %p211
      // Predicated region
      $region9: #{tpu_custom_call.1} parent=5 // pred_check
        _
      $region10: #{tpu_custom_call.1} parent=5 // pred_check_branch
        %214 = sbr.rel (%p211) target = $region12
      $region11: #{tpu_custom_call.1} parent=5 // pred_region
        %s215 = ssub.s32 %s23, 1
        // Predicated region
        $region13: #{tpu_custom_call.1} parent=11 // pred_check
          %p216 = pneg %p70
        $region14: #{tpu_custom_call.1} parent=11 // pred_check_branch
          %218 = sbr.rel (%p216) target = $region16
        $region15: #{tpu_custom_call.1} parent=11 // pred_region
          %s220 = ssub.s32 12544, 12544
          %221 = vsyncadd [#allocation7], %s220
          %s222 = sshll.u32 [#allocation6], 4
          %s223 = int_to_ptr.vmem [resolvable:$true] %s222
          %228 = dma.hbm_to_vmem [thread:$0]  %s1, 12544, %s223, [#allocation7], 128, 128, 8
        $region16: #{tpu_custom_call.1} parent=11 // pred_fallthru
          _
        // Predicated region
        $region17: #{tpu_custom_call.1} parent=11 // pred_check
          %p229 = pneg %p91
        $region18: #{tpu_custom_call.1} parent=11 // pred_check_branch
          %231 = sbr.rel (%p229) target = $region20
        $region19: #{tpu_custom_call.1} parent=11 // pred_region
          %s233 = ssub.s32 32, 32
          %234 = vsyncadd [#allocation7], %s233
          %s236 = sshll.u32 [#allocation8], 4
          %s237 = int_to_ptr.vmem [resolvable:$true] %s236
          %239 = dma.hbm_to_vmem [thread:$0]  %s2, 32, %s237, [#allocation7]
        $region20: #{tpu_custom_call.1} parent=11 // pred_fallthru
          _
        // Predicated region
        $region21: #{tpu_custom_call.1} parent=11 // pred_check
          %p240 = pneg %p112
        $region22: #{tpu_custom_call.1} parent=11 // pred_check_branch
          %242 = sbr.rel (%p240) target = $region24
        $region23: #{tpu_custom_call.1} parent=11 // pred_region
          %s244 = ssub.s32 4096, 4096
          %245 = vsyncadd [#allocation10], %s244
          %s246 = sshll.u32 [#allocation9], 4
          %s247 = int_to_ptr.vmem [resolvable:$true] %s246
          %252 = dma.hbm_to_vmem [thread:$0]  %s3, 4096, %s247, [#allocation10], 128, 128, 8
        $region24: #{tpu_custom_call.1} parent=11 // pred_fallthru
          _
        // Predicated region
        $region25: #{tpu_custom_call.1} parent=11 // pred_check
          %p253 = pneg %p133
        $region26: #{tpu_custom_call.1} parent=11 // pred_check_branch
          %255 = sbr.rel (%p253) target = $region28
        $region27: #{tpu_custom_call.1} parent=11 // pred_region
          %s257 = ssub.s32 32, 32
          %258 = vsyncadd [#allocation10], %s257
          %s260 = sshll.u32 [#allocation11], 4
          %s261 = int_to_ptr.vmem [resolvable:$true] %s260
          %263 = dma.hbm_to_vmem [thread:$0]  %s4, 32, %s261, [#allocation10]
        $region28: #{tpu_custom_call.1} parent=11 // pred_fallthru
          _
        // Predicated region
        $region29: #{tpu_custom_call.1} parent=11 // pred_check
          %p264 = pneg %p154
        $region30: #{tpu_custom_call.1} parent=11 // pred_check_branch
          %266 = sbr.rel (%p264) target = $region32
        $region31: #{tpu_custom_call.1} parent=11 // pred_region
          %s268 = ssub.s32 32, 32
          %269 = vsyncadd [#allocation13], %s268
          %s271 = sshll.u32 [#allocation12], 4
          %s272 = int_to_ptr.vmem [resolvable:$true] %s271
          %274 = dma.hbm_to_vmem [thread:$0]  %s5, 32, %s272, [#allocation13]
        $region32: #{tpu_custom_call.1} parent=11 // pred_fallthru
          _
        // Predicated region
        $region33: #{tpu_custom_call.1} parent=11 // pred_check
          %p275 = pneg %p175
        $region34: #{tpu_custom_call.1} parent=11 // pred_check_branch
          %277 = sbr.rel (%p275) target = $region36
        $region35: #{tpu_custom_call.1} parent=11 // pred_region
          _
        $region36: #{tpu_custom_call.1} parent=11 // pred_fallthru
          _
      $region12: #{tpu_custom_call.1} parent=5 // pred_fallthru
        _
      %p278 = scmp.lt.s32.totalorder %s23, 2
      // Predicated region
      $region37: #{tpu_custom_call.1} parent=5 // pred_check
        %p279 = pneg %p278
      $region38: #{tpu_custom_call.1} parent=5 // pred_check_branch
        %281 = sbr.rel (%p279) target = $region40
      $region39: #{tpu_custom_call.1} parent=5 // pred_region
        // Predicated region
        $region41: #{tpu_custom_call.1} parent=39 // pred_check
          %p282 = pneg %p43
        $region42: #{tpu_custom_call.1} parent=39 // pred_check_branch
          %284 = sbr.rel (%p282) target = $region44
        $region43: #{tpu_custom_call.1} parent=39 // pred_region
          %s285 = sand.u32 %s33, 1
          %s286 = scalar_lea.sflag [#allocation4], %s285
          %s287 = sand.u32 %s33, 1
          %s288 = smul.addr %s287, 1792
          %s289 = scalar_lea.vmem [#allocation3], %s288
          %s290 = smul.u32 32, %s23
          %s291 = ssub.s32 38, %s290
          %p292 = scmp.lt.s32.totalorder %s291, 32
          %s293 = scalar_select %p292, %s291, 32
          %s294 = smul.u32 128, %s293
          %s295 = smul.u32 %s294, 7
          %s297 = ssub.s32 28672, %s295
          %298 = vsyncadd %s286, %s297
          %p299 = scmp.ne.s32.totalorder 0, %s295
          %s300 = smul.addr %s290, 7
          %s301 = smul.addr %s300, 128
          %s302 = scalar_lea.hbm %s0, %s301
          %s303 = smul.u32 56, %s293
          %s304 = sshll.u32 %s289, 4
          %s305 = int_to_ptr.vmem [resolvable:$true] %s304
          %s306 = sshll.u32 %s303, 4
          %310 = dma.hbm_to_vmem [thread:$0]  (%p299), %s302, %s306, %s305, %s286, 896, 896, 56
        $region44: #{tpu_custom_call.1} parent=39 // pred_fallthru
          _
      $region40: #{tpu_custom_call.1} parent=5 // pred_fallthru
        _
      %p311 = scmp.le.s32.totalorder 1, %s23
      %p312 = scmp.lt.s32.totalorder %s23, 3
      %p313 = pnand %p311, %p312
      %p314 = pneg %p313
      // Predicated region
      $region45: #{tpu_custom_call.1} parent=5 // pred_check
        _
      $region46: #{tpu_custom_call.1} parent=5 // pred_check_branch
        %316 = sbr.rel (%p313) target = $region48
      $region47: #{tpu_custom_call.1} parent=5 // pred_region
        %s317 = ssub.s32 %s23, 1
        %s318 = sand.u32 %s36, 1
        %s319 = scalar_lea.sflag [#allocation4], %s318
        %s320 = sand.u32 %s36, 1
        %s321 = smul.addr %s320, 1792
        %s322 = scalar_lea.vmem [#allocation3], %s321
        // Predicated region
        $region49: #{tpu_custom_call.1} parent=47 // pred_check
          %p323 = pneg %p49
        $region50: #{tpu_custom_call.1} parent=47 // pred_check_branch
          %325 = sbr.rel (%p323) target = $region52
        $region51: #{tpu_custom_call.1} parent=47 // pred_region
          %326 = dma.done %s319, 28672
        $region52: #{tpu_custom_call.1} parent=47 // pred_fallthru
          _
        // Predicated region
        $region53: #{tpu_custom_call.1} parent=47 // pred_check
          %p327 = pneg %p70
        $region54: #{tpu_custom_call.1} parent=47 // pred_check_branch
          %329 = sbr.rel (%p327) target = $region56
        $region55: #{tpu_custom_call.1} parent=47 // pred_region
          %330 = dma.done [#allocation7], 12544
        $region56: #{tpu_custom_call.1} parent=47 // pred_fallthru
          _
        // Predicated region
        $region57: #{tpu_custom_call.1} parent=47 // pred_check
          %p331 = pneg %p91
        $region58: #{tpu_custom_call.1} parent=47 // pred_check_branch
          %333 = sbr.rel (%p331) target = $region60
        $region59: #{tpu_custom_call.1} parent=47 // pred_region
          %334 = dma.done [#allocation7], 32
        $region60: #{tpu_custom_call.1} parent=47 // pred_fallthru
          _
        // Predicated region
        $region61: #{tpu_custom_call.1} parent=47 // pred_check
          %p335 = pneg %p112
        $region62: #{tpu_custom_call.1} parent=47 // pred_check_branch
          %337 = sbr.rel (%p335) target = $region64
        $region63: #{tpu_custom_call.1} parent=47 // pred_region
          %338 = dma.done [#allocation10], 4096
        $region64: #{tpu_custom_call.1} parent=47 // pred_fallthru
          _
        // Predicated region
        $region65: #{tpu_custom_call.1} parent=47 // pred_check
          %p339 = pneg %p133
        $region66: #{tpu_custom_call.1} parent=47 // pred_check_branch
          %341 = sbr.rel (%p339) target = $region68
        $region67: #{tpu_custom_call.1} parent=47 // pred_region
          %342 = dma.done [#allocation10], 32
        $region68: #{tpu_custom_call.1} parent=47 // pred_fallthru
          _
        // Predicated region
        $region69: #{tpu_custom_call.1} parent=47 // pred_check
          %p343 = pneg %p154
        $region70: #{tpu_custom_call.1} parent=47 // pred_check_branch
          %345 = sbr.rel (%p343) target = $region72
        $region71: #{tpu_custom_call.1} parent=47 // pred_region
          %346 = dma.done [#allocation13], 32
        $region72: #{tpu_custom_call.1} parent=47 // pred_fallthru
          _
        %s347 = sand.u32 %s36, 1
        %s348 = scalar_lea.sflag [#allocation4], %s347
        %s349 = sand.u32 %s36, 1
        %s350 = smul.addr %s349, 1792
        %s351 = scalar_lea.vmem [#allocation3], %s350
        %p352 = pneg %p49
        %p353 = pneg %p46
        %p354 = pneg %p70
        %p355 = pneg %p67
        %p356 = pneg %p91
        %p357 = pneg %p88
        %p358 = pneg %p112
        %p359 = pneg %p109
        %p360 = pneg %p133
        %p361 = pneg %p130
        %p362 = pneg %p154
        %p363 = pneg %p151
        %p364 = pneg %p175
        %p365 = pneg %p172
        %p366 = pneg %p201
        %p367 = pneg %p198
        %s368 = sand.u32 %s188, 1
        %s369 = scalar_lea.sflag [#allocation5], %s368
        %s370 = sand.u32 %s188, 1
        %s371 = smul.addr %s370, 2
        %s372 = scalar_lea.vmem [#allocation14], %s371
        %s373 = smul.u32 32, %s28
        %s374 = ssub.s32 38, %s373
        %p375 = scmp.lt.s32.totalorder %s374, 32
        %s376 = scalar_select %p375, %s374, 32
        %s377 = smul.u32 128, %s376
        %s378 = smul.u32 %s377, 7
        %v380 = vld [vmem:[%s322] sm:$0xff]
        %v381 = vld [vmem:[%s322 + $0x8] sm:$0xff]
        %v382 = vld [vmem:[%s322 + $0x10] sm:$0xff]
        %v383 = vld [vmem:[%s322 + $0x18] sm:$0xff]
        %v384 = vld [vmem:[%s322 + $0x20] sm:$0xff]
        %v385 = vld [vmem:[%s322 + $0x28] sm:$0xff]
        %v386 = vld [vmem:[%s322 + $0x30] sm:$0xff]
        %v387 = vld [vmem:[%s322 + $0x38] sm:$0xff]
        %v388 = vld [vmem:[%s322 + $0x40] sm:$0xff]
        %v389 = vld [vmem:[%s322 + $0x48] sm:$0xff]
        %v390 = vld [vmem:[%s322 + $0x50] sm:$0xff]
        %v391 = vld [vmem:[%s322 + $0x58] sm:$0xff]
        %v392 = vld [vmem:[%s322 + $0x60] sm:$0xff]
        %v393 = vld [vmem:[%s322 + $0x68] sm:$0xff]
        %v394 = vld [vmem:[%s322 + $0x70] sm:$0xff]
        %v395 = vld [vmem:[%s322 + $0x78] sm:$0xff]
        %v396 = vld [vmem:[%s322 + $0x80] sm:$0xff]
        %v397 = vld [vmem:[%s322 + $0x88] sm:$0xff]
        %v398 = vld [vmem:[%s322 + $0x90] sm:$0xff]
        %v399 = vld [vmem:[%s322 + $0x98] sm:$0xff]
        %v400 = vld [vmem:[%s322 + $0xa0] sm:$0xff]
        %v401 = vld [vmem:[%s322 + $0xa8] sm:$0xff]
        %v402 = vld [vmem:[%s322 + $0xb0] sm:$0xff]
        %v403 = vld [vmem:[%s322 + $0xb8] sm:$0xff]
        %v404 = vld [vmem:[%s322 + $0xc0] sm:$0xff]
        %v405 = vld [vmem:[%s322 + $0xc8] sm:$0xff]
        %v406 = vld [vmem:[%s322 + $0xd0] sm:$0xff]
        %v407 = vld [vmem:[%s322 + $0xd8] sm:$0xff]
        %v408 = vld [vmem:[%s322 + $0xe0] sm:$0xff]
        %v409 = vld [vmem:[%s322 + $0xe8] sm:$0xff]
        %v410 = vld [vmem:[%s322 + $0xf0] sm:$0xff]
        %v411 = vld [vmem:[%s322 + $0xf8] sm:$0xff]
        %v412 = vld [vmem:[%s322 + $0x100] sm:$0xff]
        %v413 = vld [vmem:[%s322 + $0x108] sm:$0xff]
        %v414 = vld [vmem:[%s322 + $0x110] sm:$0xff]
        %v415 = vld [vmem:[%s322 + $0x118] sm:$0xff]
        %v416 = vld [vmem:[%s322 + $0x120] sm:$0xff]
        %v417 = vld [vmem:[%s322 + $0x128] sm:$0xff]
        %v418 = vld [vmem:[%s322 + $0x130] sm:$0xff]
        %v419 = vld [vmem:[%s322 + $0x138] sm:$0xff]
        %v420 = vld [vmem:[%s322 + $0x140] sm:$0xff]
        %v421 = vld [vmem:[%s322 + $0x148] sm:$0xff]
        %v422 = vld [vmem:[%s322 + $0x150] sm:$0xff]
        %v423 = vld [vmem:[%s322 + $0x158] sm:$0xff]
        %v424 = vld [vmem:[%s322 + $0x160] sm:$0xff]
        %v425 = vld [vmem:[%s322 + $0x168] sm:$0xff]
        %v426 = vld [vmem:[%s322 + $0x170] sm:$0xff]
        %v427 = vld [vmem:[%s322 + $0x178] sm:$0xff]
        %v428 = vld [vmem:[%s322 + $0x180] sm:$0xff]
        %v429 = vld [vmem:[%s322 + $0x188] sm:$0xff]
        %v430 = vld [vmem:[%s322 + $0x190] sm:$0xff]
        %v431 = vld [vmem:[%s322 + $0x198] sm:$0xff]
        %v432 = vld [vmem:[%s322 + $0x1a0] sm:$0xff]
        %v433 = vld [vmem:[%s322 + $0x1a8] sm:$0xff]
        %v434 = vld [vmem:[%s322 + $0x1b0] sm:$0xff]
        %v435 = vld [vmem:[%s322 + $0x1b8] sm:$0xff]
        %v436 = vld [vmem:[%s322 + $0x1c0] sm:$0xff]
        %v437 = vld [vmem:[%s322 + $0x1c8] sm:$0xff]
        %v438 = vld [vmem:[%s322 + $0x1d0] sm:$0xff]
        %v439 = vld [vmem:[%s322 + $0x1d8] sm:$0xff]
        %v440 = vld [vmem:[%s322 + $0x1e0] sm:$0xff]
        %v441 = vld [vmem:[%s322 + $0x1e8] sm:$0xff]
        %v442 = vld [vmem:[%s322 + $0x1f0] sm:$0xff]
        %v443 = vld [vmem:[%s322 + $0x1f8] sm:$0xff]
        %v444 = vld [vmem:[%s322 + $0x200] sm:$0xff]
        %v445 = vld [vmem:[%s322 + $0x208] sm:$0xff]
        %v446 = vld [vmem:[%s322 + $0x210] sm:$0xff]
        %v447 = vld [vmem:[%s322 + $0x218] sm:$0xff]
        %v448 = vld [vmem:[%s322 + $0x220] sm:$0xff]
        %v449 = vld [vmem:[%s322 + $0x228] sm:$0xff]
        %v450 = vld [vmem:[%s322 + $0x230] sm:$0xff]
        %v451 = vld [vmem:[%s322 + $0x238] sm:$0xff]
        %v452 = vld [vmem:[%s322 + $0x240] sm:$0xff]
        %v453 = vld [vmem:[%s322 + $0x248] sm:$0xff]
        %v454 = vld [vmem:[%s322 + $0x250] sm:$0xff]
        %v455 = vld [vmem:[%s322 + $0x258] sm:$0xff]
        %v456 = vld [vmem:[%s322 + $0x260] sm:$0xff]
        %v457 = vld [vmem:[%s322 + $0x268] sm:$0xff]
        %v458 = vld [vmem:[%s322 + $0x270] sm:$0xff]
        %v459 = vld [vmem:[%s322 + $0x278] sm:$0xff]
        %v460 = vld [vmem:[%s322 + $0x280] sm:$0xff]
        %v461 = vld [vmem:[%s322 + $0x288] sm:$0xff]
        %v462 = vld [vmem:[%s322 + $0x290] sm:$0xff]
        %v463 = vld [vmem:[%s322 + $0x298] sm:$0xff]
        %v464 = vld [vmem:[%s322 + $0x2a0] sm:$0xff]
        %v465 = vld [vmem:[%s322 + $0x2a8] sm:$0xff]
        %v466 = vld [vmem:[%s322 + $0x2b0] sm:$0xff]
        %v467 = vld [vmem:[%s322 + $0x2b8] sm:$0xff]
        %v468 = vld [vmem:[%s322 + $0x2c0] sm:$0xff]
        %v469 = vld [vmem:[%s322 + $0x2c8] sm:$0xff]
        %v470 = vld [vmem:[%s322 + $0x2d0] sm:$0xff]
        %v471 = vld [vmem:[%s322 + $0x2d8] sm:$0xff]
        %v472 = vld [vmem:[%s322 + $0x2e0] sm:$0xff]
        %v473 = vld [vmem:[%s322 + $0x2e8] sm:$0xff]
        %v474 = vld [vmem:[%s322 + $0x2f0] sm:$0xff]
        %v475 = vld [vmem:[%s322 + $0x2f8] sm:$0xff]
        %v476 = vld [vmem:[%s322 + $0x300] sm:$0xff]
        %v477 = vld [vmem:[%s322 + $0x308] sm:$0xff]
        %v478 = vld [vmem:[%s322 + $0x310] sm:$0xff]
        %v479 = vld [vmem:[%s322 + $0x318] sm:$0xff]
        %v480 = vld [vmem:[%s322 + $0x320] sm:$0xff]
        %v481 = vld [vmem:[%s322 + $0x328] sm:$0xff]
        %v482 = vld [vmem:[%s322 + $0x330] sm:$0xff]
        %v483 = vld [vmem:[%s322 + $0x338] sm:$0xff]
        %v484 = vld [vmem:[%s322 + $0x340] sm:$0xff]
        %v485 = vld [vmem:[%s322 + $0x348] sm:$0xff]
        %v486 = vld [vmem:[%s322 + $0x350] sm:$0xff]
        %v487 = vld [vmem:[%s322 + $0x358] sm:$0xff]
        %v488 = vld [vmem:[%s322 + $0x360] sm:$0xff]
        %v489 = vld [vmem:[%s322 + $0x368] sm:$0xff]
        %v490 = vld [vmem:[%s322 + $0x370] sm:$0xff]
        %v491 = vld [vmem:[%s322 + $0x378] sm:$0xff]
        %v492 = vld [vmem:[%s322 + $0x380] sm:$0xff]
        %v493 = vld [vmem:[%s322 + $0x388] sm:$0xff]
        %v494 = vld [vmem:[%s322 + $0x390] sm:$0xff]
        %v495 = vld [vmem:[%s322 + $0x398] sm:$0xff]
        %v496 = vld [vmem:[%s322 + $0x3a0] sm:$0xff]
        %v497 = vld [vmem:[%s322 + $0x3a8] sm:$0xff]
        %v498 = vld [vmem:[%s322 + $0x3b0] sm:$0xff]
        %v499 = vld [vmem:[%s322 + $0x3b8] sm:$0xff]
        %v500 = vld [vmem:[%s322 + $0x3c0] sm:$0xff]
        %v501 = vld [vmem:[%s322 + $0x3c8] sm:$0xff]
        %v502 = vld [vmem:[%s322 + $0x3d0] sm:$0xff]
        %v503 = vld [vmem:[%s322 + $0x3d8] sm:$0xff]
        %v504 = vld [vmem:[%s322 + $0x3e0] sm:$0xff]
        %v505 = vld [vmem:[%s322 + $0x3e8] sm:$0xff]
        %v506 = vld [vmem:[%s322 + $0x3f0] sm:$0xff]
        %v507 = vld [vmem:[%s322 + $0x3f8] sm:$0xff]
        %v508 = vld [vmem:[%s322 + $0x400] sm:$0xff]
        %v509 = vld [vmem:[%s322 + $0x408] sm:$0xff]
        %v510 = vld [vmem:[%s322 + $0x410] sm:$0xff]
        %v511 = vld [vmem:[%s322 + $0x418] sm:$0xff]
        %v512 = vld [vmem:[%s322 + $0x420] sm:$0xff]
        %v513 = vld [vmem:[%s322 + $0x428] sm:$0xff]
        %v514 = vld [vmem:[%s322 + $0x430] sm:$0xff]
        %v515 = vld [vmem:[%s322 + $0x438] sm:$0xff]
        %v516 = vld [vmem:[%s322 + $0x440] sm:$0xff]
        %v517 = vld [vmem:[%s322 + $0x448] sm:$0xff]
        %v518 = vld [vmem:[%s322 + $0x450] sm:$0xff]
        %v519 = vld [vmem:[%s322 + $0x458] sm:$0xff]
        %v520 = vld [vmem:[%s322 + $0x460] sm:$0xff]
        %v521 = vld [vmem:[%s322 + $0x468] sm:$0xff]
        %v522 = vld [vmem:[%s322 + $0x470] sm:$0xff]
        %v523 = vld [vmem:[%s322 + $0x478] sm:$0xff]
        %v524 = vld [vmem:[%s322 + $0x480] sm:$0xff]
        %v525 = vld [vmem:[%s322 + $0x488] sm:$0xff]
        %v526 = vld [vmem:[%s322 + $0x490] sm:$0xff]
        %v527 = vld [vmem:[%s322 + $0x498] sm:$0xff]
        %v528 = vld [vmem:[%s322 + $0x4a0] sm:$0xff]
        %v529 = vld [vmem:[%s322 + $0x4a8] sm:$0xff]
        %v530 = vld [vmem:[%s322 + $0x4b0] sm:$0xff]
        %v531 = vld [vmem:[%s322 + $0x4b8] sm:$0xff]
        %v532 = vld [vmem:[%s322 + $0x4c0] sm:$0xff]
        %v533 = vld [vmem:[%s322 + $0x4c8] sm:$0xff]
        %v534 = vld [vmem:[%s322 + $0x4d0] sm:$0xff]
        %v535 = vld [vmem:[%s322 + $0x4d8] sm:$0xff]
        %v536 = vld [vmem:[%s322 + $0x4e0] sm:$0xff]
        %v537 = vld [vmem:[%s322 + $0x4e8] sm:$0xff]
        %v538 = vld [vmem:[%s322 + $0x4f0] sm:$0xff]
        %v539 = vld [vmem:[%s322 + $0x4f8] sm:$0xff]
        %v540 = vld [vmem:[%s322 + $0x500] sm:$0xff]
        %v541 = vld [vmem:[%s322 + $0x508] sm:$0xff]
        %v542 = vld [vmem:[%s322 + $0x510] sm:$0xff]
        %v543 = vld [vmem:[%s322 + $0x518] sm:$0xff]
        %v544 = vld [vmem:[%s322 + $0x520] sm:$0xff]
        %v545 = vld [vmem:[%s322 + $0x528] sm:$0xff]
        %v546 = vld [vmem:[%s322 + $0x530] sm:$0xff]
        %v547 = vld [vmem:[%s322 + $0x538] sm:$0xff]
        %v548 = vld [vmem:[%s322 + $0x540] sm:$0xff]
        %v549 = vld [vmem:[%s322 + $0x548] sm:$0xff]
        %v550 = vld [vmem:[%s322 + $0x550] sm:$0xff]
        %v551 = vld [vmem:[%s322 + $0x558] sm:$0xff]
        %v552 = vld [vmem:[%s322 + $0x560] sm:$0xff]
        %v553 = vld [vmem:[%s322 + $0x568] sm:$0xff]
        %v554 = vld [vmem:[%s322 + $0x570] sm:$0xff]
        %v555 = vld [vmem:[%s322 + $0x578] sm:$0xff]
        %v556 = vld [vmem:[%s322 + $0x580] sm:$0xff]
        %v557 = vld [vmem:[%s322 + $0x588] sm:$0xff]
        %v558 = vld [vmem:[%s322 + $0x590] sm:$0xff]
        %v559 = vld [vmem:[%s322 + $0x598] sm:$0xff]
        %v560 = vld [vmem:[%s322 + $0x5a0] sm:$0xff]
        %v561 = vld [vmem:[%s322 + $0x5a8] sm:$0xff]
        %v562 = vld [vmem:[%s322 + $0x5b0] sm:$0xff]
        %v563 = vld [vmem:[%s322 + $0x5b8] sm:$0xff]
        %v564 = vld [vmem:[%s322 + $0x5c0] sm:$0xff]
        %v565 = vld [vmem:[%s322 + $0x5c8] sm:$0xff]
        %v566 = vld [vmem:[%s322 + $0x5d0] sm:$0xff]
        %v567 = vld [vmem:[%s322 + $0x5d8] sm:$0xff]
        %v568 = vld [vmem:[%s322 + $0x5e0] sm:$0xff]
        %v569 = vld [vmem:[%s322 + $0x5e8] sm:$0xff]
        %v570 = vld [vmem:[%s322 + $0x5f0] sm:$0xff]
        %v571 = vld [vmem:[%s322 + $0x5f8] sm:$0xff]
        %v572 = vld [vmem:[%s322 + $0x600] sm:$0xff]
        %v573 = vld [vmem:[%s322 + $0x608] sm:$0xff]
        %v574 = vld [vmem:[%s322 + $0x610] sm:$0xff]
        %v575 = vld [vmem:[%s322 + $0x618] sm:$0xff]
        %v576 = vld [vmem:[%s322 + $0x620] sm:$0xff]
        %v577 = vld [vmem:[%s322 + $0x628] sm:$0xff]
        %v578 = vld [vmem:[%s322 + $0x630] sm:$0xff]
        %v579 = vld [vmem:[%s322 + $0x638] sm:$0xff]
        %v580 = vld [vmem:[%s322 + $0x640] sm:$0xff]
        %v581 = vld [vmem:[%s322 + $0x648] sm:$0xff]
        %v582 = vld [vmem:[%s322 + $0x650] sm:$0xff]
        %v583 = vld [vmem:[%s322 + $0x658] sm:$0xff]
        %v584 = vld [vmem:[%s322 + $0x660] sm:$0xff]
        %v585 = vld [vmem:[%s322 + $0x668] sm:$0xff]
        %v586 = vld [vmem:[%s322 + $0x670] sm:$0xff]
        %v587 = vld [vmem:[%s322 + $0x678] sm:$0xff]
        %v588 = vld [vmem:[%s322 + $0x680] sm:$0xff]
        %v589 = vld [vmem:[%s322 + $0x688] sm:$0xff]
        %v590 = vld [vmem:[%s322 + $0x690] sm:$0xff]
        %v591 = vld [vmem:[%s322 + $0x698] sm:$0xff]
        %v592 = vld [vmem:[%s322 + $0x6a0] sm:$0xff]
        %v593 = vld [vmem:[%s322 + $0x6a8] sm:$0xff]
        %v594 = vld [vmem:[%s322 + $0x6b0] sm:$0xff]
        %v595 = vld [vmem:[%s322 + $0x6b8] sm:$0xff]
        %v596 = vld [vmem:[%s322 + $0x6c0] sm:$0xff]
        %v597 = vld [vmem:[%s322 + $0x6c8] sm:$0xff]
        %v598 = vld [vmem:[%s322 + $0x6d0] sm:$0xff]
        %v599 = vld [vmem:[%s322 + $0x6d8] sm:$0xff]
        %v600 = vld [vmem:[%s322 + $0x6e0] sm:$0xff]
        %v601 = vld [vmem:[%s322 + $0x6e8] sm:$0xff]
        %v602 = vld [vmem:[%s322 + $0x6f0] sm:$0xff]
        %v603 = vld [vmem:[%s322 + $0x6f8] sm:$0xff]
        %v604 = vpack.c.bf16 %v387, %v380
        %v605 = vpack.c.bf16 %v388, %v381
        %v606 = vpack.c.bf16 %v389, %v382
        %v607 = vpack.c.bf16 %v390, %v383
        %v608 = vpack.c.bf16 %v391, %v384
        %v609 = vpack.c.bf16 %v392, %v385
        %v610 = vpack.c.bf16 %v393, %v386
        %v611 = vpack.c.bf16 %v401, %v394
        %v612 = vpack.c.bf16 %v402, %v395
        %v613 = vpack.c.bf16 %v403, %v396
        %v614 = vpack.c.bf16 %v404, %v397
        %v615 = vpack.c.bf16 %v405, %v398
        %v616 = vpack.c.bf16 %v406, %v399
        %v617 = vpack.c.bf16 %v407, %v400
        %v618 = vpack.c.bf16 %v415, %v408
        %v619 = vpack.c.bf16 %v416, %v409
        %v620 = vpack.c.bf16 %v417, %v410
        %v621 = vpack.c.bf16 %v418, %v411
        %v622 = vpack.c.bf16 %v419, %v412
        %v623 = vpack.c.bf16 %v420, %v413
        %v624 = vpack.c.bf16 %v421, %v414
        %v625 = vpack.c.bf16 %v429, %v422
        %v626 = vpack.c.bf16 %v430, %v423
        %v627 = vpack.c.bf16 %v431, %v424
        %v628 = vpack.c.bf16 %v432, %v425
        %v629 = vpack.c.bf16 %v433, %v426
        %v630 = vpack.c.bf16 %v434, %v427
        %v631 = vpack.c.bf16 %v435, %v428
        %v632 = vpack.c.bf16 %v443, %v436
        %v633 = vpack.c.bf16 %v444, %v437
        %v634 = vpack.c.bf16 %v445, %v438
        %v635 = vpack.c.bf16 %v446, %v439
        %v636 = vpack.c.bf16 %v447, %v440
        %v637 = vpack.c.bf16 %v448, %v441
        %v638 = vpack.c.bf16 %v449, %v442
        %v639 = vpack.c.bf16 %v457, %v450
        %v640 = vpack.c.bf16 %v458, %v451
        %v641 = vpack.c.bf16 %v459, %v452
        %v642 = vpack.c.bf16 %v460, %v453
        %v643 = vpack.c.bf16 %v461, %v454
        %v644 = vpack.c.bf16 %v462, %v455
        %v645 = vpack.c.bf16 %v463, %v456
        %v646 = vpack.c.bf16 %v471, %v464
        %v647 = vpack.c.bf16 %v472, %v465
        %v648 = vpack.c.bf16 %v473, %v466
        %v649 = vpack.c.bf16 %v474, %v467
        %v650 = vpack.c.bf16 %v475, %v468
        %v651 = vpack.c.bf16 %v476, %v469
        %v652 = vpack.c.bf16 %v477, %v470
        %v653 = vpack.c.bf16 %v485, %v478
        %v654 = vpack.c.bf16 %v486, %v479
        %v655 = vpack.c.bf16 %v487, %v480
        %v656 = vpack.c.bf16 %v488, %v481
        %v657 = vpack.c.bf16 %v489, %v482
        %v658 = vpack.c.bf16 %v490, %v483
        %v659 = vpack.c.bf16 %v491, %v484
        %v660 = vpack.c.bf16 %v499, %v492
        %v661 = vpack.c.bf16 %v500, %v493
        %v662 = vpack.c.bf16 %v501, %v494
        %v663 = vpack.c.bf16 %v502, %v495
        %v664 = vpack.c.bf16 %v503, %v496
        %v665 = vpack.c.bf16 %v504, %v497
        %v666 = vpack.c.bf16 %v505, %v498
        %v667 = vpack.c.bf16 %v513, %v506
        %v668 = vpack.c.bf16 %v514, %v507
        %v669 = vpack.c.bf16 %v515, %v508
        %v670 = vpack.c.bf16 %v516, %v509
        %v671 = vpack.c.bf16 %v517, %v510
        %v672 = vpack.c.bf16 %v518, %v511
        %v673 = vpack.c.bf16 %v519, %v512
        %v674 = vpack.c.bf16 %v527, %v520
        %v675 = vpack.c.bf16 %v528, %v521
        %v676 = vpack.c.bf16 %v529, %v522
        %v677 = vpack.c.bf16 %v530, %v523
        %v678 = vpack.c.bf16 %v531, %v524
        %v679 = vpack.c.bf16 %v532, %v525
        %v680 = vpack.c.bf16 %v533, %v526
        %v681 = vpack.c.bf16 %v541, %v534
        %v682 = vpack.c.bf16 %v542, %v535
        %v683 = vpack.c.bf16 %v543, %v536
        %v684 = vpack.c.bf16 %v544, %v537
        %v685 = vpack.c.bf16 %v545, %v538
        %v686 = vpack.c.bf16 %v546, %v539
        %v687 = vpack.c.bf16 %v547, %v540
        %v688 = vpack.c.bf16 %v555, %v548
        %v689 = vpack.c.bf16 %v556, %v549
        %v690 = vpack.c.bf16 %v557, %v550
        %v691 = vpack.c.bf16 %v558, %v551
        %v692 = vpack.c.bf16 %v559, %v552
        %v693 = vpack.c.bf16 %v560, %v553
        %v694 = vpack.c.bf16 %v561, %v554
        %v695 = vpack.c.bf16 %v569, %v562
        %v696 = vpack.c.bf16 %v570, %v563
        %v697 = vpack.c.bf16 %v571, %v564
        %v698 = vpack.c.bf16 %v572, %v565
        %v699 = vpack.c.bf16 %v573, %v566
        %v700 = vpack.c.bf16 %v574, %v567
        %v701 = vpack.c.bf16 %v575, %v568
        %v702 = vpack.c.bf16 %v583, %v576
        %v703 = vpack.c.bf16 %v584, %v577
        %v704 = vpack.c.bf16 %v585, %v578
        %v705 = vpack.c.bf16 %v586, %v579
        %v706 = vpack.c.bf16 %v587, %v580
        %v707 = vpack.c.bf16 %v588, %v581
        %v708 = vpack.c.bf16 %v589, %v582
        %v709 = vpack.c.bf16 %v597, %v590
        %v710 = vpack.c.bf16 %v598, %v591
        %v711 = vpack.c.bf16 %v599, %v592
        %v712 = vpack.c.bf16 %v600, %v593
        %v713 = vpack.c.bf16 %v601, %v594
        %v714 = vpack.c.bf16 %v602, %v595
        %v715 = vpack.c.bf16 %v603, %v596
        %v716 = vld [vmem:[#allocation6] sm:$0xff]
        %v717 = vld [vmem:[#allocation6 + $0x8] sm:$0xff]
        %v718 = vld [vmem:[#allocation6 + $0x10] sm:$0xff]
        %v719 = vld [vmem:[#allocation6 + $0x18] sm:$0xff]
        %v720 = vld [vmem:[#allocation6 + $0x20] sm:$0xff]
        %v721 = vld [vmem:[#allocation6 + $0x28] sm:$0xff]
        %v722 = vld [vmem:[#allocation6 + $0x30] sm:$0xff]
        %v723 = vld [vmem:[#allocation6 + $0x38] sm:$0xff]
        %v724 = vld [vmem:[#allocation6 + $0x40] sm:$0xff]
        %v725 = vld [vmem:[#allocation6 + $0x48] sm:$0xff]
        %v726 = vld [vmem:[#allocation6 + $0x50] sm:$0xff]
        %v727 = vld [vmem:[#allocation6 + $0x58] sm:$0xff]
        %v728 = vld [vmem:[#allocation6 + $0x60] sm:$0xff]
        %v729 = vld [vmem:[#allocation6 + $0x68] sm:$0xff]
        %v730 = vld [vmem:[#allocation6 + $0x70] sm:$0xff]
        %v731 = vld [vmem:[#allocation6 + $0x78] sm:$0xff]
        %v732 = vld [vmem:[#allocation6 + $0x80] sm:$0xff]
        %v733 = vld [vmem:[#allocation6 + $0x88] sm:$0xff]
        %v734 = vld [vmem:[#allocation6 + $0x90] sm:$0xff]
        %v735 = vld [vmem:[#allocation6 + $0x98] sm:$0xff]
        %v736 = vld [vmem:[#allocation6 + $0xa0] sm:$0xff]
        %v737 = vld [vmem:[#allocation6 + $0xa8] sm:$0xff]
        %v738 = vld [vmem:[#allocation6 + $0xb0] sm:$0xff]
        %v739 = vld [vmem:[#allocation6 + $0xb8] sm:$0xff]
        %v740 = vld [vmem:[#allocation6 + $0xc0] sm:$0xff]
        %v741 = vld [vmem:[#allocation6 + $0xc8] sm:$0xff]
        %v742 = vld [vmem:[#allocation6 + $0xd0] sm:$0xff]
        %v743 = vld [vmem:[#allocation6 + $0xd8] sm:$0xff]
        %v744 = vld [vmem:[#allocation6 + $0xe0] sm:$0xff]
        %v745 = vld [vmem:[#allocation6 + $0xe8] sm:$0xff]
        %v746 = vld [vmem:[#allocation6 + $0xf0] sm:$0xff]
        %v747 = vld [vmem:[#allocation6 + $0xf8] sm:$0xff]
        %v748 = vld [vmem:[#allocation6 + $0x100] sm:$0xff]
        %v749 = vld [vmem:[#allocation6 + $0x108] sm:$0xff]
        %v750 = vld [vmem:[#allocation6 + $0x110] sm:$0xff]
        %v751 = vld [vmem:[#allocation6 + $0x118] sm:$0xff]
        %v752 = vld [vmem:[#allocation6 + $0x120] sm:$0xff]
        %v753 = vld [vmem:[#allocation6 + $0x128] sm:$0xff]
        %v754 = vld [vmem:[#allocation6 + $0x130] sm:$0xff]
        %v755 = vld [vmem:[#allocation6 + $0x138] sm:$0xff]
        %v756 = vld [vmem:[#allocation6 + $0x140] sm:$0xff]
        %v757 = vld [vmem:[#allocation6 + $0x148] sm:$0xff]
        %v758 = vld [vmem:[#allocation6 + $0x150] sm:$0xff]
        %v759 = vld [vmem:[#allocation6 + $0x158] sm:$0xff]
        %v760 = vld [vmem:[#allocation6 + $0x160] sm:$0xff]
        %v761 = vld [vmem:[#allocation6 + $0x168] sm:$0xff]
        %v762 = vld [vmem:[#allocation6 + $0x170] sm:$0xff]
        %v763 = vld [vmem:[#allocation6 + $0x178] sm:$0xff]
        %v764 = vld [vmem:[#allocation6 + $0x180] sm:$0xff]
        %v765 = vld [vmem:[#allocation6 + $0x188] sm:$0xff]
        %v766 = vld [vmem:[#allocation6 + $0x190] sm:$0xff]
        %v767 = vld [vmem:[#allocation6 + $0x198] sm:$0xff]
        %v768 = vld [vmem:[#allocation6 + $0x1a0] sm:$0xff]
        %v769 = vld [vmem:[#allocation6 + $0x1a8] sm:$0xff]
        %v770 = vld [vmem:[#allocation6 + $0x1b0] sm:$0xff]
        %v771 = vld [vmem:[#allocation6 + $0x1b8] sm:$0xff]
        %v772 = vld [vmem:[#allocation6 + $0x1c0] sm:$0xff]
        %v773 = vld [vmem:[#allocation6 + $0x1c8] sm:$0xff]
        %v774 = vld [vmem:[#allocation6 + $0x1d0] sm:$0xff]
        %v775 = vld [vmem:[#allocation6 + $0x1d8] sm:$0xff]
        %v776 = vld [vmem:[#allocation6 + $0x1e0] sm:$0xff]
        %v777 = vld [vmem:[#allocation6 + $0x1e8] sm:$0xff]
        %v778 = vld [vmem:[#allocation6 + $0x1f0] sm:$0xff]
        %v779 = vld [vmem:[#allocation6 + $0x1f8] sm:$0xff]
        %v780 = vld [vmem:[#allocation6 + $0x200] sm:$0xff]
        %v781 = vld [vmem:[#allocation6 + $0x208] sm:$0xff]
        %v782 = vld [vmem:[#allocation6 + $0x210] sm:$0xff]
        %v783 = vld [vmem:[#allocation6 + $0x218] sm:$0xff]
        %v784 = vld [vmem:[#allocation6 + $0x220] sm:$0xff]
        %v785 = vld [vmem:[#allocation6 + $0x228] sm:$0xff]
        %v786 = vld [vmem:[#allocation6 + $0x230] sm:$0xff]
        %v787 = vld [vmem:[#allocation6 + $0x238] sm:$0xff]
        %v788 = vld [vmem:[#allocation6 + $0x240] sm:$0xff]
        %v789 = vld [vmem:[#allocation6 + $0x248] sm:$0xff]
        %v790 = vld [vmem:[#allocation6 + $0x250] sm:$0xff]
        %v791 = vld [vmem:[#allocation6 + $0x258] sm:$0xff]
        %v792 = vld [vmem:[#allocation6 + $0x260] sm:$0xff]
        %v793 = vld [vmem:[#allocation6 + $0x268] sm:$0xff]
        %v794 = vld [vmem:[#allocation6 + $0x270] sm:$0xff]
        %v795 = vld [vmem:[#allocation6 + $0x278] sm:$0xff]
        %v796 = vld [vmem:[#allocation6 + $0x280] sm:$0xff]
        %v797 = vld [vmem:[#allocation6 + $0x288] sm:$0xff]
        %v798 = vld [vmem:[#allocation6 + $0x290] sm:$0xff]
        %v799 = vld [vmem:[#allocation6 + $0x298] sm:$0xff]
        %v800 = vld [vmem:[#allocation6 + $0x2a0] sm:$0xff]
        %v801 = vld [vmem:[#allocation6 + $0x2a8] sm:$0xff]
        %v802 = vld [vmem:[#allocation6 + $0x2b0] sm:$0xff]
        %v803 = vld [vmem:[#allocation6 + $0x2b8] sm:$0xff]
        %v804 = vld [vmem:[#allocation6 + $0x2c0] sm:$0xff]
        %v805 = vld [vmem:[#allocation6 + $0x2c8] sm:$0xff]
        %v806 = vld [vmem:[#allocation6 + $0x2d0] sm:$0xff]
        %v807 = vld [vmem:[#allocation6 + $0x2d8] sm:$0xff]
        %v808 = vld [vmem:[#allocation6 + $0x2e0] sm:$0xff]
        %v809 = vld [vmem:[#allocation6 + $0x2e8] sm:$0xff]
        %v810 = vld [vmem:[#allocation6 + $0x2f0] sm:$0xff]
        %v811 = vld [vmem:[#allocation6 + $0x2f8] sm:$0xff]
        %v812 = vld [vmem:[#allocation6 + $0x300] sm:$0xff]
        %v813 = vld [vmem:[#allocation6 + $0x308] sm:$0xff]
        %v814 = vld [vmem:[#allocation8] sm:$0x3]
        %v816 = vlaneseq
        %v817 = vshrl.u32 %v816, 7
        %v818 = vsub.s32 0, %v817
        %v819 = vrot.slane %v814, %v818
        %v820 = vlaneseq
        %v821 = vshrl.u32 %v820, 7
        %v822 = vsub.s32 1, %v821
        %v823 = vrot.slane %v814, %v822
        %v924 = vunpack.c.l.b16 %v716
        %v925 = vunpack.c.h.b16 %v716
        %v926 = vunpack.c.l.b16 %v717
        %v927 = vunpack.c.h.b16 %v717
        %v928 = vunpack.c.l.b16 %v718
        %v929 = vunpack.c.h.b16 %v718
        %v930 = vunpack.c.l.b16 %v719
        %v931 = vunpack.c.h.b16 %v719
        %v932 = vunpack.c.l.b16 %v720
        %v933 = vunpack.c.h.b16 %v720
        %v934 = vunpack.c.l.b16 %v721
        %v935 = vunpack.c.h.b16 %v721
        %v936 = vunpack.c.l.b16 %v722
        %v937 = vunpack.c.h.b16 %v722
        %v938 = vunpack.c.l.b16 %v723
        %v939 = vunpack.c.h.b16 %v723
        %v940 = vunpack.c.l.b16 %v724
        %v941 = vunpack.c.h.b16 %v724
        %v942 = vunpack.c.l.b16 %v725
        %v943 = vunpack.c.h.b16 %v725
        %v944 = vunpack.c.l.b16 %v726
        %v945 = vunpack.c.h.b16 %v726
        %v946 = vunpack.c.l.b16 %v727
        %v947 = vunpack.c.h.b16 %v727
        %v948 = vunpack.c.l.b16 %v728
        %v949 = vunpack.c.h.b16 %v728
        %v950 = vunpack.c.l.b16 %v729
        %v951 = vunpack.c.h.b16 %v729
        %v952 = vunpack.c.l.b16 %v730
        %v953 = vunpack.c.h.b16 %v730
        %v954 = vunpack.c.l.b16 %v731
        %v955 = vunpack.c.h.b16 %v731
        %v956 = vunpack.c.l.b16 %v732
        %v957 = vunpack.c.h.b16 %v732
        %v958 = vunpack.c.l.b16 %v733
        %v959 = vunpack.c.h.b16 %v733
        %v960 = vunpack.c.l.b16 %v734
        %v961 = vunpack.c.h.b16 %v734
        %v962 = vunpack.c.l.b16 %v735
        %v963 = vunpack.c.h.b16 %v735
        %v964 = vunpack.c.l.b16 %v736
        %v965 = vunpack.c.h.b16 %v736
        %v966 = vunpack.c.l.b16 %v737
        %v967 = vunpack.c.h.b16 %v737
        %v968 = vunpack.c.l.b16 %v738
        %v969 = vunpack.c.h.b16 %v738
        %v970 = vunpack.c.l.b16 %v739
        %v971 = vunpack.c.h.b16 %v739
        %v972 = vunpack.c.l.b16 %v740
        %v973 = vunpack.c.h.b16 %v740
        %v974 = vunpack.c.l.b16 %v741
        %v975 = vunpack.c.h.b16 %v741
        %v976 = vunpack.c.l.b16 %v742
        %v977 = vunpack.c.h.b16 %v742
        %v978 = vunpack.c.l.b16 %v743
        %v979 = vunpack.c.h.b16 %v743
        %v980 = vunpack.c.l.b16 %v744
        %v981 = vunpack.c.h.b16 %v744
        %v982 = vunpack.c.l.b16 %v745
        %v983 = vunpack.c.h.b16 %v745
        %v984 = vunpack.c.l.b16 %v746
        %v985 = vunpack.c.h.b16 %v746
        %v986 = vunpack.c.l.b16 %v747
        %v987 = vunpack.c.h.b16 %v747
        %v988 = vunpack.c.l.b16 %v748
        %v989 = vunpack.c.h.b16 %v748
        %v990 = vunpack.c.l.b16 %v749
        %v991 = vunpack.c.h.b16 %v749
        %v992 = vunpack.c.l.b16 %v750
        %v993 = vunpack.c.h.b16 %v750
        %v994 = vunpack.c.l.b16 %v751
        %v995 = vunpack.c.h.b16 %v751
        %v996 = vunpack.c.l.b16 %v752
        %v997 = vunpack.c.h.b16 %v752
        %v998 = vunpack.c.l.b16 %v753
        %v999 = vunpack.c.h.b16 %v753
        %v1000 = vunpack.c.l.b16 %v754
        %v1001 = vunpack.c.h.b16 %v754
        %v1002 = vunpack.c.l.b16 %v755
        %v1003 = vunpack.c.h.b16 %v755
        %v1004 = vunpack.c.l.b16 %v756
        %v1005 = vunpack.c.h.b16 %v756
        %v1006 = vunpack.c.l.b16 %v757
        %v1007 = vunpack.c.h.b16 %v757
        %v1008 = vunpack.c.l.b16 %v758
        %v1009 = vunpack.c.h.b16 %v758
        %v1010 = vunpack.c.l.b16 %v759
        %v1011 = vunpack.c.h.b16 %v759
        %v1012 = vunpack.c.l.b16 %v760
        %v1013 = vunpack.c.h.b16 %v760
        %v1014 = vunpack.c.l.b16 %v761
        %v1015 = vunpack.c.h.b16 %v761
        %v1016 = vunpack.c.l.b16 %v762
        %v1017 = vunpack.c.h.b16 %v762
        %v1018 = vunpack.c.l.b16 %v763
        %v1019 = vunpack.c.h.b16 %v763
        %v1020 = vunpack.c.l.b16 %v764
        %v1021 = vunpack.c.h.b16 %v764
        %v1022 = vunpack.c.l.b16 %v765
        %v1023 = vunpack.c.h.b16 %v765
        %v1024 = vunpack.c.l.b16 %v766
        %v1025 = vunpack.c.h.b16 %v766
        %v1026 = vunpack.c.l.b16 %v767
        %v1027 = vunpack.c.h.b16 %v767
        %v1028 = vunpack.c.l.b16 %v768
        %v1029 = vunpack.c.h.b16 %v768
        %v1030 = vunpack.c.l.b16 %v769
        %v1031 = vunpack.c.h.b16 %v769
        %v1032 = vunpack.c.l.b16 %v770
        %v1033 = vunpack.c.h.b16 %v770
        %v1034 = vunpack.c.l.b16 %v771
        %v1035 = vunpack.c.h.b16 %v771
        %v1036 = vunpack.c.l.b16 %v772
        %v1037 = vunpack.c.h.b16 %v772
        %v1038 = vunpack.c.l.b16 %v773
        %v1039 = vunpack.c.h.b16 %v773
        %v1040 = vunpack.c.l.b16 %v774
        %v1041 = vunpack.c.h.b16 %v774
        %v1042 = vunpack.c.l.b16 %v775
        %v1043 = vunpack.c.h.b16 %v775
        %v1044 = vunpack.c.l.b16 %v776
        %v1045 = vunpack.c.h.b16 %v776
        %v1046 = vunpack.c.l.b16 %v777
        %v1047 = vunpack.c.h.b16 %v777
        %v1048 = vunpack.c.l.b16 %v778
        %v1049 = vunpack.c.h.b16 %v778
        %v1050 = vunpack.c.l.b16 %v779
        %v1051 = vunpack.c.h.b16 %v779
        %v1052 = vunpack.c.l.b16 %v780
        %v1053 = vunpack.c.h.b16 %v780
        %v1054 = vunpack.c.l.b16 %v781
        %v1055 = vunpack.c.h.b16 %v781
        %v1056 = vunpack.c.l.b16 %v782
        %v1057 = vunpack.c.h.b16 %v782
        %v1058 = vunpack.c.l.b16 %v783
        %v1059 = vunpack.c.h.b16 %v783
        %v1060 = vunpack.c.l.b16 %v784
        %v1061 = vunpack.c.h.b16 %v784
        %v1062 = vunpack.c.l.b16 %v785
        %v1063 = vunpack.c.h.b16 %v785
        %v1064 = vunpack.c.l.b16 %v786
        %v1065 = vunpack.c.h.b16 %v786
        %v1066 = vunpack.c.l.b16 %v787
        %v1067 = vunpack.c.h.b16 %v787
        %v1068 = vunpack.c.l.b16 %v788
        %v1069 = vunpack.c.h.b16 %v788
        %v1070 = vunpack.c.l.b16 %v789
        %v1071 = vunpack.c.h.b16 %v789
        %v1072 = vunpack.c.l.b16 %v790
        %v1073 = vunpack.c.h.b16 %v790
        %v1074 = vunpack.c.l.b16 %v791
        %v1075 = vunpack.c.h.b16 %v791
        %v1076 = vunpack.c.l.b16 %v792
        %v1077 = vunpack.c.h.b16 %v792
        %v1078 = vunpack.c.l.b16 %v793
        %v1079 = vunpack.c.h.b16 %v793
        %v1080 = vunpack.c.l.b16 %v794
        %v1081 = vunpack.c.h.b16 %v794
        %v1082 = vunpack.c.l.b16 %v795
        %v1083 = vunpack.c.h.b16 %v795
        %v1084 = vunpack.c.l.b16 %v796
        %v1085 = vunpack.c.h.b16 %v796
        %v1086 = vunpack.c.l.b16 %v797
        %v1087 = vunpack.c.h.b16 %v797
        %v1088 = vunpack.c.l.b16 %v798
        %v1089 = vunpack.c.h.b16 %v798
        %v1090 = vunpack.c.l.b16 %v799
        %v1091 = vunpack.c.h.b16 %v799
        %v1092 = vunpack.c.l.b16 %v800
        %v1093 = vunpack.c.h.b16 %v800
        %v1094 = vunpack.c.l.b16 %v801
        %v1095 = vunpack.c.h.b16 %v801
        %v1096 = vunpack.c.l.b16 %v802
        %v1097 = vunpack.c.h.b16 %v802
        %v1098 = vunpack.c.l.b16 %v803
        %v1099 = vunpack.c.h.b16 %v803
        %v1100 = vunpack.c.l.b16 %v804
        %v1101 = vunpack.c.h.b16 %v804
        %v1102 = vunpack.c.l.b16 %v805
        %v1103 = vunpack.c.h.b16 %v805
        %v1104 = vunpack.c.l.b16 %v806
        %v1105 = vunpack.c.h.b16 %v806
        %v1106 = vunpack.c.l.b16 %v807
        %v1107 = vunpack.c.h.b16 %v807
        %v1108 = vunpack.c.l.b16 %v808
        %v1109 = vunpack.c.h.b16 %v808
        %v1110 = vunpack.c.l.b16 %v809
        %v1111 = vunpack.c.h.b16 %v809
        %v1112 = vunpack.c.l.b16 %v810
        %v1113 = vunpack.c.h.b16 %v810
        %v1114 = vunpack.c.l.b16 %v811
        %v1115 = vunpack.c.h.b16 %v811
        %v1116 = vunpack.c.l.b16 %v812
        %v1117 = vunpack.c.h.b16 %v812
        %v1118 = vunpack.c.l.b16 %v813
        %v1119 = vunpack.c.h.b16 %v813
        %v1120 = vpack.c.b16 %v926, %v924
        %v1121 = vpack.c.b16 %v927, %v925
        %v1122 = vpack.c.b16 %v930, %v928
        %v1123 = vpack.c.b16 %v931, %v929
        %v1124 = vpack.c.b16 %v934, %v932
        %v1125 = vpack.c.b16 %v935, %v933
        %v1126 = vpack.c.b16 %v938, %v936
        %v1127 = vpack.c.b16 %v939, %v937
        %v1128 = vpack.c.b16 %v942, %v940
        %v1129 = vpack.c.b16 %v943, %v941
        %v1130 = vpack.c.b16 %v946, %v944
        %v1131 = vpack.c.b16 %v947, %v945
        %v1132 = vpack.c.b16 %v950, %v948
        %v1133 = vpack.c.b16 %v951, %v949
        %v1134 = vpack.c.b16 %v954, %v952
        %v1135 = vpack.c.b16 %v955, %v953
        %v1136 = vpack.c.b16 %v958, %v956
        %v1137 = vpack.c.b16 %v959, %v957
        %v1138 = vpack.c.b16 %v962, %v960
        %v1139 = vpack.c.b16 %v963, %v961
        %v1140 = vpack.c.b16 %v966, %v964
        %v1141 = vpack.c.b16 %v967, %v965
        %v1142 = vpack.c.b16 %v970, %v968
        %v1143 = vpack.c.b16 %v971, %v969
        %v1144 = vpack.c.b16 %v974, %v972
        %v1145 = vpack.c.b16 %v975, %v973
        %v1146 = vpack.c.b16 %v978, %v976
        %v1147 = vpack.c.b16 %v979, %v977
        %v1148 = vpack.c.b16 %v982, %v980
        %v1149 = vpack.c.b16 %v983, %v981
        %v1150 = vpack.c.b16 %v986, %v984
        %v1151 = vpack.c.b16 %v987, %v985
        %v1152 = vpack.c.b16 %v990, %v988
        %v1153 = vpack.c.b16 %v991, %v989
        %v1154 = vpack.c.b16 %v994, %v992
        %v1155 = vpack.c.b16 %v995, %v993
        %v1156 = vpack.c.b16 %v998, %v996
        %v1157 = vpack.c.b16 %v999, %v997
        %v1158 = vpack.c.b16 %v1002, %v1000
        %v1159 = vpack.c.b16 %v1003, %v1001
        %v1160 = vpack.c.b16 %v1006, %v1004
        %v1161 = vpack.c.b16 %v1007, %v1005
        %v1162 = vpack.c.b16 %v1010, %v1008
        %v1163 = vpack.c.b16 %v1011, %v1009
        %v1164 = vpack.c.b16 %v1014, %v1012
        %v1165 = vpack.c.b16 %v1015, %v1013
        %v1166 = vpack.c.b16 %v1018, %v1016
        %v1167 = vpack.c.b16 %v1019, %v1017
        %v1168 = vpack.c.b16 %v1022, %v1020
        %v1169 = vpack.c.b16 %v1023, %v1021
        %v1170 = vpack.c.b16 %v1026, %v1024
        %v1171 = vpack.c.b16 %v1027, %v1025
        %v1172 = vpack.c.b16 %v1030, %v1028
        %v1173 = vpack.c.b16 %v1031, %v1029
        %v1174 = vpack.c.b16 %v1034, %v1032
        %v1175 = vpack.c.b16 %v1035, %v1033
        %v1176 = vpack.c.b16 %v1038, %v1036
        %v1177 = vpack.c.b16 %v1039, %v1037
        %v1178 = vpack.c.b16 %v1042, %v1040
        %v1179 = vpack.c.b16 %v1043, %v1041
        %v1180 = vpack.c.b16 %v1046, %v1044
        %v1181 = vpack.c.b16 %v1047, %v1045
        %v1182 = vpack.c.b16 %v1050, %v1048
        %v1183 = vpack.c.b16 %v1051, %v1049
        %v1184 = vpack.c.b16 %v1054, %v1052
        %v1185 = vpack.c.b16 %v1055, %v1053
        %v1186 = vpack.c.b16 %v1058, %v1056
        %v1187 = vpack.c.b16 %v1059, %v1057
        %v1188 = vpack.c.b16 %v1062, %v1060
        %v1189 = vpack.c.b16 %v1063, %v1061
        %v1190 = vpack.c.b16 %v1066, %v1064
        %v1191 = vpack.c.b16 %v1067, %v1065
        %v1192 = vpack.c.b16 %v1070, %v1068
        %v1193 = vpack.c.b16 %v1071, %v1069
        %v1194 = vpack.c.b16 %v1074, %v1072
        %v1195 = vpack.c.b16 %v1075, %v1073
        %v1196 = vpack.c.b16 %v1078, %v1076
        %v1197 = vpack.c.b16 %v1079, %v1077
        %v1198 = vpack.c.b16 %v1082, %v1080
        %v1199 = vpack.c.b16 %v1083, %v1081
        %v1200 = vpack.c.b16 %v1086, %v1084
        %v1201 = vpack.c.b16 %v1087, %v1085
        %v1202 = vpack.c.b16 %v1090, %v1088
        %v1203 = vpack.c.b16 %v1091, %v1089
        %v1204 = vpack.c.b16 %v1094, %v1092
        %v1205 = vpack.c.b16 %v1095, %v1093
        %v1206 = vpack.c.b16 %v1098, %v1096
        %v1207 = vpack.c.b16 %v1099, %v1097
        %v1208 = vpack.c.b16 %v1102, %v1100
        %v1209 = vpack.c.b16 %v1103, %v1101
        %v1210 = vpack.c.b16 %v1106, %v1104
        %v1211 = vpack.c.b16 %v1107, %v1105
        %v1212 = vpack.c.b16 %v1110, %v1108
        %v1213 = vpack.c.b16 %v1111, %v1109
        %v1214 = vpack.c.b16 %v1114, %v1112
        %v1215 = vpack.c.b16 %v1115, %v1113
        %v1216 = vpack.c.b16 %v1118, %v1116
        %v1217 = vpack.c.b16 %v1119, %v1117
        %vm1316 = vcmask 130048
        %v1318 = vsel %vm1316, %v610, 0
        %v1321 = vsel %vm1316, %v617, 0
        %v1324 = vsel %vm1316, %v624, 0
        %v1327 = vsel %vm1316, %v631, 0
        %v1330 = vsel %vm1316, %v638, 0
        %v1333 = vsel %vm1316, %v645, 0
        %v1336 = vsel %vm1316, %v652, 0
        %v1339 = vsel %vm1316, %v659, 0
        %v1342 = vsel %vm1316, %v666, 0
        %v1345 = vsel %vm1316, %v673, 0
        %v1348 = vsel %vm1316, %v680, 0
        %v1351 = vsel %vm1316, %v687, 0
        %v1354 = vsel %vm1316, %v694, 0
        %v1357 = vsel %vm1316, %v701, 0
        %v1360 = vsel %vm1316, %v708, 0
        %v1363 = vsel %vm1316, %v715, 0
        %1365 = vmatprep.subr.bf16.mxu0 %v1121
        %1366 = vmatpush1.bf16.msra.mxu0 %v1120
        %1367 = vmatprep.subr.bf16.mxu0 %v1123
        %1368 = vmatpush1.bf16.msra.mxu0 %v1122
        %1369 = vmatprep.subr.bf16.mxu0 %v1125
        %1370 = vmatpush1.bf16.msra.mxu0 %v1124
        %1371 = vmatprep.subr.bf16.mxu0 %v1127
        %1372 = vmatpush1.bf16.msra.mxu0 %v1126
        %1373 = vmatprep.subr.bf16.mxu0 %v1129
        %1374 = vmatpush1.bf16.msra.mxu0 %v1128
        %1375 = vmatprep.subr.bf16.mxu0 %v1131
        %1376 = vmatpush1.bf16.msra.mxu0 %v1130
        %1377 = vmatprep.subr.bf16.mxu0 %v1133
        %1378 = vmatpush1.bf16.msra.mxu0 %v1132
        %1379 = vmatprep.subr.bf16.mxu0 %v1135
        %1380 = vmatpush1.bf16.msra.mxu0 %v1134
        %1381 = vmatprep.subr.bf16.mxu0 %v1137
        %1382 = vmatpush1.bf16.msra.mxu0 %v1136
        %1383 = vmatprep.subr.bf16.mxu0 %v1139
        %1384 = vmatpush1.bf16.msra.mxu0 %v1138
        %1385 = vmatprep.subr.bf16.mxu0 %v1141
        %1386 = vmatpush1.bf16.msra.mxu0 %v1140
        %1387 = vmatprep.subr.bf16.mxu0 %v1143
        %1388 = vmatpush1.bf16.msra.mxu0 %v1142
        %1389 = vmatprep.subr.bf16.mxu0 %v1145
        %1390 = vmatpush1.bf16.msra.mxu0 %v1144
        %1391 = vmatprep.subr.bf16.mxu0 %v1147
        %1392 = vmatpush1.bf16.msra.mxu0 %v1146
        %1393 = vmatprep.subr.bf16.mxu0 %v1149
        %1394 = vmatpush1.bf16.msra.mxu0 %v1148
        %1395 = vmatprep.subr.bf16.mxu0 %v1151
        %1396 = vmatpush1.bf16.msra.mxu0 %v1150
        %1397 = vmatprep.mubr.bf16.mxu0 %v605
        %1398 = vmatmul.mubr.bf16.gmra.mrb[0].mxu0 %v604
        %v1399 = vpop.f32.mrb[0].mxu0
        %v1400 = vadd.f32 %v819, %v1399
        %v1401 = vpop.f32.mrb[0].mxu0
        %v1402 = vadd.f32 %v823, %v1401
        %v1403 = vpop.f32.mrb[0].mxu0
        %v1404 = vadd.f32 %v819, %v1403
        %v1405 = vpop.f32.mrb[0].mxu0
        %v1406 = vadd.f32 %v823, %v1405
        %1407 = vmatprep.mubr.bf16.mxu0 %v612
        %1408 = vmatmul.mubr.bf16.gmra.mrb[0].mxu0 %v611
        %v1409 = vpop.f32.mrb[0].mxu0
        %v1410 = vadd.f32 %v819, %v1409
        %v1411 = vpop.f32.mrb[0].mxu0
        %v1412 = vadd.f32 %v823, %v1411
        %v1413 = vpop.f32.mrb[0].mxu0
        %v1414 = vadd.f32 %v819, %v1413
        %v1415 = vpop.f32.mrb[0].mxu0
        %v1416 = vadd.f32 %v823, %v1415
        %1417 = vmatprep.mubr.bf16.mxu0 %v619
        %1418 = vmatmul.mubr.bf16.gmra.mrb[0].mxu0 %v618
        %v1419 = vpop.f32.mrb[0].mxu0
        %v1420 = vadd.f32 %v819, %v1419
        %v1421 = vpop.f32.mrb[0].mxu0
        %v1422 = vadd.f32 %v823, %v1421
        %v1423 = vpop.f32.mrb[0].mxu0
        %v1424 = vadd.f32 %v819, %v1423
        %v1425 = vpop.f32.mrb[0].mxu0
        %v1426 = vadd.f32 %v823, %v1425
        %1427 = vmatprep.mubr.bf16.mxu0 %v626
        %1428 = vmatmul.mubr.bf16.gmra.mrb[0].mxu0 %v625
        %v1429 = vpop.f32.mrb[0].mxu0
        %v1430 = vadd.f32 %v819, %v1429
        %v1431 = vpop.f32.mrb[0].mxu0
        %v1432 = vadd.f32 %v823, %v1431
        %v1433 = vpop.f32.mrb[0].mxu0
        %v1434 = vadd.f32 %v819, %v1433
        %v1435 = vpop.f32.mrb[0].mxu0
        %v1436 = vadd.f32 %v823, %v1435
        %1437 = vmatprep.mubr.bf16.mxu0 %v633
        %1438 = vmatmul.mubr.bf16.gmra.mrb[0].mxu0 %v632
        %v1439 = vpop.f32.mrb[0].mxu0
        %v1440 = vadd.f32 %v819, %v1439
        %v1441 = vpop.f32.mrb[0].mxu0
        %v1442 = vadd.f32 %v823, %v1441
        %v1443 = vpop.f32.mrb[0].mxu0
        %v1444 = vadd.f32 %v819, %v1443
        %v1445 = vpop.f32.mrb[0].mxu0
        %v1446 = vadd.f32 %v823, %v1445
        %1447 = vmatprep.mubr.bf16.mxu0 %v640
        %1448 = vmatmul.mubr.bf16.gmra.mrb[0].mxu0 %v639
        %v1449 = vpop.f32.mrb[0].mxu0
        %v1450 = vadd.f32 %v819, %v1449
        %v1451 = vpop.f32.mrb[0].mxu0
        %v1452 = vadd.f32 %v823, %v1451
        %v1453 = vpop.f32.mrb[0].mxu0
        %v1454 = vadd.f32 %v819, %v1453
        %v1455 = vpop.f32.mrb[0].mxu0
        %v1456 = vadd.f32 %v823, %v1455
        %1457 = vmatprep.mubr.bf16.mxu0 %v647
        %1458 = vmatmul.mubr.bf16.gmra.mrb[0].mxu0 %v646
        %v1459 = vpop.f32.mrb[0].mxu0
        %v1460 = vadd.f32 %v819, %v1459
        %v1461 = vpop.f32.mrb[0].mxu0
        %v1462 = vadd.f32 %v823, %v1461
        %v1463 = vpop.f32.mrb[0].mxu0
        %v1464 = vadd.f32 %v819, %v1463
        %v1465 = vpop.f32.mrb[0].mxu0
        %v1466 = vadd.f32 %v823, %v1465
        %1467 = vmatprep.mubr.bf16.mxu0 %v654
        %1468 = vmatmul.mubr.bf16.gmra.mrb[0].mxu0 %v653
        %v1469 = vpop.f32.mrb[0].mxu0
        %v1470 = vadd.f32 %v819, %v1469
        %v1471 = vpop.f32.mrb[0].mxu0
        %v1472 = vadd.f32 %v823, %v1471
        %v1473 = vpop.f32.mrb[0].mxu0
        %v1474 = vadd.f32 %v819, %v1473
        %v1475 = vpop.f32.mrb[0].mxu0
        %v1476 = vadd.f32 %v823, %v1475
        %1477 = vmatprep.mubr.bf16.mxu0 %v661
        %1478 = vmatmul.mubr.bf16.gmra.mrb[0].mxu0 %v660
        %v1479 = vpop.f32.mrb[0].mxu0
        %v1480 = vadd.f32 %v819, %v1479
        %v1481 = vpop.f32.mrb[0].mxu0
        %v1482 = vadd.f32 %v823, %v1481
        %v1483 = vpop.f32.mrb[0].mxu0
        %v1484 = vadd.f32 %v819, %v1483
        %v1485 = vpop.f32.mrb[0].mxu0
        %v1486 = vadd.f32 %v823, %v1485
        %1487 = vmatprep.mubr.bf16.mxu0 %v668
        %1488 = vmatmul.mubr.bf16.gmra.mrb[0].mxu0 %v667
        %v1489 = vpop.f32.mrb[0].mxu0
        %v1490 = vadd.f32 %v819, %v1489
        %v1491 = vpop.f32.mrb[0].mxu0
        %v1492 = vadd.f32 %v823, %v1491
        %v1493 = vpop.f32.mrb[0].mxu0
        %v1494 = vadd.f32 %v819, %v1493
        %v1495 = vpop.f32.mrb[0].mxu0
        %v1496 = vadd.f32 %v823, %v1495
        %1497 = vmatprep.mubr.bf16.mxu0 %v675
        %1498 = vmatmul.mubr.bf16.gmra.mrb[0].mxu0 %v674
        %v1499 = vpop.f32.mrb[0].mxu0
        %v1500 = vadd.f32 %v819, %v1499
        %v1501 = vpop.f32.mrb[0].mxu0
        %v1502 = vadd.f32 %v823, %v1501
        %v1503 = vpop.f32.mrb[0].mxu0
        %v1504 = vadd.f32 %v819, %v1503
        %v1505 = vpop.f32.mrb[0].mxu0
        %v1506 = vadd.f32 %v823, %v1505
        %1507 = vmatprep.mubr.bf16.mxu0 %v682
        %1508 = vmatmul.mubr.bf16.gmra.mrb[0].mxu0 %v681
        %v1509 = vpop.f32.mrb[0].mxu0
        %v1510 = vadd.f32 %v819, %v1509
        %v1511 = vpop.f32.mrb[0].mxu0
        %v1512 = vadd.f32 %v823, %v1511
        %v1513 = vpop.f32.mrb[0].mxu0
        %v1514 = vadd.f32 %v819, %v1513
        %v1515 = vpop.f32.mrb[0].mxu0
        %v1516 = vadd.f32 %v823, %v1515
        %1517 = vmatprep.mubr.bf16.mxu0 %v689
        %1518 = vmatmul.mubr.bf16.gmra.mrb[0].mxu0 %v688
        %v1519 = vpop.f32.mrb[0].mxu0
        %v1520 = vadd.f32 %v819, %v1519
        %v1521 = vpop.f32.mrb[0].mxu0
        %v1522 = vadd.f32 %v823, %v1521
        %v1523 = vpop.f32.mrb[0].mxu0
        %v1524 = vadd.f32 %v819, %v1523
        %v1525 = vpop.f32.mrb[0].mxu0
        %v1526 = vadd.f32 %v823, %v1525
        %1527 = vmatprep.mubr.bf16.mxu0 %v696
        %1528 = vmatmul.mubr.bf16.gmra.mrb[0].mxu0 %v695
        %v1529 = vpop.f32.mrb[0].mxu0
        %v1530 = vadd.f32 %v819, %v1529
        %v1531 = vpop.f32.mrb[0].mxu0
        %v1532 = vadd.f32 %v823, %v1531
        %v1533 = vpop.f32.mrb[0].mxu0
        %v1534 = vadd.f32 %v819, %v1533
        %v1535 = vpop.f32.mrb[0].mxu0
        %v1536 = vadd.f32 %v823, %v1535
        %1537 = vmatprep.mubr.bf16.mxu0 %v703
        %1538 = vmatmul.mubr.bf16.gmra.mrb[0].mxu0 %v702
        %v1539 = vpop.f32.mrb[0].mxu0
        %v1540 = vadd.f32 %v819, %v1539
        %v1541 = vpop.f32.mrb[0].mxu0
        %v1542 = vadd.f32 %v823, %v1541
        %v1543 = vpop.f32.mrb[0].mxu0
        %v1544 = vadd.f32 %v819, %v1543
        %v1545 = vpop.f32.mrb[0].mxu0
        %v1546 = vadd.f32 %v823, %v1545
        %1547 = vmatprep.mubr.bf16.mxu0 %v710
        %1548 = vmatmul.mubr.bf16.gmra.mrb[0].mxu0 %v709
        %v1549 = vpop.f32.mrb[0].mxu0
        %v1550 = vadd.f32 %v819, %v1549
        %v1551 = vpop.f32.mrb[0].mxu0
        %v1552 = vadd.f32 %v823, %v1551
        %v1553 = vpop.f32.mrb[0].mxu0
        %v1554 = vadd.f32 %v819, %v1553
        %v1555 = vpop.f32.mrb[0].mxu0
        %v1556 = vadd.f32 %v823, %v1555
        %1557 = vdwg.mxu0
        %1558 = vmatprep.subr.bf16.mxu0 %v1153
        %1559 = vmatpush1.bf16.msra.mxu0 %v1152
        %1560 = vmatprep.subr.bf16.mxu0 %v1155
        %1561 = vmatpush1.bf16.msra.mxu0 %v1154
        %1562 = vmatprep.subr.bf16.mxu0 %v1157
        %1563 = vmatpush1.bf16.msra.mxu0 %v1156
        %1564 = vmatprep.subr.bf16.mxu0 %v1159
        %1565 = vmatpush1.bf16.msra.mxu0 %v1158
        %1566 = vmatprep.subr.bf16.mxu0 %v1161
        %1567 = vmatpush1.bf16.msra.mxu0 %v1160
        %1568 = vmatprep.subr.bf16.mxu0 %v1163
        %1569 = vmatpush1.bf16.msra.mxu0 %v1162
        %1570 = vmatprep.subr.bf16.mxu0 %v1165
        %1571 = vmatpush1.bf16.msra.mxu0 %v1164
        %1572 = vmatprep.subr.bf16.mxu0 %v1167
        %1573 = vmatpush1.bf16.msra.mxu0 %v1166
        %1574 = vmatprep.subr.bf16.mxu0 %v1169
        %1575 = vmatpush1.bf16.msra.mxu0 %v1168
        %1576 = vmatprep.subr.bf16.mxu0 %v1171
        %1577 = vmatpush1.bf16.msra.mxu0 %v1170
        %1578 = vmatprep.subr.bf16.mxu0 %v1173
        %1579 = vmatpush1.bf16.msra.mxu0 %v1172
        %1580 = vmatprep.subr.bf16.mxu0 %v1175
        %1581 = vmatpush1.bf16.msra.mxu0 %v1174
        %1582 = vmatprep.subr.bf16.mxu0 %v1177
        %1583 = vmatpush1.bf16.msra.mxu0 %v1176
        %1584 = vmatprep.subr.bf16.mxu0 %v1179
        %1585 = vmatpush1.bf16.msra.mxu0 %v1178
        %1586 = vmatprep.subr.bf16.mxu0 %v1181
        %1587 = vmatpush1.bf16.msra.mxu0 %v1180
        %1588 = vmatprep.subr.bf16.mxu0 %v1183
        %1589 = vmatpush1.bf16.msra.mxu0 %v1182
        %1590 = vmatprep.mubr.bf16.mxu0 %v607
        %1591 = vmatmul.mubr.bf16.gmra.mrb[0].mxu0 %v606
        %v1592 = vpop.f32.mrb[0].mxu0
        %v1593 = vadd.f32 %v1400, %v1592
        %v1594 = vpop.f32.mrb[0].mxu0
        %v1595 = vadd.f32 %v1402, %v1594
        %v1596 = vpop.f32.mrb[0].mxu0
        %v1597 = vadd.f32 %v1404, %v1596
        %v1598 = vpop.f32.mrb[0].mxu0
        %v1599 = vadd.f32 %v1406, %v1598
        %1600 = vmatprep.mubr.bf16.mxu0 %v614
        %1601 = vmatmul.mubr.bf16.gmra.mrb[0].mxu0 %v613
        %v1602 = vpop.f32.mrb[0].mxu0
        %v1603 = vadd.f32 %v1410, %v1602
        %v1604 = vpop.f32.mrb[0].mxu0
        %v1605 = vadd.f32 %v1412, %v1604
        %v1606 = vpop.f32.mrb[0].mxu0
        %v1607 = vadd.f32 %v1414, %v1606
        %v1608 = vpop.f32.mrb[0].mxu0
        %v1609 = vadd.f32 %v1416, %v1608
        %1610 = vmatprep.mubr.bf16.mxu0 %v621
        %1611 = vmatmul.mubr.bf16.gmra.mrb[0].mxu0 %v620
        %v1612 = vpop.f32.mrb[0].mxu0
        %v1613 = vadd.f32 %v1420, %v1612
        %v1614 = vpop.f32.mrb[0].mxu0
        %v1615 = vadd.f32 %v1422, %v1614
        %v1616 = vpop.f32.mrb[0].mxu0
        %v1617 = vadd.f32 %v1424, %v1616
        %v1618 = vpop.f32.mrb[0].mxu0
        %v1619 = vadd.f32 %v1426, %v1618
        %1620 = vmatprep.mubr.bf16.mxu0 %v628
        %1621 = vmatmul.mubr.bf16.gmra.mrb[0].mxu0 %v627
        %v1622 = vpop.f32.mrb[0].mxu0
        %v1623 = vadd.f32 %v1430, %v1622
        %v1624 = vpop.f32.mrb[0].mxu0
        %v1625 = vadd.f32 %v1432, %v1624
        %v1626 = vpop.f32.mrb[0].mxu0
        %v1627 = vadd.f32 %v1434, %v1626
        %v1628 = vpop.f32.mrb[0].mxu0
        %v1629 = vadd.f32 %v1436, %v1628
        %1630 = vmatprep.mubr.bf16.mxu0 %v635
        %1631 = vmatmul.mubr.bf16.gmra.mrb[0].mxu0 %v634
        %v1632 = vpop.f32.mrb[0].mxu0
        %v1633 = vadd.f32 %v1440, %v1632
        %v1634 = vpop.f32.mrb[0].mxu0
        %v1635 = vadd.f32 %v1442, %v1634
        %v1636 = vpop.f32.mrb[0].mxu0
        %v1637 = vadd.f32 %v1444, %v1636
        %v1638 = vpop.f32.mrb[0].mxu0
        %v1639 = vadd.f32 %v1446, %v1638
        %1640 = vmatprep.mubr.bf16.mxu0 %v642
        %1641 = vmatmul.mubr.bf16.gmra.mrb[0].mxu0 %v641
        %v1642 = vpop.f32.mrb[0].mxu0
        %v1643 = vadd.f32 %v1450, %v1642
        %v1644 = vpop.f32.mrb[0].mxu0
        %v1645 = vadd.f32 %v1452, %v1644
        %v1646 = vpop.f32.mrb[0].mxu0
        %v1647 = vadd.f32 %v1454, %v1646
        %v1648 = vpop.f32.mrb[0].mxu0
        %v1649 = vadd.f32 %v1456, %v1648
        %1650 = vmatprep.mubr.bf16.mxu0 %v649
        %1651 = vmatmul.mubr.bf16.gmra.mrb[0].mxu0 %v648
        %v1652 = vpop.f32.mrb[0].mxu0
        %v1653 = vadd.f32 %v1460, %v1652
        %v1654 = vpop.f32.mrb[0].mxu0
        %v1655 = vadd.f32 %v1462, %v1654
        %v1656 = vpop.f32.mrb[0].mxu0
        %v1657 = vadd.f32 %v1464, %v1656
        %v1658 = vpop.f32.mrb[0].mxu0
        %v1659 = vadd.f32 %v1466, %v1658
        %1660 = vmatprep.mubr.bf16.mxu0 %v656
        %1661 = vmatmul.mubr.bf16.gmra.mrb[0].mxu0 %v655
        %v1662 = vpop.f32.mrb[0].mxu0
        %v1663 = vadd.f32 %v1470, %v1662
        %v1664 = vpop.f32.mrb[0].mxu0
        %v1665 = vadd.f32 %v1472, %v1664
        %v1666 = vpop.f32.mrb[0].mxu0
        %v1667 = vadd.f32 %v1474, %v1666
        %v1668 = vpop.f32.mrb[0].mxu0
        %v1669 = vadd.f32 %v1476, %v1668
        %1670 = vmatprep.mubr.bf16.mxu0 %v663
        %1671 = vmatmul.mubr.bf16.gmra.mrb[0].mxu0 %v662
        %v1672 = vpop.f32.mrb[0].mxu0
        %v1673 = vadd.f32 %v1480, %v1672
        %v1674 = vpop.f32.mrb[0].mxu0
        %v1675 = vadd.f32 %v1482, %v1674
        %v1676 = vpop.f32.mrb[0].mxu0
        %v1677 = vadd.f32 %v1484, %v1676
        %v1678 = vpop.f32.mrb[0].mxu0
        %v1679 = vadd.f32 %v1486, %v1678
        %1680 = vmatprep.mubr.bf16.mxu0 %v670
        %1681 = vmatmul.mubr.bf16.gmra.mrb[0].mxu0 %v669
        %v1682 = vpop.f32.mrb[0].mxu0
        %v1683 = vadd.f32 %v1490, %v1682
        %v1684 = vpop.f32.mrb[0].mxu0
        %v1685 = vadd.f32 %v1492, %v1684
        %v1686 = vpop.f32.mrb[0].mxu0
        %v1687 = vadd.f32 %v1494, %v1686
        %v1688 = vpop.f32.mrb[0].mxu0
        %v1689 = vadd.f32 %v1496, %v1688
        %1690 = vmatprep.mubr.bf16.mxu0 %v677
        %1691 = vmatmul.mubr.bf16.gmra.mrb[0].mxu0 %v676
        %v1692 = vpop.f32.mrb[0].mxu0
        %v1693 = vadd.f32 %v1500, %v1692
        %v1694 = vpop.f32.mrb[0].mxu0
        %v1695 = vadd.f32 %v1502, %v1694
        %v1696 = vpop.f32.mrb[0].mxu0
        %v1697 = vadd.f32 %v1504, %v1696
        %v1698 = vpop.f32.mrb[0].mxu0
        %v1699 = vadd.f32 %v1506, %v1698
        %1700 = vmatprep.mubr.bf16.mxu0 %v684
        %1701 = vmatmul.mubr.bf16.gmra.mrb[0].mxu0 %v683
        %v1702 = vpop.f32.mrb[0].mxu0
        %v1703 = vadd.f32 %v1510, %v1702
        %v1704 = vpop.f32.mrb[0].mxu0
        %v1705 = vadd.f32 %v1512, %v1704
        %v1706 = vpop.f32.mrb[0].mxu0
        %v1707 = vadd.f32 %v1514, %v1706
        %v1708 = vpop.f32.mrb[0].mxu0
        %v1709 = vadd.f32 %v1516, %v1708
        %1710 = vmatprep.mubr.bf16.mxu0 %v691
        %1711 = vmatmul.mubr.bf16.gmra.mrb[0].mxu0 %v690
        %v1712 = vpop.f32.mrb[0].mxu0
        %v1713 = vadd.f32 %v1520, %v1712
        %v1714 = vpop.f32.mrb[0].mxu0
        %v1715 = vadd.f32 %v1522, %v1714
        %v1716 = vpop.f32.mrb[0].mxu0
        %v1717 = vadd.f32 %v1524, %v1716
        %v1718 = vpop.f32.mrb[0].mxu0
        %v1719 = vadd.f32 %v1526, %v1718
        %1720 = vmatprep.mubr.bf16.mxu0 %v698
        %1721 = vmatmul.mubr.bf16.gmra.mrb[0].mxu0 %v697
        %v1722 = vpop.f32.mrb[0].mxu0
        %v1723 = vadd.f32 %v1530, %v1722
        %v1724 = vpop.f32.mrb[0].mxu0
        %v1725 = vadd.f32 %v1532, %v1724
        %v1726 = vpop.f32.mrb[0].mxu0
        %v1727 = vadd.f32 %v1534, %v1726
        %v1728 = vpop.f32.mrb[0].mxu0
        %v1729 = vadd.f32 %v1536, %v1728
        %1730 = vmatprep.mubr.bf16.mxu0 %v705
        %1731 = vmatmul.mubr.bf16.gmra.mrb[0].mxu0 %v704
        %v1732 = vpop.f32.mrb[0].mxu0
        %v1733 = vadd.f32 %v1540, %v1732
        %v1734 = vpop.f32.mrb[0].mxu0
        %v1735 = vadd.f32 %v1542, %v1734
        %v1736 = vpop.f32.mrb[0].mxu0
        %v1737 = vadd.f32 %v1544, %v1736
        %v1738 = vpop.f32.mrb[0].mxu0
        %v1739 = vadd.f32 %v1546, %v1738
        %1740 = vmatprep.mubr.bf16.mxu0 %v712
        %1741 = vmatmul.mubr.bf16.gmra.mrb[0].mxu0 %v711
        %v1742 = vpop.f32.mrb[0].mxu0
        %v1743 = vadd.f32 %v1550, %v1742
        %v1744 = vpop.f32.mrb[0].mxu0
        %v1745 = vadd.f32 %v1552, %v1744
        %v1746 = vpop.f32.mrb[0].mxu0
        %v1747 = vadd.f32 %v1554, %v1746
        %v1748 = vpop.f32.mrb[0].mxu0
        %v1749 = vadd.f32 %v1556, %v1748
        %1750 = vdwg.mxu0
        %1751 = vmatprep.subr.bf16.mxu0 %v1185
        %1752 = vmatpush1.bf16.msra.mxu0 %v1184
        %1753 = vmatprep.subr.bf16.mxu0 %v1187
        %1754 = vmatpush1.bf16.msra.mxu0 %v1186
        %1755 = vmatprep.subr.bf16.mxu0 %v1189
        %1756 = vmatpush1.bf16.msra.mxu0 %v1188
        %1757 = vmatprep.subr.bf16.mxu0 %v1191
        %1758 = vmatpush1.bf16.msra.mxu0 %v1190
        %1759 = vmatprep.subr.bf16.mxu0 %v1193
        %1760 = vmatpush1.bf16.msra.mxu0 %v1192
        %1761 = vmatprep.subr.bf16.mxu0 %v1195
        %1762 = vmatpush1.bf16.msra.mxu0 %v1194
        %1763 = vmatprep.subr.bf16.mxu0 %v1197
        %1764 = vmatpush1.bf16.msra.mxu0 %v1196
        %1765 = vmatprep.subr.bf16.mxu0 %v1199
        %1766 = vmatpush1.bf16.msra.mxu0 %v1198
        %1767 = vmatprep.subr.bf16.mxu0 %v1201
        %1768 = vmatpush1.bf16.msra.mxu0 %v1200
        %1769 = vmatprep.subr.bf16.mxu0 %v1203
        %1770 = vmatpush1.bf16.msra.mxu0 %v1202
        %1771 = vmatprep.subr.bf16.mxu0 %v1205
        %1772 = vmatpush1.bf16.msra.mxu0 %v1204
        %1773 = vmatprep.subr.bf16.mxu0 %v1207
        %1774 = vmatpush1.bf16.msra.mxu0 %v1206
        %1775 = vmatprep.subr.bf16.mxu0 %v1209
        %1776 = vmatpush1.bf16.msra.mxu0 %v1208
        %1777 = vmatprep.subr.bf16.mxu0 %v1211
        %1778 = vmatpush1.bf16.msra.mxu0 %v1210
        %1779 = vmatprep.subr.bf16.mxu0 %v1213
        %1780 = vmatpush1.bf16.msra.mxu0 %v1212
        %1781 = vmatprep.subr.bf16.mxu0 %v1215
        %1782 = vmatpush1.bf16.msra.mxu0 %v1214
        %1783 = vmatprep.mubr.bf16.mxu0 %v609
        %1784 = vmatmul.mubr.bf16.gmra.mrb[0].mxu0 %v608
        %v1785 = vpop.f32.mrb[0].mxu0
        %v1786 = vadd.f32 %v1593, %v1785
        %v1787 = vpop.f32.mrb[0].mxu0
        %v1788 = vadd.f32 %v1595, %v1787
        %v1789 = vpop.f32.mrb[0].mxu0
        %v1790 = vadd.f32 %v1597, %v1789
        %v1791 = vpop.f32.mrb[0].mxu0
        %v1792 = vadd.f32 %v1599, %v1791
        %1793 = vmatprep.mubr.bf16.mxu0 %v616
        %1794 = vmatmul.mubr.bf16.gmra.mrb[0].mxu0 %v615
        %v1795 = vpop.f32.mrb[0].mxu0
        %v1796 = vadd.f32 %v1603, %v1795
        %v1797 = vpop.f32.mrb[0].mxu0
        %v1798 = vadd.f32 %v1605, %v1797
        %v1799 = vpop.f32.mrb[0].mxu0
        %v1800 = vadd.f32 %v1607, %v1799
        %v1801 = vpop.f32.mrb[0].mxu0
        %v1802 = vadd.f32 %v1609, %v1801
        %1803 = vmatprep.mubr.bf16.mxu0 %v623
        %1804 = vmatmul.mubr.bf16.gmra.mrb[0].mxu0 %v622
        %v1805 = vpop.f32.mrb[0].mxu0
        %v1806 = vadd.f32 %v1613, %v1805
        %v1807 = vpop.f32.mrb[0].mxu0
        %v1808 = vadd.f32 %v1615, %v1807
        %v1809 = vpop.f32.mrb[0].mxu0
        %v1810 = vadd.f32 %v1617, %v1809
        %v1811 = vpop.f32.mrb[0].mxu0
        %v1812 = vadd.f32 %v1619, %v1811
        %1813 = vmatprep.mubr.bf16.mxu0 %v630
        %1814 = vmatmul.mubr.bf16.gmra.mrb[0].mxu0 %v629
        %v1815 = vpop.f32.mrb[0].mxu0
        %v1816 = vadd.f32 %v1623, %v1815
        %v1817 = vpop.f32.mrb[0].mxu0
        %v1818 = vadd.f32 %v1625, %v1817
        %v1819 = vpop.f32.mrb[0].mxu0
        %v1820 = vadd.f32 %v1627, %v1819
        %v1821 = vpop.f32.mrb[0].mxu0
        %v1822 = vadd.f32 %v1629, %v1821
        %1823 = vmatprep.mubr.bf16.mxu0 %v637
        %1824 = vmatmul.mubr.bf16.gmra.mrb[0].mxu0 %v636
        %v1825 = vpop.f32.mrb[0].mxu0
        %v1826 = vadd.f32 %v1633, %v1825
        %v1827 = vpop.f32.mrb[0].mxu0
        %v1828 = vadd.f32 %v1635, %v1827
        %v1829 = vpop.f32.mrb[0].mxu0
        %v1830 = vadd.f32 %v1637, %v1829
        %v1831 = vpop.f32.mrb[0].mxu0
        %v1832 = vadd.f32 %v1639, %v1831
        %1833 = vmatprep.mubr.bf16.mxu0 %v644
        %1834 = vmatmul.mubr.bf16.gmra.mrb[0].mxu0 %v643
        %v1835 = vpop.f32.mrb[0].mxu0
        %v1836 = vadd.f32 %v1643, %v1835
        %v1837 = vpop.f32.mrb[0].mxu0
        %v1838 = vadd.f32 %v1645, %v1837
        %v1839 = vpop.f32.mrb[0].mxu0
        %v1840 = vadd.f32 %v1647, %v1839
        %v1841 = vpop.f32.mrb[0].mxu0
        %v1842 = vadd.f32 %v1649, %v1841
        %1843 = vmatprep.mubr.bf16.mxu0 %v651
        %1844 = vmatmul.mubr.bf16.gmra.mrb[0].mxu0 %v650
        %v1845 = vpop.f32.mrb[0].mxu0
        %v1846 = vadd.f32 %v1653, %v1845
        %v1847 = vpop.f32.mrb[0].mxu0
        %v1848 = vadd.f32 %v1655, %v1847
        %v1849 = vpop.f32.mrb[0].mxu0
        %v1850 = vadd.f32 %v1657, %v1849
        %v1851 = vpop.f32.mrb[0].mxu0
        %v1852 = vadd.f32 %v1659, %v1851
        %1853 = vmatprep.mubr.bf16.mxu0 %v658
        %1854 = vmatmul.mubr.bf16.gmra.mrb[0].mxu0 %v657
        %v1855 = vpop.f32.mrb[0].mxu0
        %v1856 = vadd.f32 %v1663, %v1855
        %v1857 = vpop.f32.mrb[0].mxu0
        %v1858 = vadd.f32 %v1665, %v1857
        %v1859 = vpop.f32.mrb[0].mxu0
        %v1860 = vadd.f32 %v1667, %v1859
        %v1861 = vpop.f32.mrb[0].mxu0
        %v1862 = vadd.f32 %v1669, %v1861
        %1863 = vmatprep.mubr.bf16.mxu0 %v665
        %1864 = vmatmul.mubr.bf16.gmra.mrb[0].mxu0 %v664
        %v1865 = vpop.f32.mrb[0].mxu0
        %v1866 = vadd.f32 %v1673, %v1865
        %v1867 = vpop.f32.mrb[0].mxu0
        %v1868 = vadd.f32 %v1675, %v1867
        %v1869 = vpop.f32.mrb[0].mxu0
        %v1870 = vadd.f32 %v1677, %v1869
        %v1871 = vpop.f32.mrb[0].mxu0
        %v1872 = vadd.f32 %v1679, %v1871
        %1873 = vmatprep.mubr.bf16.mxu0 %v672
        %1874 = vmatmul.mubr.bf16.gmra.mrb[0].mxu0 %v671
        %v1875 = vpop.f32.mrb[0].mxu0
        %v1876 = vadd.f32 %v1683, %v1875
        %v1877 = vpop.f32.mrb[0].mxu0
        %v1878 = vadd.f32 %v1685, %v1877
        %v1879 = vpop.f32.mrb[0].mxu0
        %v1880 = vadd.f32 %v1687, %v1879
        %v1881 = vpop.f32.mrb[0].mxu0
        %v1882 = vadd.f32 %v1689, %v1881
        %1883 = vmatprep.mubr.bf16.mxu0 %v679
        %1884 = vmatmul.mubr.bf16.gmra.mrb[0].mxu0 %v678
        %v1885 = vpop.f32.mrb[0].mxu0
        %v1886 = vadd.f32 %v1693, %v1885
        %v1887 = vpop.f32.mrb[0].mxu0
        %v1888 = vadd.f32 %v1695, %v1887
        %v1889 = vpop.f32.mrb[0].mxu0
        %v1890 = vadd.f32 %v1697, %v1889
        %v1891 = vpop.f32.mrb[0].mxu0
        %v1892 = vadd.f32 %v1699, %v1891
        %1893 = vmatprep.mubr.bf16.mxu0 %v686
        %1894 = vmatmul.mubr.bf16.gmra.mrb[0].mxu0 %v685
        %v1895 = vpop.f32.mrb[0].mxu0
        %v1896 = vadd.f32 %v1703, %v1895
        %v1897 = vpop.f32.mrb[0].mxu0
        %v1898 = vadd.f32 %v1705, %v1897
        %v1899 = vpop.f32.mrb[0].mxu0
        %v1900 = vadd.f32 %v1707, %v1899
        %v1901 = vpop.f32.mrb[0].mxu0
        %v1902 = vadd.f32 %v1709, %v1901
        %1903 = vmatprep.mubr.bf16.mxu0 %v693
        %1904 = vmatmul.mubr.bf16.gmra.mrb[0].mxu0 %v692
        %v1905 = vpop.f32.mrb[0].mxu0
        %v1906 = vadd.f32 %v1713, %v1905
        %v1907 = vpop.f32.mrb[0].mxu0
        %v1908 = vadd.f32 %v1715, %v1907
        %v1909 = vpop.f32.mrb[0].mxu0
        %v1910 = vadd.f32 %v1717, %v1909
        %v1911 = vpop.f32.mrb[0].mxu0
        %v1912 = vadd.f32 %v1719, %v1911
        %1913 = vmatprep.mubr.bf16.mxu0 %v700
        %1914 = vmatmul.mubr.bf16.gmra.mrb[0].mxu0 %v699
        %v1915 = vpop.f32.mrb[0].mxu0
        %v1916 = vadd.f32 %v1723, %v1915
        %v1917 = vpop.f32.mrb[0].mxu0
        %v1918 = vadd.f32 %v1725, %v1917
        %v1919 = vpop.f32.mrb[0].mxu0
        %v1920 = vadd.f32 %v1727, %v1919
        %v1921 = vpop.f32.mrb[0].mxu0
        %v1922 = vadd.f32 %v1729, %v1921
        %1923 = vmatprep.mubr.bf16.mxu0 %v707
        %1924 = vmatmul.mubr.bf16.gmra.mrb[0].mxu0 %v706
        %v1925 = vpop.f32.mrb[0].mxu0
        %v1926 = vadd.f32 %v1733, %v1925
        %v1927 = vpop.f32.mrb[0].mxu0
        %v1928 = vadd.f32 %v1735, %v1927
        %v1929 = vpop.f32.mrb[0].mxu0
        %v1930 = vadd.f32 %v1737, %v1929
        %v1931 = vpop.f32.mrb[0].mxu0
        %v1932 = vadd.f32 %v1739, %v1931
        %1933 = vmatprep.mubr.bf16.mxu0 %v714
        %1934 = vmatmul.mubr.bf16.gmra.mrb[0].mxu0 %v713
        %v1935 = vpop.f32.mrb[0].mxu0
        %v1936 = vadd.f32 %v1743, %v1935
        %v1937 = vpop.f32.mrb[0].mxu0
        %v1938 = vadd.f32 %v1745, %v1937
        %v1939 = vpop.f32.mrb[0].mxu0
        %v1940 = vadd.f32 %v1747, %v1939
        %v1941 = vpop.f32.mrb[0].mxu0
        %v1942 = vadd.f32 %v1749, %v1941
        %1943 = vdwg.mxu0
        %1944 = vmatprep.subr.bf16.mxu0 %v1217
        %1945 = vmatpush1.bf16.msra.mxu0 %v1216
        %1946 = vmatprep.subr.bf16.mxu0 0
        %1947 = vmatpush1.bf16.msra.mxu0 0
        %1948 = vmatprep.subr.bf16.mxu0 0
        %1949 = vmatpush1.bf16.msra.mxu0 0
        %1950 = vmatprep.subr.bf16.mxu0 0
        %1951 = vmatpush1.bf16.msra.mxu0 0
        %1952 = vmatprep.subr.bf16.mxu0 0
        %1953 = vmatpush1.bf16.msra.mxu0 0
        %1954 = vmatprep.subr.bf16.mxu0 0
        %1955 = vmatpush1.bf16.msra.mxu0 0
        %1956 = vmatprep.subr.bf16.mxu0 0
        %1957 = vmatpush1.bf16.msra.mxu0 0
        %1958 = vmatprep.subr.bf16.mxu0 0
        %1959 = vmatpush1.bf16.msra.mxu0 0
        %1960 = vmatprep.subr.bf16.mxu0 0
        %1961 = vmatpush1.bf16.msra.mxu0 0
        %1962 = vmatprep.subr.bf16.mxu0 0
        %1963 = vmatpush1.bf16.msra.mxu0 0
        %1964 = vmatprep.subr.bf16.mxu0 0
        %1965 = vmatpush1.bf16.msra.mxu0 0
        %1966 = vmatprep.subr.bf16.mxu0 0
        %1967 = vmatpush1.bf16.msra.mxu0 0
        %1968 = vmatprep.subr.bf16.mxu0 0
        %1969 = vmatpush1.bf16.msra.mxu0 0
        %1970 = vmatprep.subr.bf16.mxu0 0
        %1971 = vmatpush1.bf16.msra.mxu0 0
        %1972 = vmatprep.subr.bf16.mxu0 0
        %1973 = vmatpush1.bf16.msra.mxu0 0
        %1974 = vmatprep.subr.bf16.mxu0 0
        %1975 = vmatpush1.bf16.msra.mxu0 0
        %1976 = vmatprep.mubr.bf16.mxu0 0
        %1977 = vmatmul.mubr.bf16.gmra.mrb[0].mxu0 %v1318
        %v1978 = vpop.f32.mrb[0].mxu0
        %v1979 = vadd.f32 %v1786, %v1978
        %v1980 = vpop.f32.mrb[0].mxu0
        %v1981 = vadd.f32 %v1788, %v1980
        %v1982 = vpop.f32.mrb[0].mxu0
        %v1983 = vadd.f32 %v1790, %v1982
        %v1984 = vpop.f32.mrb[0].mxu0
        %v1985 = vadd.f32 %v1792, %v1984
        %1986 = vmatprep.mubr.bf16.mxu0 0
        %1987 = vmatmul.mubr.bf16.gmra.mrb[0].mxu0 %v1321
        %v1988 = vpop.f32.mrb[0].mxu0
        %v1989 = vadd.f32 %v1796, %v1988
        %v1990 = vpop.f32.mrb[0].mxu0
        %v1991 = vadd.f32 %v1798, %v1990
        %v1992 = vpop.f32.mrb[0].mxu0
        %v1993 = vadd.f32 %v1800, %v1992
        %v1994 = vpop.f32.mrb[0].mxu0
        %v1995 = vadd.f32 %v1802, %v1994
        %1996 = vmatprep.mubr.bf16.mxu0 0
        %1997 = vmatmul.mubr.bf16.gmra.mrb[0].mxu0 %v1324
        %v1998 = vpop.f32.mrb[0].mxu0
        %v1999 = vadd.f32 %v1806, %v1998
        %v2000 = vpop.f32.mrb[0].mxu0
        %v2001 = vadd.f32 %v1808, %v2000
        %v2002 = vpop.f32.mrb[0].mxu0
        %v2003 = vadd.f32 %v1810, %v2002
        %v2004 = vpop.f32.mrb[0].mxu0
        %v2005 = vadd.f32 %v1812, %v2004
        %2006 = vmatprep.mubr.bf16.mxu0 0
        %2007 = vmatmul.mubr.bf16.gmra.mrb[0].mxu0 %v1327
        %v2008 = vpop.f32.mrb[0].mxu0
        %v2009 = vadd.f32 %v1816, %v2008
        %v2010 = vpop.f32.mrb[0].mxu0
        %v2011 = vadd.f32 %v1818, %v2010
        %v2012 = vpop.f32.mrb[0].mxu0
        %v2013 = vadd.f32 %v1820, %v2012
        %v2014 = vpop.f32.mrb[0].mxu0
        %v2015 = vadd.f32 %v1822, %v2014
        %2016 = vmatprep.mubr.bf16.mxu0 0
        %2017 = vmatmul.mubr.bf16.gmra.mrb[0].mxu0 %v1330
        %v2018 = vpop.f32.mrb[0].mxu0
        %v2019 = vadd.f32 %v1826, %v2018
        %v2020 = vpop.f32.mrb[0].mxu0
        %v2021 = vadd.f32 %v1828, %v2020
        %v2022 = vpop.f32.mrb[0].mxu0
        %v2023 = vadd.f32 %v1830, %v2022
        %v2024 = vpop.f32.mrb[0].mxu0
        %v2025 = vadd.f32 %v1832, %v2024
        %2026 = vmatprep.mubr.bf16.mxu0 0
        %2027 = vmatmul.mubr.bf16.gmra.mrb[0].mxu0 %v1333
        %v2028 = vpop.f32.mrb[0].mxu0
        %v2029 = vadd.f32 %v1836, %v2028
        %v2030 = vpop.f32.mrb[0].mxu0
        %v2031 = vadd.f32 %v1838, %v2030
        %v2032 = vpop.f32.mrb[0].mxu0
        %v2033 = vadd.f32 %v1840, %v2032
        %v2034 = vpop.f32.mrb[0].mxu0
        %v2035 = vadd.f32 %v1842, %v2034
        %2036 = vmatprep.mubr.bf16.mxu0 0
        %2037 = vmatmul.mubr.bf16.gmra.mrb[0].mxu0 %v1336
        %v2038 = vpop.f32.mrb[0].mxu0
        %v2039 = vadd.f32 %v1846, %v2038
        %v2040 = vpop.f32.mrb[0].mxu0
        %v2041 = vadd.f32 %v1848, %v2040
        %v2042 = vpop.f32.mrb[0].mxu0
        %v2043 = vadd.f32 %v1850, %v2042
        %v2044 = vpop.f32.mrb[0].mxu0
        %v2045 = vadd.f32 %v1852, %v2044
        %2046 = vmatprep.mubr.bf16.mxu0 0
        %2047 = vmatmul.mubr.bf16.gmra.mrb[0].mxu0 %v1339
        %v2048 = vpop.f32.mrb[0].mxu0
        %v2049 = vadd.f32 %v1856, %v2048
        %v2050 = vpop.f32.mrb[0].mxu0
        %v2051 = vadd.f32 %v1858, %v2050
        %v2052 = vpop.f32.mrb[0].mxu0
        %v2053 = vadd.f32 %v1860, %v2052
        %v2054 = vpop.f32.mrb[0].mxu0
        %v2055 = vadd.f32 %v1862, %v2054
        %2056 = vmatprep.mubr.bf16.mxu0 0
        %2057 = vmatmul.mubr.bf16.gmra.mrb[0].mxu0 %v1342
        %v2058 = vpop.f32.mrb[0].mxu0
        %v2059 = vadd.f32 %v1866, %v2058
        %v2060 = vpop.f32.mrb[0].mxu0
        %v2061 = vadd.f32 %v1868, %v2060
        %v2062 = vpop.f32.mrb[0].mxu0
        %v2063 = vadd.f32 %v1870, %v2062
        %v2064 = vpop.f32.mrb[0].mxu0
        %v2065 = vadd.f32 %v1872, %v2064
        %2066 = vmatprep.mubr.bf16.mxu0 0
        %2067 = vmatmul.mubr.bf16.gmra.mrb[0].mxu0 %v1345
        %v2068 = vpop.f32.mrb[0].mxu0
        %v2069 = vadd.f32 %v1876, %v2068
        %v2070 = vpop.f32.mrb[0].mxu0
        %v2071 = vadd.f32 %v1878, %v2070
        %v2072 = vpop.f32.mrb[0].mxu0
        %v2073 = vadd.f32 %v1880, %v2072
        %v2074 = vpop.f32.mrb[0].mxu0
        %v2075 = vadd.f32 %v1882, %v2074
        %2076 = vmatprep.mubr.bf16.mxu0 0
        %2077 = vmatmul.mubr.bf16.gmra.mrb[0].mxu0 %v1348
        %v2078 = vpop.f32.mrb[0].mxu0
        %v2079 = vadd.f32 %v1886, %v2078
        %v2080 = vpop.f32.mrb[0].mxu0
        %v2081 = vadd.f32 %v1888, %v2080
        %v2082 = vpop.f32.mrb[0].mxu0
        %v2083 = vadd.f32 %v1890, %v2082
        %v2084 = vpop.f32.mrb[0].mxu0
        %v2085 = vadd.f32 %v1892, %v2084
        %2086 = vmatprep.mubr.bf16.mxu0 0
        %2087 = vmatmul.mubr.bf16.gmra.mrb[0].mxu0 %v1351
        %v2088 = vpop.f32.mrb[0].mxu0
        %v2089 = vadd.f32 %v1896, %v2088
        %v2090 = vpop.f32.mrb[0].mxu0
        %v2091 = vadd.f32 %v1898, %v2090
        %v2092 = vpop.f32.mrb[0].mxu0
        %v2093 = vadd.f32 %v1900, %v2092
        %v2094 = vpop.f32.mrb[0].mxu0
        %v2095 = vadd.f32 %v1902, %v2094
        %2096 = vmatprep.mubr.bf16.mxu0 0
        %2097 = vmatmul.mubr.bf16.gmra.mrb[0].mxu0 %v1354
        %v2098 = vpop.f32.mrb[0].mxu0
        %v2099 = vadd.f32 %v1906, %v2098
        %v2100 = vpop.f32.mrb[0].mxu0
        %v2101 = vadd.f32 %v1908, %v2100
        %v2102 = vpop.f32.mrb[0].mxu0
        %v2103 = vadd.f32 %v1910, %v2102
        %v2104 = vpop.f32.mrb[0].mxu0
        %v2105 = vadd.f32 %v1912, %v2104
        %2106 = vmatprep.mubr.bf16.mxu0 0
        %2107 = vmatmul.mubr.bf16.gmra.mrb[0].mxu0 %v1357
        %v2108 = vpop.f32.mrb[0].mxu0
        %v2109 = vadd.f32 %v1916, %v2108
        %v2110 = vpop.f32.mrb[0].mxu0
        %v2111 = vadd.f32 %v1918, %v2110
        %v2112 = vpop.f32.mrb[0].mxu0
        %v2113 = vadd.f32 %v1920, %v2112
        %v2114 = vpop.f32.mrb[0].mxu0
        %v2115 = vadd.f32 %v1922, %v2114
        %2116 = vmatprep.mubr.bf16.mxu0 0
        %2117 = vmatmul.mubr.bf16.gmra.mrb[0].mxu0 %v1360
        %v2118 = vpop.f32.mrb[0].mxu0
        %v2119 = vadd.f32 %v1926, %v2118
        %v2120 = vpop.f32.mrb[0].mxu0
        %v2121 = vadd.f32 %v1928, %v2120
        %v2122 = vpop.f32.mrb[0].mxu0
        %v2123 = vadd.f32 %v1930, %v2122
        %v2124 = vpop.f32.mrb[0].mxu0
        %v2125 = vadd.f32 %v1932, %v2124
        %2126 = vmatprep.mubr.bf16.mxu0 0
        %2127 = vmatmul.mubr.bf16.gmra.mrb[0].mxu0 %v1363
        %v2128 = vpop.f32.mrb[0].mxu0
        %v2129 = vadd.f32 %v1936, %v2128
        %v2130 = vpop.f32.mrb[0].mxu0
        %v2131 = vadd.f32 %v1938, %v2130
        %v2132 = vpop.f32.mrb[0].mxu0
        %v2133 = vadd.f32 %v1940, %v2132
        %v2134 = vpop.f32.mrb[0].mxu0
        %v2135 = vadd.f32 %v1942, %v2134
        %2136 = vdwg.mxu0
        %vm2137 = vcmp.gt.f32.partialorder %v1979, 0.0
        %vm2138 = vcmp.gt.f32.partialorder %v1981, 0.0
        %vm2139 = vcmp.gt.f32.partialorder %v1983, 0.0
        %vm2140 = vcmp.gt.f32.partialorder %v1985, 0.0
        %vm2141 = vcmp.gt.f32.partialorder %v1989, 0.0
        %vm2142 = vcmp.gt.f32.partialorder %v1991, 0.0
        %vm2143 = vcmp.gt.f32.partialorder %v1993, 0.0
        %vm2144 = vcmp.gt.f32.partialorder %v1995, 0.0
        %vm2145 = vcmp.gt.f32.partialorder %v1999, 0.0
        %vm2146 = vcmp.gt.f32.partialorder %v2001, 0.0
        %vm2147 = vcmp.gt.f32.partialorder %v2003, 0.0
        %vm2148 = vcmp.gt.f32.partialorder %v2005, 0.0
        %vm2149 = vcmp.gt.f32.partialorder %v2009, 0.0
        %vm2150 = vcmp.gt.f32.partialorder %v2011, 0.0
        %vm2151 = vcmp.gt.f32.partialorder %v2013, 0.0
        %vm2152 = vcmp.gt.f32.partialorder %v2015, 0.0
        %vm2153 = vcmp.gt.f32.partialorder %v2019, 0.0
        %vm2154 = vcmp.gt.f32.partialorder %v2021, 0.0
        %vm2155 = vcmp.gt.f32.partialorder %v2023, 0.0
        %vm2156 = vcmp.gt.f32.partialorder %v2025, 0.0
        %vm2157 = vcmp.gt.f32.partialorder %v2029, 0.0
        %vm2158 = vcmp.gt.f32.partialorder %v2031, 0.0
        %vm2159 = vcmp.gt.f32.partialorder %v2033, 0.0
        %vm2160 = vcmp.gt.f32.partialorder %v2035, 0.0
        %vm2161 = vcmp.gt.f32.partialorder %v2039, 0.0
        %vm2162 = vcmp.gt.f32.partialorder %v2041, 0.0
        %vm2163 = vcmp.gt.f32.partialorder %v2043, 0.0
        %vm2164 = vcmp.gt.f32.partialorder %v2045, 0.0
        %vm2165 = vcmp.gt.f32.partialorder %v2049, 0.0
        %vm2166 = vcmp.gt.f32.partialorder %v2051, 0.0
        %vm2167 = vcmp.gt.f32.partialorder %v2053, 0.0
        %vm2168 = vcmp.gt.f32.partialorder %v2055, 0.0
        %vm2169 = vcmp.gt.f32.partialorder %v2059, 0.0
        %vm2170 = vcmp.gt.f32.partialorder %v2061, 0.0
        %vm2171 = vcmp.gt.f32.partialorder %v2063, 0.0
        %vm2172 = vcmp.gt.f32.partialorder %v2065, 0.0
        %vm2173 = vcmp.gt.f32.partialorder %v2069, 0.0
        %vm2174 = vcmp.gt.f32.partialorder %v2071, 0.0
        %vm2175 = vcmp.gt.f32.partialorder %v2073, 0.0
        %vm2176 = vcmp.gt.f32.partialorder %v2075, 0.0
        %vm2177 = vcmp.gt.f32.partialorder %v2079, 0.0
        %vm2178 = vcmp.gt.f32.partialorder %v2081, 0.0
        %vm2179 = vcmp.gt.f32.partialorder %v2083, 0.0
        %vm2180 = vcmp.gt.f32.partialorder %v2085, 0.0
        %vm2181 = vcmp.gt.f32.partialorder %v2089, 0.0
        %vm2182 = vcmp.gt.f32.partialorder %v2091, 0.0
        %vm2183 = vcmp.gt.f32.partialorder %v2093, 0.0
        %vm2184 = vcmp.gt.f32.partialorder %v2095, 0.0
        %vm2185 = vcmp.gt.f32.partialorder %v2099, 0.0
        %vm2186 = vcmp.gt.f32.partialorder %v2101, 0.0
        %vm2187 = vcmp.gt.f32.partialorder %v2103, 0.0
        %vm2188 = vcmp.gt.f32.partialorder %v2105, 0.0
        %vm2189 = vcmp.gt.f32.partialorder %v2109, 0.0
        %vm2190 = vcmp.gt.f32.partialorder %v2111, 0.0
        %vm2191 = vcmp.gt.f32.partialorder %v2113, 0.0
        %vm2192 = vcmp.gt.f32.partialorder %v2115, 0.0
        %vm2193 = vcmp.gt.f32.partialorder %v2119, 0.0
        %vm2194 = vcmp.gt.f32.partialorder %v2121, 0.0
        %vm2195 = vcmp.gt.f32.partialorder %v2123, 0.0
        %vm2196 = vcmp.gt.f32.partialorder %v2125, 0.0
        %vm2197 = vcmp.gt.f32.partialorder %v2129, 0.0
        %vm2198 = vcmp.gt.f32.partialorder %v2131, 0.0
        %vm2199 = vcmp.gt.f32.partialorder %v2133, 0.0
        %vm2200 = vcmp.gt.f32.partialorder %v2135, 0.0
        %v2201 = vmul.f32 %v1979, 0.2
        %v2202 = vmul.f32 %v1981, 0.2
        %v2203 = vmul.f32 %v1983, 0.2
        %v2204 = vmul.f32 %v1985, 0.2
        %v2205 = vmul.f32 %v1989, 0.2
        %v2206 = vmul.f32 %v1991, 0.2
        %v2207 = vmul.f32 %v1993, 0.2
        %v2208 = vmul.f32 %v1995, 0.2
        %v2209 = vmul.f32 %v1999, 0.2
        %v2210 = vmul.f32 %v2001, 0.2
        %v2211 = vmul.f32 %v2003, 0.2
        %v2212 = vmul.f32 %v2005, 0.2
        %v2213 = vmul.f32 %v2009, 0.2
        %v2214 = vmul.f32 %v2011, 0.2
        %v2215 = vmul.f32 %v2013, 0.2
        %v2216 = vmul.f32 %v2015, 0.2
        %v2217 = vmul.f32 %v2019, 0.2
        %v2218 = vmul.f32 %v2021, 0.2
        %v2219 = vmul.f32 %v2023, 0.2
        %v2220 = vmul.f32 %v2025, 0.2
        %v2221 = vmul.f32 %v2029, 0.2
        %v2222 = vmul.f32 %v2031, 0.2
        %v2223 = vmul.f32 %v2033, 0.2
        %v2224 = vmul.f32 %v2035, 0.2
        %v2225 = vmul.f32 %v2039, 0.2
        %v2226 = vmul.f32 %v2041, 0.2
        %v2227 = vmul.f32 %v2043, 0.2
        %v2228 = vmul.f32 %v2045, 0.2
        %v2229 = vmul.f32 %v2049, 0.2
        %v2230 = vmul.f32 %v2051, 0.2
        %v2231 = vmul.f32 %v2053, 0.2
        %v2232 = vmul.f32 %v2055, 0.2
        %v2233 = vmul.f32 %v2059, 0.2
        %v2234 = vmul.f32 %v2061, 0.2
        %v2235 = vmul.f32 %v2063, 0.2
        %v2236 = vmul.f32 %v2065, 0.2
        %v2237 = vmul.f32 %v2069, 0.2
        %v2238 = vmul.f32 %v2071, 0.2
        %v2239 = vmul.f32 %v2073, 0.2
        %v2240 = vmul.f32 %v2075, 0.2
        %v2241 = vmul.f32 %v2079, 0.2
        %v2242 = vmul.f32 %v2081, 0.2
        %v2243 = vmul.f32 %v2083, 0.2
        %v2244 = vmul.f32 %v2085, 0.2
        %v2245 = vmul.f32 %v2089, 0.2
        %v2246 = vmul.f32 %v2091, 0.2
        %v2247 = vmul.f32 %v2093, 0.2
        %v2248 = vmul.f32 %v2095, 0.2
        %v2249 = vmul.f32 %v2099, 0.2
        %v2250 = vmul.f32 %v2101, 0.2
        %v2251 = vmul.f32 %v2103, 0.2
        %v2252 = vmul.f32 %v2105, 0.2
        %v2253 = vmul.f32 %v2109, 0.2
        %v2254 = vmul.f32 %v2111, 0.2
        %v2255 = vmul.f32 %v2113, 0.2
        %v2256 = vmul.f32 %v2115, 0.2
        %v2257 = vmul.f32 %v2119, 0.2
        %v2258 = vmul.f32 %v2121, 0.2
        %v2259 = vmul.f32 %v2123, 0.2
        %v2260 = vmul.f32 %v2125, 0.2
        %v2261 = vmul.f32 %v2129, 0.2
        %v2262 = vmul.f32 %v2131, 0.2
        %v2263 = vmul.f32 %v2133, 0.2
        %v2264 = vmul.f32 %v2135, 0.2
        %v2265 = vsel %vm2137, %v1979, %v2201
        %v2266 = vsel %vm2138, %v1981, %v2202
        %v2267 = vsel %vm2139, %v1983, %v2203
        %v2268 = vsel %vm2140, %v1985, %v2204
        %v2269 = vsel %vm2141, %v1989, %v2205
        %v2270 = vsel %vm2142, %v1991, %v2206
        %v2271 = vsel %vm2143, %v1993, %v2207
        %v2272 = vsel %vm2144, %v1995, %v2208
        %v2273 = vsel %vm2145, %v1999, %v2209
        %v2274 = vsel %vm2146, %v2001, %v2210
        %v2275 = vsel %vm2147, %v2003, %v2211
        %v2276 = vsel %vm2148, %v2005, %v2212
        %v2277 = vsel %vm2149, %v2009, %v2213
        %v2278 = vsel %vm2150, %v2011, %v2214
        %v2279 = vsel %vm2151, %v2013, %v2215
        %v2280 = vsel %vm2152, %v2015, %v2216
        %v2281 = vsel %vm2153, %v2019, %v2217
        %v2282 = vsel %vm2154, %v2021, %v2218
        %v2283 = vsel %vm2155, %v2023, %v2219
        %v2284 = vsel %vm2156, %v2025, %v2220
        %v2285 = vsel %vm2157, %v2029, %v2221
        %v2286 = vsel %vm2158, %v2031, %v2222
        %v2287 = vsel %vm2159, %v2033, %v2223
        %v2288 = vsel %vm2160, %v2035, %v2224
        %v2289 = vsel %vm2161, %v2039, %v2225
        %v2290 = vsel %vm2162, %v2041, %v2226
        %v2291 = vsel %vm2163, %v2043, %v2227
        %v2292 = vsel %vm2164, %v2045, %v2228
        %v2293 = vsel %vm2165, %v2049, %v2229
        %v2294 = vsel %vm2166, %v2051, %v2230
        %v2295 = vsel %vm2167, %v2053, %v2231
        %v2296 = vsel %vm2168, %v2055, %v2232
        %v2297 = vsel %vm2169, %v2059, %v2233
        %v2298 = vsel %vm2170, %v2061, %v2234
        %v2299 = vsel %vm2171, %v2063, %v2235
        %v2300 = vsel %vm2172, %v2065, %v2236
        %v2301 = vsel %vm2173, %v2069, %v2237
        %v2302 = vsel %vm2174, %v2071, %v2238
        %v2303 = vsel %vm2175, %v2073, %v2239
        %v2304 = vsel %vm2176, %v2075, %v2240
        %v2305 = vsel %vm2177, %v2079, %v2241
        %v2306 = vsel %vm2178, %v2081, %v2242
        %v2307 = vsel %vm2179, %v2083, %v2243
        %v2308 = vsel %vm2180, %v2085, %v2244
        %v2309 = vsel %vm2181, %v2089, %v2245
        %v2310 = vsel %vm2182, %v2091, %v2246
        %v2311 = vsel %vm2183, %v2093, %v2247
        %v2312 = vsel %vm2184, %v2095, %v2248
        %v2313 = vsel %vm2185, %v2099, %v2249
        %v2314 = vsel %vm2186, %v2101, %v2250
        %v2315 = vsel %vm2187, %v2103, %v2251
        %v2316 = vsel %vm2188, %v2105, %v2252
        %v2317 = vsel %vm2189, %v2109, %v2253
        %v2318 = vsel %vm2190, %v2111, %v2254
        %v2319 = vsel %vm2191, %v2113, %v2255
        %v2320 = vsel %vm2192, %v2115, %v2256
        %v2321 = vsel %vm2193, %v2119, %v2257
        %v2322 = vsel %vm2194, %v2121, %v2258
        %v2323 = vsel %vm2195, %v2123, %v2259
        %v2324 = vsel %vm2196, %v2125, %v2260
        %v2325 = vsel %vm2197, %v2129, %v2261
        %v2326 = vsel %vm2198, %v2131, %v2262
        %v2327 = vsel %vm2199, %v2133, %v2263
        %v2328 = vsel %vm2200, %v2135, %v2264
        %v2329 = vpack.c.bf16 %v2267, %v2265
        %v2330 = vpack.c.bf16 %v2268, %v2266
        %v2331 = vpack.c.bf16 %v2271, %v2269
        %v2332 = vpack.c.bf16 %v2272, %v2270
        %v2333 = vpack.c.bf16 %v2275, %v2273
        %v2334 = vpack.c.bf16 %v2276, %v2274
        %v2335 = vpack.c.bf16 %v2279, %v2277
        %v2336 = vpack.c.bf16 %v2280, %v2278
        %v2337 = vpack.c.bf16 %v2283, %v2281
        %v2338 = vpack.c.bf16 %v2284, %v2282
        %v2339 = vpack.c.bf16 %v2287, %v2285
        %v2340 = vpack.c.bf16 %v2288, %v2286
        %v2341 = vpack.c.bf16 %v2291, %v2289
        %v2342 = vpack.c.bf16 %v2292, %v2290
        %v2343 = vpack.c.bf16 %v2295, %v2293
        %v2344 = vpack.c.bf16 %v2296, %v2294
        %v2345 = vpack.c.bf16 %v2299, %v2297
        %v2346 = vpack.c.bf16 %v2300, %v2298
        %v2347 = vpack.c.bf16 %v2303, %v2301
        %v2348 = vpack.c.bf16 %v2304, %v2302
        %v2349 = vpack.c.bf16 %v2307, %v2305
        %v2350 = vpack.c.bf16 %v2308, %v2306
        %v2351 = vpack.c.bf16 %v2311, %v2309
        %v2352 = vpack.c.bf16 %v2312, %v2310
        %v2353 = vpack.c.bf16 %v2315, %v2313
        %v2354 = vpack.c.bf16 %v2316, %v2314
        %v2355 = vpack.c.bf16 %v2319, %v2317
        %v2356 = vpack.c.bf16 %v2320, %v2318
        %v2357 = vpack.c.bf16 %v2323, %v2321
        %v2358 = vpack.c.bf16 %v2324, %v2322
        %v2359 = vpack.c.bf16 %v2327, %v2325
        %v2360 = vpack.c.bf16 %v2328, %v2326
        %v2361 = vld [vmem:[#allocation9] sm:$0xff]
        %v2362 = vld [vmem:[#allocation9 + $0x8] sm:$0xff]
        %v2363 = vld [vmem:[#allocation9 + $0x10] sm:$0xff]
        %v2364 = vld [vmem:[#allocation9 + $0x18] sm:$0xff]
        %v2365 = vld [vmem:[#allocation9 + $0x20] sm:$0xff]
        %v2366 = vld [vmem:[#allocation9 + $0x28] sm:$0xff]
        %v2367 = vld [vmem:[#allocation9 + $0x30] sm:$0xff]
        %v2368 = vld [vmem:[#allocation9 + $0x38] sm:$0xff]
        %v2369 = vld [vmem:[#allocation9 + $0x40] sm:$0xff]
        %v2370 = vld [vmem:[#allocation9 + $0x48] sm:$0xff]
        %v2371 = vld [vmem:[#allocation9 + $0x50] sm:$0xff]
        %v2372 = vld [vmem:[#allocation9 + $0x58] sm:$0xff]
        %v2373 = vld [vmem:[#allocation9 + $0x60] sm:$0xff]
        %v2374 = vld [vmem:[#allocation9 + $0x68] sm:$0xff]
        %v2375 = vld [vmem:[#allocation9 + $0x70] sm:$0xff]
        %v2376 = vld [vmem:[#allocation9 + $0x78] sm:$0xff]
        %v2377 = vld [vmem:[#allocation9 + $0x80] sm:$0xff]
        %v2378 = vld [vmem:[#allocation9 + $0x88] sm:$0xff]
        %v2379 = vld [vmem:[#allocation9 + $0x90] sm:$0xff]
        %v2380 = vld [vmem:[#allocation9 + $0x98] sm:$0xff]
        %v2381 = vld [vmem:[#allocation9 + $0xa0] sm:$0xff]
        %v2382 = vld [vmem:[#allocation9 + $0xa8] sm:$0xff]
        %v2383 = vld [vmem:[#allocation9 + $0xb0] sm:$0xff]
        %v2384 = vld [vmem:[#allocation9 + $0xb8] sm:$0xff]
        %v2385 = vld [vmem:[#allocation9 + $0xc0] sm:$0xff]
        %v2386 = vld [vmem:[#allocation9 + $0xc8] sm:$0xff]
        %v2387 = vld [vmem:[#allocation9 + $0xd0] sm:$0xff]
        %v2388 = vld [vmem:[#allocation9 + $0xd8] sm:$0xff]
        %v2389 = vld [vmem:[#allocation9 + $0xe0] sm:$0xff]
        %v2390 = vld [vmem:[#allocation9 + $0xe8] sm:$0xff]
        %v2391 = vld [vmem:[#allocation9 + $0xf0] sm:$0xff]
        %v2392 = vld [vmem:[#allocation9 + $0xf8] sm:$0xff]
        %v2393 = vld [vmem:[#allocation11] sm:$0x3]
        %v2395 = vlaneseq
        %v2396 = vshrl.u32 %v2395, 7
        %v2397 = vsub.s32 0, %v2396
        %v2398 = vrot.slane %v2393, %v2397
        %v2399 = vlaneseq
        %v2400 = vshrl.u32 %v2399, 7
        %v2401 = vsub.s32 1, %v2400
        %v2402 = vrot.slane %v2393, %v2401
        %v2437 = vunpack.c.l.b16 %v2361
        %v2438 = vunpack.c.h.b16 %v2361
        %v2439 = vunpack.c.l.b16 %v2362
        %v2440 = vunpack.c.h.b16 %v2362
        %v2441 = vunpack.c.l.b16 %v2363
        %v2442 = vunpack.c.h.b16 %v2363
        %v2443 = vunpack.c.l.b16 %v2364
        %v2444 = vunpack.c.h.b16 %v2364
        %v2445 = vunpack.c.l.b16 %v2365
        %v2446 = vunpack.c.h.b16 %v2365
        %v2447 = vunpack.c.l.b16 %v2366
        %v2448 = vunpack.c.h.b16 %v2366
        %v2449 = vunpack.c.l.b16 %v2367
        %v2450 = vunpack.c.h.b16 %v2367
        %v2451 = vunpack.c.l.b16 %v2368
        %v2452 = vunpack.c.h.b16 %v2368
        %v2453 = vunpack.c.l.b16 %v2369
        %v2454 = vunpack.c.h.b16 %v2369
        %v2455 = vunpack.c.l.b16 %v2370
        %v2456 = vunpack.c.h.b16 %v2370
        %v2457 = vunpack.c.l.b16 %v2371
        %v2458 = vunpack.c.h.b16 %v2371
        %v2459 = vunpack.c.l.b16 %v2372
        %v2460 = vunpack.c.h.b16 %v2372
        %v2461 = vunpack.c.l.b16 %v2373
        %v2462 = vunpack.c.h.b16 %v2373
        %v2463 = vunpack.c.l.b16 %v2374
        %v2464 = vunpack.c.h.b16 %v2374
        %v2465 = vunpack.c.l.b16 %v2375
        %v2466 = vunpack.c.h.b16 %v2375
        %v2467 = vunpack.c.l.b16 %v2376
        %v2468 = vunpack.c.h.b16 %v2376
        %v2469 = vunpack.c.l.b16 %v2377
        %v2470 = vunpack.c.h.b16 %v2377
        %v2471 = vunpack.c.l.b16 %v2378
        %v2472 = vunpack.c.h.b16 %v2378
        %v2473 = vunpack.c.l.b16 %v2379
        %v2474 = vunpack.c.h.b16 %v2379
        %v2475 = vunpack.c.l.b16 %v2380
        %v2476 = vunpack.c.h.b16 %v2380
        %v2477 = vunpack.c.l.b16 %v2381
        %v2478 = vunpack.c.h.b16 %v2381
        %v2479 = vunpack.c.l.b16 %v2382
        %v2480 = vunpack.c.h.b16 %v2382
        %v2481 = vunpack.c.l.b16 %v2383
        %v2482 = vunpack.c.h.b16 %v2383
        %v2483 = vunpack.c.l.b16 %v2384
        %v2484 = vunpack.c.h.b16 %v2384
        %v2485 = vunpack.c.l.b16 %v2385
        %v2486 = vunpack.c.h.b16 %v2385
        %v2487 = vunpack.c.l.b16 %v2386
        %v2488 = vunpack.c.h.b16 %v2386
        %v2489 = vunpack.c.l.b16 %v2387
        %v2490 = vunpack.c.h.b16 %v2387
        %v2491 = vunpack.c.l.b16 %v2388
        %v2492 = vunpack.c.h.b16 %v2388
        %v2493 = vunpack.c.l.b16 %v2389
        %v2494 = vunpack.c.h.b16 %v2389
        %v2495 = vunpack.c.l.b16 %v2390
        %v2496 = vunpack.c.h.b16 %v2390
        %v2497 = vunpack.c.l.b16 %v2391
        %v2498 = vunpack.c.h.b16 %v2391
        %v2499 = vunpack.c.l.b16 %v2392
        %v2500 = vunpack.c.h.b16 %v2392
        %v2501 = vpack.c.b16 %v2439, %v2437
        %v2502 = vpack.c.b16 %v2440, %v2438
        %v2503 = vpack.c.b16 %v2443, %v2441
        %v2504 = vpack.c.b16 %v2444, %v2442
        %v2505 = vpack.c.b16 %v2447, %v2445
        %v2506 = vpack.c.b16 %v2448, %v2446
        %v2507 = vpack.c.b16 %v2451, %v2449
        %v2508 = vpack.c.b16 %v2452, %v2450
        %v2509 = vpack.c.b16 %v2455, %v2453
        %v2510 = vpack.c.b16 %v2456, %v2454
        %v2511 = vpack.c.b16 %v2459, %v2457
        %v2512 = vpack.c.b16 %v2460, %v2458
        %v2513 = vpack.c.b16 %v2463, %v2461
        %v2514 = vpack.c.b16 %v2464, %v2462
        %v2515 = vpack.c.b16 %v2467, %v2465
        %v2516 = vpack.c.b16 %v2468, %v2466
        %v2517 = vpack.c.b16 %v2471, %v2469
        %v2518 = vpack.c.b16 %v2472, %v2470
        %v2519 = vpack.c.b16 %v2475, %v2473
        %v2520 = vpack.c.b16 %v2476, %v2474
        %v2521 = vpack.c.b16 %v2479, %v2477
        %v2522 = vpack.c.b16 %v2480, %v2478
        %v2523 = vpack.c.b16 %v2483, %v2481
        %v2524 = vpack.c.b16 %v2484, %v2482
        %v2525 = vpack.c.b16 %v2487, %v2485
        %v2526 = vpack.c.b16 %v2488, %v2486
        %v2527 = vpack.c.b16 %v2491, %v2489
        %v2528 = vpack.c.b16 %v2492, %v2490
        %v2529 = vpack.c.b16 %v2495, %v2493
        %v2530 = vpack.c.b16 %v2496, %v2494
        %v2531 = vpack.c.b16 %v2499, %v2497
        %v2532 = vpack.c.b16 %v2500, %v2498
        %2565 = vmatprep.subr.bf16.mxu0 %v2502
        %2566 = vmatpush1.bf16.msra.mxu0 %v2501
        %2567 = vmatprep.subr.bf16.mxu0 %v2504
        %2568 = vmatpush1.bf16.msra.mxu0 %v2503
        %2569 = vmatprep.subr.bf16.mxu0 %v2506
        %2570 = vmatpush1.bf16.msra.mxu0 %v2505
        %2571 = vmatprep.subr.bf16.mxu0 %v2508
        %2572 = vmatpush1.bf16.msra.mxu0 %v2507
        %2573 = vmatprep.subr.bf16.mxu0 %v2510
        %2574 = vmatpush1.bf16.msra.mxu0 %v2509
        %2575 = vmatprep.subr.bf16.mxu0 %v2512
        %2576 = vmatpush1.bf16.msra.mxu0 %v2511
        %2577 = vmatprep.subr.bf16.mxu0 %v2514
        %2578 = vmatpush1.bf16.msra.mxu0 %v2513
        %2579 = vmatprep.subr.bf16.mxu0 %v2516
        %2580 = vmatpush1.bf16.msra.mxu0 %v2515
        %2581 = vmatprep.subr.bf16.mxu0 %v2518
        %2582 = vmatpush1.bf16.msra.mxu0 %v2517
        %2583 = vmatprep.subr.bf16.mxu0 %v2520
        %2584 = vmatpush1.bf16.msra.mxu0 %v2519
        %2585 = vmatprep.subr.bf16.mxu0 %v2522
        %2586 = vmatpush1.bf16.msra.mxu0 %v2521
        %2587 = vmatprep.subr.bf16.mxu0 %v2524
        %2588 = vmatpush1.bf16.msra.mxu0 %v2523
        %2589 = vmatprep.subr.bf16.mxu0 %v2526
        %2590 = vmatpush1.bf16.msra.mxu0 %v2525
        %2591 = vmatprep.subr.bf16.mxu0 %v2528
        %2592 = vmatpush1.bf16.msra.mxu0 %v2527
        %2593 = vmatprep.subr.bf16.mxu0 %v2530
        %2594 = vmatpush1.bf16.msra.mxu0 %v2529
        %2595 = vmatprep.subr.bf16.mxu0 %v2532
        %2596 = vmatpush1.bf16.msra.mxu0 %v2531
        %2597 = vmatprep.mubr.bf16.mxu0 %v2330
        %2598 = vmatmul.mubr.bf16.gmra.mrb[0].mxu0 %v2329
        %v2599 = vpop.f32.mrb[0].mxu0
        %v2600 = vadd.f32 %v2398, %v2599
        %v2601 = vpop.f32.mrb[0].mxu0
        %v2602 = vadd.f32 %v2402, %v2601
        %v2603 = vpop.f32.mrb[0].mxu0
        %v2604 = vadd.f32 %v2398, %v2603
        %v2605 = vpop.f32.mrb[0].mxu0
        %v2606 = vadd.f32 %v2402, %v2605
        %2607 = vmatprep.mubr.bf16.mxu0 %v2332
        %2608 = vmatmul.mubr.bf16.gmra.mrb[0].mxu0 %v2331
        %v2609 = vpop.f32.mrb[0].mxu0
        %v2610 = vadd.f32 %v2398, %v2609
        %v2611 = vpop.f32.mrb[0].mxu0
        %v2612 = vadd.f32 %v2402, %v2611
        %v2613 = vpop.f32.mrb[0].mxu0
        %v2614 = vadd.f32 %v2398, %v2613
        %v2615 = vpop.f32.mrb[0].mxu0
        %v2616 = vadd.f32 %v2402, %v2615
        %2617 = vmatprep.mubr.bf16.mxu0 %v2334
        %2618 = vmatmul.mubr.bf16.gmra.mrb[0].mxu0 %v2333
        %v2619 = vpop.f32.mrb[0].mxu0
        %v2620 = vadd.f32 %v2398, %v2619
        %v2621 = vpop.f32.mrb[0].mxu0
        %v2622 = vadd.f32 %v2402, %v2621
        %v2623 = vpop.f32.mrb[0].mxu0
        %v2624 = vadd.f32 %v2398, %v2623
        %v2625 = vpop.f32.mrb[0].mxu0
        %v2626 = vadd.f32 %v2402, %v2625
        %2627 = vmatprep.mubr.bf16.mxu0 %v2336
        %2628 = vmatmul.mubr.bf16.gmra.mrb[0].mxu0 %v2335
        %v2629 = vpop.f32.mrb[0].mxu0
        %v2630 = vadd.f32 %v2398, %v2629
        %v2631 = vpop.f32.mrb[0].mxu0
        %v2632 = vadd.f32 %v2402, %v2631
        %v2633 = vpop.f32.mrb[0].mxu0
        %v2634 = vadd.f32 %v2398, %v2633
        %v2635 = vpop.f32.mrb[0].mxu0
        %v2636 = vadd.f32 %v2402, %v2635
        %2637 = vmatprep.mubr.bf16.mxu0 %v2338
        %2638 = vmatmul.mubr.bf16.gmra.mrb[0].mxu0 %v2337
        %v2639 = vpop.f32.mrb[0].mxu0
        %v2640 = vadd.f32 %v2398, %v2639
        %v2641 = vpop.f32.mrb[0].mxu0
        %v2642 = vadd.f32 %v2402, %v2641
        %v2643 = vpop.f32.mrb[0].mxu0
        %v2644 = vadd.f32 %v2398, %v2643
        %v2645 = vpop.f32.mrb[0].mxu0
        %v2646 = vadd.f32 %v2402, %v2645
        %2647 = vmatprep.mubr.bf16.mxu0 %v2340
        %2648 = vmatmul.mubr.bf16.gmra.mrb[0].mxu0 %v2339
        %v2649 = vpop.f32.mrb[0].mxu0
        %v2650 = vadd.f32 %v2398, %v2649
        %v2651 = vpop.f32.mrb[0].mxu0
        %v2652 = vadd.f32 %v2402, %v2651
        %v2653 = vpop.f32.mrb[0].mxu0
        %v2654 = vadd.f32 %v2398, %v2653
        %v2655 = vpop.f32.mrb[0].mxu0
        %v2656 = vadd.f32 %v2402, %v2655
        %2657 = vmatprep.mubr.bf16.mxu0 %v2342
        %2658 = vmatmul.mubr.bf16.gmra.mrb[0].mxu0 %v2341
        %v2659 = vpop.f32.mrb[0].mxu0
        %v2660 = vadd.f32 %v2398, %v2659
        %v2661 = vpop.f32.mrb[0].mxu0
        %v2662 = vadd.f32 %v2402, %v2661
        %v2663 = vpop.f32.mrb[0].mxu0
        %v2664 = vadd.f32 %v2398, %v2663
        %v2665 = vpop.f32.mrb[0].mxu0
        %v2666 = vadd.f32 %v2402, %v2665
        %2667 = vmatprep.mubr.bf16.mxu0 %v2344
        %2668 = vmatmul.mubr.bf16.gmra.mrb[0].mxu0 %v2343
        %v2669 = vpop.f32.mrb[0].mxu0
        %v2670 = vadd.f32 %v2398, %v2669
        %v2671 = vpop.f32.mrb[0].mxu0
        %v2672 = vadd.f32 %v2402, %v2671
        %v2673 = vpop.f32.mrb[0].mxu0
        %v2674 = vadd.f32 %v2398, %v2673
        %v2675 = vpop.f32.mrb[0].mxu0
        %v2676 = vadd.f32 %v2402, %v2675
        %2677 = vmatprep.mubr.bf16.mxu0 %v2346
        %2678 = vmatmul.mubr.bf16.gmra.mrb[0].mxu0 %v2345
        %v2679 = vpop.f32.mrb[0].mxu0
        %v2680 = vadd.f32 %v2398, %v2679
        %v2681 = vpop.f32.mrb[0].mxu0
        %v2682 = vadd.f32 %v2402, %v2681
        %v2683 = vpop.f32.mrb[0].mxu0
        %v2684 = vadd.f32 %v2398, %v2683
        %v2685 = vpop.f32.mrb[0].mxu0
        %v2686 = vadd.f32 %v2402, %v2685
        %2687 = vmatprep.mubr.bf16.mxu0 %v2348
        %2688 = vmatmul.mubr.bf16.gmra.mrb[0].mxu0 %v2347
        %v2689 = vpop.f32.mrb[0].mxu0
        %v2690 = vadd.f32 %v2398, %v2689
        %v2691 = vpop.f32.mrb[0].mxu0
        %v2692 = vadd.f32 %v2402, %v2691
        %v2693 = vpop.f32.mrb[0].mxu0
        %v2694 = vadd.f32 %v2398, %v2693
        %v2695 = vpop.f32.mrb[0].mxu0
        %v2696 = vadd.f32 %v2402, %v2695
        %2697 = vmatprep.mubr.bf16.mxu0 %v2350
        %2698 = vmatmul.mubr.bf16.gmra.mrb[0].mxu0 %v2349
        %v2699 = vpop.f32.mrb[0].mxu0
        %v2700 = vadd.f32 %v2398, %v2699
        %v2701 = vpop.f32.mrb[0].mxu0
        %v2702 = vadd.f32 %v2402, %v2701
        %v2703 = vpop.f32.mrb[0].mxu0
        %v2704 = vadd.f32 %v2398, %v2703
        %v2705 = vpop.f32.mrb[0].mxu0
        %v2706 = vadd.f32 %v2402, %v2705
        %2707 = vmatprep.mubr.bf16.mxu0 %v2352
        %2708 = vmatmul.mubr.bf16.gmra.mrb[0].mxu0 %v2351
        %v2709 = vpop.f32.mrb[0].mxu0
        %v2710 = vadd.f32 %v2398, %v2709
        %v2711 = vpop.f32.mrb[0].mxu0
        %v2712 = vadd.f32 %v2402, %v2711
        %v2713 = vpop.f32.mrb[0].mxu0
        %v2714 = vadd.f32 %v2398, %v2713
        %v2715 = vpop.f32.mrb[0].mxu0
        %v2716 = vadd.f32 %v2402, %v2715
        %2717 = vmatprep.mubr.bf16.mxu0 %v2354
        %2718 = vmatmul.mubr.bf16.gmra.mrb[0].mxu0 %v2353
        %v2719 = vpop.f32.mrb[0].mxu0
        %v2720 = vadd.f32 %v2398, %v2719
        %v2721 = vpop.f32.mrb[0].mxu0
        %v2722 = vadd.f32 %v2402, %v2721
        %v2723 = vpop.f32.mrb[0].mxu0
        %v2724 = vadd.f32 %v2398, %v2723
        %v2725 = vpop.f32.mrb[0].mxu0
        %v2726 = vadd.f32 %v2402, %v2725
        %2727 = vmatprep.mubr.bf16.mxu0 %v2356
        %2728 = vmatmul.mubr.bf16.gmra.mrb[0].mxu0 %v2355
        %v2729 = vpop.f32.mrb[0].mxu0
        %v2730 = vadd.f32 %v2398, %v2729
        %v2731 = vpop.f32.mrb[0].mxu0
        %v2732 = vadd.f32 %v2402, %v2731
        %v2733 = vpop.f32.mrb[0].mxu0
        %v2734 = vadd.f32 %v2398, %v2733
        %v2735 = vpop.f32.mrb[0].mxu0
        %v2736 = vadd.f32 %v2402, %v2735
        %2737 = vmatprep.mubr.bf16.mxu0 %v2358
        %2738 = vmatmul.mubr.bf16.gmra.mrb[0].mxu0 %v2357
        %v2739 = vpop.f32.mrb[0].mxu0
        %v2740 = vadd.f32 %v2398, %v2739
        %v2741 = vpop.f32.mrb[0].mxu0
        %v2742 = vadd.f32 %v2402, %v2741
        %v2743 = vpop.f32.mrb[0].mxu0
        %v2744 = vadd.f32 %v2398, %v2743
        %v2745 = vpop.f32.mrb[0].mxu0
        %v2746 = vadd.f32 %v2402, %v2745
        %2747 = vmatprep.mubr.bf16.mxu0 %v2360
        %2748 = vmatmul.mubr.bf16.gmra.mrb[0].mxu0 %v2359
        %v2749 = vpop.f32.mrb[0].mxu0
        %v2750 = vadd.f32 %v2398, %v2749
        %v2751 = vpop.f32.mrb[0].mxu0
        %v2752 = vadd.f32 %v2402, %v2751
        %v2753 = vpop.f32.mrb[0].mxu0
        %v2754 = vadd.f32 %v2398, %v2753
        %v2755 = vpop.f32.mrb[0].mxu0
        %v2756 = vadd.f32 %v2402, %v2755
        %2757 = vdwg.mxu0
        %vm2758 = vcmp.gt.f32.partialorder %v2600, 0.0
        %vm2759 = vcmp.gt.f32.partialorder %v2602, 0.0
        %vm2760 = vcmp.gt.f32.partialorder %v2604, 0.0
        %vm2761 = vcmp.gt.f32.partialorder %v2606, 0.0
        %vm2762 = vcmp.gt.f32.partialorder %v2610, 0.0
        %vm2763 = vcmp.gt.f32.partialorder %v2612, 0.0
        %vm2764 = vcmp.gt.f32.partialorder %v2614, 0.0
        %vm2765 = vcmp.gt.f32.partialorder %v2616, 0.0
        %vm2766 = vcmp.gt.f32.partialorder %v2620, 0.0
        %vm2767 = vcmp.gt.f32.partialorder %v2622, 0.0
        %vm2768 = vcmp.gt.f32.partialorder %v2624, 0.0
        %vm2769 = vcmp.gt.f32.partialorder %v2626, 0.0
        %vm2770 = vcmp.gt.f32.partialorder %v2630, 0.0
        %vm2771 = vcmp.gt.f32.partialorder %v2632, 0.0
        %vm2772 = vcmp.gt.f32.partialorder %v2634, 0.0
        %vm2773 = vcmp.gt.f32.partialorder %v2636, 0.0
        %vm2774 = vcmp.gt.f32.partialorder %v2640, 0.0
        %vm2775 = vcmp.gt.f32.partialorder %v2642, 0.0
        %vm2776 = vcmp.gt.f32.partialorder %v2644, 0.0
        %vm2777 = vcmp.gt.f32.partialorder %v2646, 0.0
        %vm2778 = vcmp.gt.f32.partialorder %v2650, 0.0
        %vm2779 = vcmp.gt.f32.partialorder %v2652, 0.0
        %vm2780 = vcmp.gt.f32.partialorder %v2654, 0.0
        %vm2781 = vcmp.gt.f32.partialorder %v2656, 0.0
        %vm2782 = vcmp.gt.f32.partialorder %v2660, 0.0
        %vm2783 = vcmp.gt.f32.partialorder %v2662, 0.0
        %vm2784 = vcmp.gt.f32.partialorder %v2664, 0.0
        %vm2785 = vcmp.gt.f32.partialorder %v2666, 0.0
        %vm2786 = vcmp.gt.f32.partialorder %v2670, 0.0
        %vm2787 = vcmp.gt.f32.partialorder %v2672, 0.0
        %vm2788 = vcmp.gt.f32.partialorder %v2674, 0.0
        %vm2789 = vcmp.gt.f32.partialorder %v2676, 0.0
        %vm2790 = vcmp.gt.f32.partialorder %v2680, 0.0
        %vm2791 = vcmp.gt.f32.partialorder %v2682, 0.0
        %vm2792 = vcmp.gt.f32.partialorder %v2684, 0.0
        %vm2793 = vcmp.gt.f32.partialorder %v2686, 0.0
        %vm2794 = vcmp.gt.f32.partialorder %v2690, 0.0
        %vm2795 = vcmp.gt.f32.partialorder %v2692, 0.0
        %vm2796 = vcmp.gt.f32.partialorder %v2694, 0.0
        %vm2797 = vcmp.gt.f32.partialorder %v2696, 0.0
        %vm2798 = vcmp.gt.f32.partialorder %v2700, 0.0
        %vm2799 = vcmp.gt.f32.partialorder %v2702, 0.0
        %vm2800 = vcmp.gt.f32.partialorder %v2704, 0.0
        %vm2801 = vcmp.gt.f32.partialorder %v2706, 0.0
        %vm2802 = vcmp.gt.f32.partialorder %v2710, 0.0
        %vm2803 = vcmp.gt.f32.partialorder %v2712, 0.0
        %vm2804 = vcmp.gt.f32.partialorder %v2714, 0.0
        %vm2805 = vcmp.gt.f32.partialorder %v2716, 0.0
        %vm2806 = vcmp.gt.f32.partialorder %v2720, 0.0
        %vm2807 = vcmp.gt.f32.partialorder %v2722, 0.0
        %vm2808 = vcmp.gt.f32.partialorder %v2724, 0.0
        %vm2809 = vcmp.gt.f32.partialorder %v2726, 0.0
        %vm2810 = vcmp.gt.f32.partialorder %v2730, 0.0
        %vm2811 = vcmp.gt.f32.partialorder %v2732, 0.0
        %vm2812 = vcmp.gt.f32.partialorder %v2734, 0.0
        %vm2813 = vcmp.gt.f32.partialorder %v2736, 0.0
        %vm2814 = vcmp.gt.f32.partialorder %v2740, 0.0
        %vm2815 = vcmp.gt.f32.partialorder %v2742, 0.0
        %vm2816 = vcmp.gt.f32.partialorder %v2744, 0.0
        %vm2817 = vcmp.gt.f32.partialorder %v2746, 0.0
        %vm2818 = vcmp.gt.f32.partialorder %v2750, 0.0
        %vm2819 = vcmp.gt.f32.partialorder %v2752, 0.0
        %vm2820 = vcmp.gt.f32.partialorder %v2754, 0.0
        %vm2821 = vcmp.gt.f32.partialorder %v2756, 0.0
        %v2822 = vmul.f32 %v2600, 0.2
        %v2823 = vmul.f32 %v2602, 0.2
        %v2824 = vmul.f32 %v2604, 0.2
        %v2825 = vmul.f32 %v2606, 0.2
        %v2826 = vmul.f32 %v2610, 0.2
        %v2827 = vmul.f32 %v2612, 0.2
        %v2828 = vmul.f32 %v2614, 0.2
        %v2829 = vmul.f32 %v2616, 0.2
        %v2830 = vmul.f32 %v2620, 0.2
        %v2831 = vmul.f32 %v2622, 0.2
        %v2832 = vmul.f32 %v2624, 0.2
        %v2833 = vmul.f32 %v2626, 0.2
        %v2834 = vmul.f32 %v2630, 0.2
        %v2835 = vmul.f32 %v2632, 0.2
        %v2836 = vmul.f32 %v2634, 0.2
        %v2837 = vmul.f32 %v2636, 0.2
        %v2838 = vmul.f32 %v2640, 0.2
        %v2839 = vmul.f32 %v2642, 0.2
        %v2840 = vmul.f32 %v2644, 0.2
        %v2841 = vmul.f32 %v2646, 0.2
        %v2842 = vmul.f32 %v2650, 0.2
        %v2843 = vmul.f32 %v2652, 0.2
        %v2844 = vmul.f32 %v2654, 0.2
        %v2845 = vmul.f32 %v2656, 0.2
        %v2846 = vmul.f32 %v2660, 0.2
        %v2847 = vmul.f32 %v2662, 0.2
        %v2848 = vmul.f32 %v2664, 0.2
        %v2849 = vmul.f32 %v2666, 0.2
        %v2850 = vmul.f32 %v2670, 0.2
        %v2851 = vmul.f32 %v2672, 0.2
        %v2852 = vmul.f32 %v2674, 0.2
        %v2853 = vmul.f32 %v2676, 0.2
        %v2854 = vmul.f32 %v2680, 0.2
        %v2855 = vmul.f32 %v2682, 0.2
        %v2856 = vmul.f32 %v2684, 0.2
        %v2857 = vmul.f32 %v2686, 0.2
        %v2858 = vmul.f32 %v2690, 0.2
        %v2859 = vmul.f32 %v2692, 0.2
        %v2860 = vmul.f32 %v2694, 0.2
        %v2861 = vmul.f32 %v2696, 0.2
        %v2862 = vmul.f32 %v2700, 0.2
        %v2863 = vmul.f32 %v2702, 0.2
        %v2864 = vmul.f32 %v2704, 0.2
        %v2865 = vmul.f32 %v2706, 0.2
        %v2866 = vmul.f32 %v2710, 0.2
        %v2867 = vmul.f32 %v2712, 0.2
        %v2868 = vmul.f32 %v2714, 0.2
        %v2869 = vmul.f32 %v2716, 0.2
        %v2870 = vmul.f32 %v2720, 0.2
        %v2871 = vmul.f32 %v2722, 0.2
        %v2872 = vmul.f32 %v2724, 0.2
        %v2873 = vmul.f32 %v2726, 0.2
        %v2874 = vmul.f32 %v2730, 0.2
        %v2875 = vmul.f32 %v2732, 0.2
        %v2876 = vmul.f32 %v2734, 0.2
        %v2877 = vmul.f32 %v2736, 0.2
        %v2878 = vmul.f32 %v2740, 0.2
        %v2879 = vmul.f32 %v2742, 0.2
        %v2880 = vmul.f32 %v2744, 0.2
        %v2881 = vmul.f32 %v2746, 0.2
        %v2882 = vmul.f32 %v2750, 0.2
        %v2883 = vmul.f32 %v2752, 0.2
        %v2884 = vmul.f32 %v2754, 0.2
        %v2885 = vmul.f32 %v2756, 0.2
        %v2886 = vsel %vm2758, %v2600, %v2822
        %v2887 = vsel %vm2759, %v2602, %v2823
        %v2888 = vsel %vm2760, %v2604, %v2824
        %v2889 = vsel %vm2761, %v2606, %v2825
        %v2890 = vsel %vm2762, %v2610, %v2826
        %v2891 = vsel %vm2763, %v2612, %v2827
        %v2892 = vsel %vm2764, %v2614, %v2828
        %v2893 = vsel %vm2765, %v2616, %v2829
        %v2894 = vsel %vm2766, %v2620, %v2830
        %v2895 = vsel %vm2767, %v2622, %v2831
        %v2896 = vsel %vm2768, %v2624, %v2832
        %v2897 = vsel %vm2769, %v2626, %v2833
        %v2898 = vsel %vm2770, %v2630, %v2834
        %v2899 = vsel %vm2771, %v2632, %v2835
        %v2900 = vsel %vm2772, %v2634, %v2836
        %v2901 = vsel %vm2773, %v2636, %v2837
        %v2902 = vsel %vm2774, %v2640, %v2838
        %v2903 = vsel %vm2775, %v2642, %v2839
        %v2904 = vsel %vm2776, %v2644, %v2840
        %v2905 = vsel %vm2777, %v2646, %v2841
        %v2906 = vsel %vm2778, %v2650, %v2842
        %v2907 = vsel %vm2779, %v2652, %v2843
        %v2908 = vsel %vm2780, %v2654, %v2844
        %v2909 = vsel %vm2781, %v2656, %v2845
        %v2910 = vsel %vm2782, %v2660, %v2846
        %v2911 = vsel %vm2783, %v2662, %v2847
        %v2912 = vsel %vm2784, %v2664, %v2848
        %v2913 = vsel %vm2785, %v2666, %v2849
        %v2914 = vsel %vm2786, %v2670, %v2850
        %v2915 = vsel %vm2787, %v2672, %v2851
        %v2916 = vsel %vm2788, %v2674, %v2852
        %v2917 = vsel %vm2789, %v2676, %v2853
        %v2918 = vsel %vm2790, %v2680, %v2854
        %v2919 = vsel %vm2791, %v2682, %v2855
        %v2920 = vsel %vm2792, %v2684, %v2856
        %v2921 = vsel %vm2793, %v2686, %v2857
        %v2922 = vsel %vm2794, %v2690, %v2858
        %v2923 = vsel %vm2795, %v2692, %v2859
        %v2924 = vsel %vm2796, %v2694, %v2860
        %v2925 = vsel %vm2797, %v2696, %v2861
        %v2926 = vsel %vm2798, %v2700, %v2862
        %v2927 = vsel %vm2799, %v2702, %v2863
        %v2928 = vsel %vm2800, %v2704, %v2864
        %v2929 = vsel %vm2801, %v2706, %v2865
        %v2930 = vsel %vm2802, %v2710, %v2866
        %v2931 = vsel %vm2803, %v2712, %v2867
        %v2932 = vsel %vm2804, %v2714, %v2868
        %v2933 = vsel %vm2805, %v2716, %v2869
        %v2934 = vsel %vm2806, %v2720, %v2870
        %v2935 = vsel %vm2807, %v2722, %v2871
        %v2936 = vsel %vm2808, %v2724, %v2872
        %v2937 = vsel %vm2809, %v2726, %v2873
        %v2938 = vsel %vm2810, %v2730, %v2874
        %v2939 = vsel %vm2811, %v2732, %v2875
        %v2940 = vsel %vm2812, %v2734, %v2876
        %v2941 = vsel %vm2813, %v2736, %v2877
        %v2942 = vsel %vm2814, %v2740, %v2878
        %v2943 = vsel %vm2815, %v2742, %v2879
        %v2944 = vsel %vm2816, %v2744, %v2880
        %v2945 = vsel %vm2817, %v2746, %v2881
        %v2946 = vsel %vm2818, %v2750, %v2882
        %v2947 = vsel %vm2819, %v2752, %v2883
        %v2948 = vsel %vm2820, %v2754, %v2884
        %v2949 = vsel %vm2821, %v2756, %v2885
        %v2950 = vld [vmem:[#allocation12] sm:$0x3]
        %v2952 = vlaneseq
        %v2953 = vshrl.u32 %v2952, 7
        %v2954 = vsub.s32 0, %v2953
        %v2955 = vrot.slane %v2950, %v2954
        %v2956 = vlaneseq
        %v2957 = vshrl.u32 %v2956, 7
        %v2958 = vsub.s32 1, %v2957
        %v2959 = vrot.slane %v2950, %v2958
        %v2962 = vmul.f32 %v2886, %v2955
        %v2963 = vmul.f32 %v2887, %v2959
        %v2964 = vmul.f32 %v2888, %v2955
        %v2965 = vmul.f32 %v2889, %v2959
        %v2966 = vmul.f32 %v2890, %v2955
        %v2967 = vmul.f32 %v2891, %v2959
        %v2968 = vmul.f32 %v2892, %v2955
        %v2969 = vmul.f32 %v2893, %v2959
        %v2970 = vmul.f32 %v2894, %v2955
        %v2971 = vmul.f32 %v2895, %v2959
        %v2972 = vmul.f32 %v2896, %v2955
        %v2973 = vmul.f32 %v2897, %v2959
        %v2974 = vmul.f32 %v2898, %v2955
        %v2975 = vmul.f32 %v2899, %v2959
        %v2976 = vmul.f32 %v2900, %v2955
        %v2977 = vmul.f32 %v2901, %v2959
        %v2978 = vmul.f32 %v2902, %v2955
        %v2979 = vmul.f32 %v2903, %v2959
        %v2980 = vmul.f32 %v2904, %v2955
        %v2981 = vmul.f32 %v2905, %v2959
        %v2982 = vmul.f32 %v2906, %v2955
        %v2983 = vmul.f32 %v2907, %v2959
        %v2984 = vmul.f32 %v2908, %v2955
        %v2985 = vmul.f32 %v2909, %v2959
        %v2986 = vmul.f32 %v2910, %v2955
        %v2987 = vmul.f32 %v2911, %v2959
        %v2988 = vmul.f32 %v2912, %v2955
        %v2989 = vmul.f32 %v2913, %v2959
        %v2990 = vmul.f32 %v2914, %v2955
        %v2991 = vmul.f32 %v2915, %v2959
        %v2992 = vmul.f32 %v2916, %v2955
        %v2993 = vmul.f32 %v2917, %v2959
        %v2994 = vmul.f32 %v2918, %v2955
        %v2995 = vmul.f32 %v2919, %v2959
        %v2996 = vmul.f32 %v2920, %v2955
        %v2997 = vmul.f32 %v2921, %v2959
        %v2998 = vmul.f32 %v2922, %v2955
        %v2999 = vmul.f32 %v2923, %v2959
        %v3000 = vmul.f32 %v2924, %v2955
        %v3001 = vmul.f32 %v2925, %v2959
        %v3002 = vmul.f32 %v2926, %v2955
        %v3003 = vmul.f32 %v2927, %v2959
        %v3004 = vmul.f32 %v2928, %v2955
        %v3005 = vmul.f32 %v2929, %v2959
        %v3006 = vmul.f32 %v2930, %v2955
        %v3007 = vmul.f32 %v2931, %v2959
        %v3008 = vmul.f32 %v2932, %v2955
        %v3009 = vmul.f32 %v2933, %v2959
        %v3010 = vmul.f32 %v2934, %v2955
        %v3011 = vmul.f32 %v2935, %v2959
        %v3012 = vmul.f32 %v2936, %v2955
        %v3013 = vmul.f32 %v2937, %v2959
        %v3014 = vmul.f32 %v2938, %v2955
        %v3015 = vmul.f32 %v2939, %v2959
        %v3016 = vmul.f32 %v2940, %v2955
        %v3017 = vmul.f32 %v2941, %v2959
        %v3018 = vmul.f32 %v2942, %v2955
        %v3019 = vmul.f32 %v2943, %v2959
        %v3020 = vmul.f32 %v2944, %v2955
        %v3021 = vmul.f32 %v2945, %v2959
        %v3022 = vmul.f32 %v2946, %v2955
        %v3023 = vmul.f32 %v2947, %v2959
        %v3024 = vmul.f32 %v2948, %v2955
        %v3025 = vmul.f32 %v2949, %v2959
        %v3026 = vadd.f32 %v2962, %v2963
        %3027 = vadd.xlane.f32.xlu0 %v3026
        %v3028 = vpop.xlane.xlu0 %3027
        %v3029 = vadd.f32 %v2964, %v2965
        %3030 = vadd.xlane.f32.xlu0 %v3029
        %v3031 = vpop.xlane.xlu0 %3030
        %v3032 = vadd.f32 %v2966, %v2967
        %3033 = vadd.xlane.f32.xlu0 %v3032
        %v3034 = vpop.xlane.xlu0 %3033
        %v3035 = vadd.f32 %v2968, %v2969
        %3036 = vadd.xlane.f32.xlu0 %v3035
        %v3037 = vpop.xlane.xlu0 %3036
        %v3038 = vadd.f32 %v2970, %v2971
        %3039 = vadd.xlane.f32.xlu0 %v3038
        %v3040 = vpop.xlane.xlu0 %3039
        %v3041 = vadd.f32 %v2972, %v2973
        %3042 = vadd.xlane.f32.xlu0 %v3041
        %v3043 = vpop.xlane.xlu0 %3042
        %v3044 = vadd.f32 %v2974, %v2975
        %3045 = vadd.xlane.f32.xlu0 %v3044
        %v3046 = vpop.xlane.xlu0 %3045
        %v3047 = vadd.f32 %v2976, %v2977
        %3048 = vadd.xlane.f32.xlu0 %v3047
        %v3049 = vpop.xlane.xlu0 %3048
        %v3050 = vadd.f32 %v2978, %v2979
        %3051 = vadd.xlane.f32.xlu0 %v3050
        %v3052 = vpop.xlane.xlu0 %3051
        %v3053 = vadd.f32 %v2980, %v2981
        %3054 = vadd.xlane.f32.xlu0 %v3053
        %v3055 = vpop.xlane.xlu0 %3054
        %v3056 = vadd.f32 %v2982, %v2983
        %3057 = vadd.xlane.f32.xlu0 %v3056
        %v3058 = vpop.xlane.xlu0 %3057
        %v3059 = vadd.f32 %v2984, %v2985
        %3060 = vadd.xlane.f32.xlu0 %v3059
        %v3061 = vpop.xlane.xlu0 %3060
        %v3062 = vadd.f32 %v2986, %v2987
        %3063 = vadd.xlane.f32.xlu0 %v3062
        %v3064 = vpop.xlane.xlu0 %3063
        %v3065 = vadd.f32 %v2988, %v2989
        %3066 = vadd.xlane.f32.xlu0 %v3065
        %v3067 = vpop.xlane.xlu0 %3066
        %v3068 = vadd.f32 %v2990, %v2991
        %3069 = vadd.xlane.f32.xlu0 %v3068
        %v3070 = vpop.xlane.xlu0 %3069
        %v3071 = vadd.f32 %v2992, %v2993
        %3072 = vadd.xlane.f32.xlu0 %v3071
        %v3073 = vpop.xlane.xlu0 %3072
        %v3074 = vadd.f32 %v2994, %v2995
        %3075 = vadd.xlane.f32.xlu0 %v3074
        %v3076 = vpop.xlane.xlu0 %3075
        %v3077 = vadd.f32 %v2996, %v2997
        %3078 = vadd.xlane.f32.xlu0 %v3077
        %v3079 = vpop.xlane.xlu0 %3078
        %v3080 = vadd.f32 %v2998, %v2999
        %3081 = vadd.xlane.f32.xlu0 %v3080
        %v3082 = vpop.xlane.xlu0 %3081
        %v3083 = vadd.f32 %v3000, %v3001
        %3084 = vadd.xlane.f32.xlu0 %v3083
        %v3085 = vpop.xlane.xlu0 %3084
        %v3086 = vadd.f32 %v3002, %v3003
        %3087 = vadd.xlane.f32.xlu0 %v3086
        %v3088 = vpop.xlane.xlu0 %3087
        %v3089 = vadd.f32 %v3004, %v3005
        %3090 = vadd.xlane.f32.xlu0 %v3089
        %v3091 = vpop.xlane.xlu0 %3090
        %v3092 = vadd.f32 %v3006, %v3007
        %3093 = vadd.xlane.f32.xlu0 %v3092
        %v3094 = vpop.xlane.xlu0 %3093
        %v3095 = vadd.f32 %v3008, %v3009
        %3096 = vadd.xlane.f32.xlu0 %v3095
        %v3097 = vpop.xlane.xlu0 %3096
        %v3098 = vadd.f32 %v3010, %v3011
        %3099 = vadd.xlane.f32.xlu0 %v3098
        %v3100 = vpop.xlane.xlu0 %3099
        %v3101 = vadd.f32 %v3012, %v3013
        %3102 = vadd.xlane.f32.xlu0 %v3101
        %v3103 = vpop.xlane.xlu0 %3102
        %v3104 = vadd.f32 %v3014, %v3015
        %3105 = vadd.xlane.f32.xlu0 %v3104
        %v3106 = vpop.xlane.xlu0 %3105
        %v3107 = vadd.f32 %v3016, %v3017
        %3108 = vadd.xlane.f32.xlu0 %v3107
        %v3109 = vpop.xlane.xlu0 %3108
        %v3110 = vadd.f32 %v3018, %v3019
        %3111 = vadd.xlane.f32.xlu0 %v3110
        %v3112 = vpop.xlane.xlu0 %3111
        %v3113 = vadd.f32 %v3020, %v3021
        %3114 = vadd.xlane.f32.xlu0 %v3113
        %v3115 = vpop.xlane.xlu0 %3114
        %v3116 = vadd.f32 %v3022, %v3023
        %3117 = vadd.xlane.f32.xlu0 %v3116
        %v3118 = vpop.xlane.xlu0 %3117
        %v3119 = vadd.f32 %v3024, %v3025
        %3120 = vadd.xlane.f32.xlu0 %v3119
        %v3121 = vpop.xlane.xlu0 %3120
        %s3122 = sld [smem:[#allocation2]]
        %v3123 = vstv %s3122
        %v3124 = vadd.f32 %v3028, %v3123
        %v3125 = vadd.f32 %v3031, %v3123
        %v3126 = vadd.f32 %v3034, %v3123
        %v3127 = vadd.f32 %v3037, %v3123
        %v3128 = vadd.f32 %v3040, %v3123
        %v3129 = vadd.f32 %v3043, %v3123
        %v3130 = vadd.f32 %v3046, %v3123
        %v3131 = vadd.f32 %v3049, %v3123
        %v3132 = vadd.f32 %v3052, %v3123
        %v3133 = vadd.f32 %v3055, %v3123
        %v3134 = vadd.f32 %v3058, %v3123
        %v3135 = vadd.f32 %v3061, %v3123
        %v3136 = vadd.f32 %v3064, %v3123
        %v3137 = vadd.f32 %v3067, %v3123
        %v3138 = vadd.f32 %v3070, %v3123
        %v3139 = vadd.f32 %v3073, %v3123
        %v3140 = vadd.f32 %v3076, %v3123
        %v3141 = vadd.f32 %v3079, %v3123
        %v3142 = vadd.f32 %v3082, %v3123
        %v3143 = vadd.f32 %v3085, %v3123
        %v3144 = vadd.f32 %v3088, %v3123
        %v3145 = vadd.f32 %v3091, %v3123
        %v3146 = vadd.f32 %v3094, %v3123
        %v3147 = vadd.f32 %v3097, %v3123
        %v3148 = vadd.f32 %v3100, %v3123
        %v3149 = vadd.f32 %v3103, %v3123
        %v3150 = vadd.f32 %v3106, %v3123
        %v3151 = vadd.f32 %v3109, %v3123
        %v3152 = vadd.f32 %v3112, %v3123
        %v3153 = vadd.f32 %v3115, %v3123
        %v3154 = vadd.f32 %v3118, %v3123
        %v3155 = vadd.f32 %v3121, %v3123
        %v3156 = vsub.f32 0.0, %v3124
        %v3157 = vsub.f32 0.0, %v3125
        %v3158 = vsub.f32 0.0, %v3126
        %v3159 = vsub.f32 0.0, %v3127
        %v3160 = vsub.f32 0.0, %v3128
        %v3161 = vsub.f32 0.0, %v3129
        %v3162 = vsub.f32 0.0, %v3130
        %v3163 = vsub.f32 0.0, %v3131
        %v3164 = vsub.f32 0.0, %v3132
        %v3165 = vsub.f32 0.0, %v3133
        %v3166 = vsub.f32 0.0, %v3134
        %v3167 = vsub.f32 0.0, %v3135
        %v3168 = vsub.f32 0.0, %v3136
        %v3169 = vsub.f32 0.0, %v3137
        %v3170 = vsub.f32 0.0, %v3138
        %v3171 = vsub.f32 0.0, %v3139
        %v3172 = vsub.f32 0.0, %v3140
        %v3173 = vsub.f32 0.0, %v3141
        %v3174 = vsub.f32 0.0, %v3142
        %v3175 = vsub.f32 0.0, %v3143
        %v3176 = vsub.f32 0.0, %v3144
        %v3177 = vsub.f32 0.0, %v3145
        %v3178 = vsub.f32 0.0, %v3146
        %v3179 = vsub.f32 0.0, %v3147
        %v3180 = vsub.f32 0.0, %v3148
        %v3181 = vsub.f32 0.0, %v3149
        %v3182 = vsub.f32 0.0, %v3150
        %v3183 = vsub.f32 0.0, %v3151
        %v3184 = vsub.f32 0.0, %v3152
        %v3185 = vsub.f32 0.0, %v3153
        %v3186 = vsub.f32 0.0, %v3154
        %v3187 = vsub.f32 0.0, %v3155
        %v3188 = vmul.f32 %v3156, 1.442695
        %v3189 = vpow.pop %v3188
        %v3190 = vmul.f32 %v3157, 1.442695
        %v3191 = vpow.pop %v3190
        %v3192 = vmul.f32 %v3158, 1.442695
        %v3193 = vpow.pop %v3192
        %v3194 = vmul.f32 %v3159, 1.442695
        %v3195 = vpow.pop %v3194
        %v3196 = vmul.f32 %v3160, 1.442695
        %v3197 = vpow.pop %v3196
        %v3198 = vmul.f32 %v3161, 1.442695
        %v3199 = vpow.pop %v3198
        %v3200 = vmul.f32 %v3162, 1.442695
        %v3201 = vpow.pop %v3200
        %v3202 = vmul.f32 %v3163, 1.442695
        %v3203 = vpow.pop %v3202
        %v3204 = vmul.f32 %v3164, 1.442695
        %v3205 = vpow.pop %v3204
        %v3206 = vmul.f32 %v3165, 1.442695
        %v3207 = vpow.pop %v3206
        %v3208 = vmul.f32 %v3166, 1.442695
        %v3209 = vpow.pop %v3208
        %v3210 = vmul.f32 %v3167, 1.442695
        %v3211 = vpow.pop %v3210
        %v3212 = vmul.f32 %v3168, 1.442695
        %v3213 = vpow.pop %v3212
        %v3214 = vmul.f32 %v3169, 1.442695
        %v3215 = vpow.pop %v3214
        %v3216 = vmul.f32 %v3170, 1.442695
        %v3217 = vpow.pop %v3216
        %v3218 = vmul.f32 %v3171, 1.442695
        %v3219 = vpow.pop %v3218
        %v3220 = vmul.f32 %v3172, 1.442695
        %v3221 = vpow.pop %v3220
        %v3222 = vmul.f32 %v3173, 1.442695
        %v3223 = vpow.pop %v3222
        %v3224 = vmul.f32 %v3174, 1.442695
        %v3225 = vpow.pop %v3224
        %v3226 = vmul.f32 %v3175, 1.442695
        %v3227 = vpow.pop %v3226
        %v3228 = vmul.f32 %v3176, 1.442695
        %v3229 = vpow.pop %v3228
        %v3230 = vmul.f32 %v3177, 1.442695
        %v3231 = vpow.pop %v3230
        %v3232 = vmul.f32 %v3178, 1.442695
        %v3233 = vpow.pop %v3232
        %v3234 = vmul.f32 %v3179, 1.442695
        %v3235 = vpow.pop %v3234
        %v3236 = vmul.f32 %v3180, 1.442695
        %v3237 = vpow.pop %v3236
        %v3238 = vmul.f32 %v3181, 1.442695
        %v3239 = vpow.pop %v3238
        %v3240 = vmul.f32 %v3182, 1.442695
        %v3241 = vpow.pop %v3240
        %v3242 = vmul.f32 %v3183, 1.442695
        %v3243 = vpow.pop %v3242
        %v3244 = vmul.f32 %v3184, 1.442695
        %v3245 = vpow.pop %v3244
        %v3246 = vmul.f32 %v3185, 1.442695
        %v3247 = vpow.pop %v3246
        %v3248 = vmul.f32 %v3186, 1.442695
        %v3249 = vpow.pop %v3248
        %v3250 = vmul.f32 %v3187, 1.442695
        %v3251 = vpow.pop %v3250
        %v3252 = vadd.f32 %v3189, 1.0
        %v3253 = vadd.f32 %v3191, 1.0
        %v3254 = vadd.f32 %v3193, 1.0
        %v3255 = vadd.f32 %v3195, 1.0
        %v3256 = vadd.f32 %v3197, 1.0
        %v3257 = vadd.f32 %v3199, 1.0
        %v3258 = vadd.f32 %v3201, 1.0
        %v3259 = vadd.f32 %v3203, 1.0
        %v3260 = vadd.f32 %v3205, 1.0
        %v3261 = vadd.f32 %v3207, 1.0
        %v3262 = vadd.f32 %v3209, 1.0
        %v3263 = vadd.f32 %v3211, 1.0
        %v3264 = vadd.f32 %v3213, 1.0
        %v3265 = vadd.f32 %v3215, 1.0
        %v3266 = vadd.f32 %v3217, 1.0
        %v3267 = vadd.f32 %v3219, 1.0
        %v3268 = vadd.f32 %v3221, 1.0
        %v3269 = vadd.f32 %v3223, 1.0
        %v3270 = vadd.f32 %v3225, 1.0
        %v3271 = vadd.f32 %v3227, 1.0
        %v3272 = vadd.f32 %v3229, 1.0
        %v3273 = vadd.f32 %v3231, 1.0
        %v3274 = vadd.f32 %v3233, 1.0
        %v3275 = vadd.f32 %v3235, 1.0
        %v3276 = vadd.f32 %v3237, 1.0
        %v3277 = vadd.f32 %v3239, 1.0
        %v3278 = vadd.f32 %v3241, 1.0
        %v3279 = vadd.f32 %v3243, 1.0
        %v3280 = vadd.f32 %v3245, 1.0
        %v3281 = vadd.f32 %v3247, 1.0
        %v3282 = vadd.f32 %v3249, 1.0
        %v3283 = vadd.f32 %v3251, 1.0
        %v3284 = vrcp.pop %v3252
        %v3285 = vmul.f32 1.0, %v3284
        %v3286 = vrcp.pop %v3253
        %v3287 = vmul.f32 1.0, %v3286
        %v3288 = vrcp.pop %v3254
        %v3289 = vmul.f32 1.0, %v3288
        %v3290 = vrcp.pop %v3255
        %v3291 = vmul.f32 1.0, %v3290
        %v3292 = vrcp.pop %v3256
        %v3293 = vmul.f32 1.0, %v3292
        %v3294 = vrcp.pop %v3257
        %v3295 = vmul.f32 1.0, %v3294
        %v3296 = vrcp.pop %v3258
        %v3297 = vmul.f32 1.0, %v3296
        %v3298 = vrcp.pop %v3259
        %v3299 = vmul.f32 1.0, %v3298
        %v3300 = vrcp.pop %v3260
        %v3301 = vmul.f32 1.0, %v3300
        %v3302 = vrcp.pop %v3261
        %v3303 = vmul.f32 1.0, %v3302
        %v3304 = vrcp.pop %v3262
        %v3305 = vmul.f32 1.0, %v3304
        %v3306 = vrcp.pop %v3263
        %v3307 = vmul.f32 1.0, %v3306
        %v3308 = vrcp.pop %v3264
        %v3309 = vmul.f32 1.0, %v3308
        %v3310 = vrcp.pop %v3265
        %v3311 = vmul.f32 1.0, %v3310
        %v3312 = vrcp.pop %v3266
        %v3313 = vmul.f32 1.0, %v3312
        %v3314 = vrcp.pop %v3267
        %v3315 = vmul.f32 1.0, %v3314
        %v3316 = vrcp.pop %v3268
        %v3317 = vmul.f32 1.0, %v3316
        %v3318 = vrcp.pop %v3269
        %v3319 = vmul.f32 1.0, %v3318
        %v3320 = vrcp.pop %v3270
        %v3321 = vmul.f32 1.0, %v3320
        %v3322 = vrcp.pop %v3271
        %v3323 = vmul.f32 1.0, %v3322
        %v3324 = vrcp.pop %v3272
        %v3325 = vmul.f32 1.0, %v3324
        %v3326 = vrcp.pop %v3273
        %v3327 = vmul.f32 1.0, %v3326
        %v3328 = vrcp.pop %v3274
        %v3329 = vmul.f32 1.0, %v3328
        %v3330 = vrcp.pop %v3275
        %v3331 = vmul.f32 1.0, %v3330
        %v3332 = vrcp.pop %v3276
        %v3333 = vmul.f32 1.0, %v3332
        %v3334 = vrcp.pop %v3277
        %v3335 = vmul.f32 1.0, %v3334
        %v3336 = vrcp.pop %v3278
        %v3337 = vmul.f32 1.0, %v3336
        %v3338 = vrcp.pop %v3279
        %v3339 = vmul.f32 1.0, %v3338
        %v3340 = vrcp.pop %v3280
        %v3341 = vmul.f32 1.0, %v3340
        %v3342 = vrcp.pop %v3281
        %v3343 = vmul.f32 1.0, %v3342
        %v3344 = vrcp.pop %v3282
        %v3345 = vmul.f32 1.0, %v3344
        %v3346 = vrcp.pop %v3283
        %v3347 = vmul.f32 1.0, %v3346
        %v3380 = vlaneseq
        %v3381 = vand.u32 %v3380, 127
        %v3382 = vlaneseq
        %v3383 = vshrl.u32 %v3382, 7
        %v3384 = vsub.s32 %v3381, %v3383
        %v3385 = vrot.slane %v3285, %v3384
        %v3386 = vadd.s32 %v3381, 4294967288
        %v3387 = vlaneseq
        %v3388 = vshrl.u32 %v3387, 7
        %v3389 = vsub.s32 %v3386, %v3388
        %v3390 = vrot.slane %v3287, %v3389
        %vm3391 = vcmask 130112
        %v3392 = vsel %vm3391, %v3390, %v3385
        %v3393 = vadd.s32 %v3381, 4294967280
        %v3394 = vlaneseq
        %v3395 = vshrl.u32 %v3394, 7
        %v3396 = vsub.s32 %v3393, %v3395
        %v3397 = vrot.slane %v3289, %v3396
        %vm3398 = vcmask 195712
        %v3399 = vsel %vm3398, %v3397, %v3392
        %v3400 = vadd.s32 %v3381, 4294967272
        %v3401 = vlaneseq
        %v3402 = vshrl.u32 %v3401, 7
        %v3403 = vsub.s32 %v3400, %v3402
        %v3404 = vrot.slane %v3291, %v3403
        %vm3405 = vcmask 261312
        %v3406 = vsel %vm3405, %v3404, %v3399
        %v3407 = vadd.s32 %v3381, 4294967264
        %v3408 = vlaneseq
        %v3409 = vshrl.u32 %v3408, 7
        %v3410 = vsub.s32 %v3407, %v3409
        %v3411 = vrot.slane %v3293, %v3410
        %vm3412 = vcmask 326912
        %v3413 = vsel %vm3412, %v3411, %v3406
        %v3414 = vadd.s32 %v3381, 4294967256
        %v3415 = vlaneseq
        %v3416 = vshrl.u32 %v3415, 7
        %v3417 = vsub.s32 %v3414, %v3416
        %v3418 = vrot.slane %v3295, %v3417
        %vm3419 = vcmask 392512
        %v3420 = vsel %vm3419, %v3418, %v3413
        %v3421 = vadd.s32 %v3381, 4294967248
        %v3422 = vlaneseq
        %v3423 = vshrl.u32 %v3422, 7
        %v3424 = vsub.s32 %v3421, %v3423
        %v3425 = vrot.slane %v3297, %v3424
        %vm3426 = vcmask 458112
        %v3427 = vsel %vm3426, %v3425, %v3420
        %v3428 = vadd.s32 %v3381, 4294967240
        %v3429 = vlaneseq
        %v3430 = vshrl.u32 %v3429, 7
        %v3431 = vsub.s32 %v3428, %v3430
        %v3432 = vrot.slane %v3299, %v3431
        %vm3433 = vcmask 523712
        %v3434 = vsel %vm3433, %v3432, %v3427
        %v3435 = vadd.s32 %v3381, 4294967232
        %v3436 = vlaneseq
        %v3437 = vshrl.u32 %v3436, 7
        %v3438 = vsub.s32 %v3435, %v3437
        %v3439 = vrot.slane %v3301, %v3438
        %vm3440 = vcmask 589312
        %v3441 = vsel %vm3440, %v3439, %v3434
        %v3442 = vadd.s32 %v3381, 4294967224
        %v3443 = vlaneseq
        %v3444 = vshrl.u32 %v3443, 7
        %v3445 = vsub.s32 %v3442, %v3444
        %v3446 = vrot.slane %v3303, %v3445
        %vm3447 = vcmask 654912
        %v3448 = vsel %vm3447, %v3446, %v3441
        %v3449 = vadd.s32 %v3381, 4294967216
        %v3450 = vlaneseq
        %v3451 = vshrl.u32 %v3450, 7
        %v3452 = vsub.s32 %v3449, %v3451
        %v3453 = vrot.slane %v3305, %v3452
        %vm3454 = vcmask 720512
        %v3455 = vsel %vm3454, %v3453, %v3448
        %v3456 = vadd.s32 %v3381, 4294967208
        %v3457 = vlaneseq
        %v3458 = vshrl.u32 %v3457, 7
        %v3459 = vsub.s32 %v3456, %v3458
        %v3460 = vrot.slane %v3307, %v3459
        %vm3461 = vcmask 786112
        %v3462 = vsel %vm3461, %v3460, %v3455
        %v3463 = vadd.s32 %v3381, 4294967200
        %v3464 = vlaneseq
        %v3465 = vshrl.u32 %v3464, 7
        %v3466 = vsub.s32 %v3463, %v3465
        %v3467 = vrot.slane %v3309, %v3466
        %vm3468 = vcmask 851712
        %v3469 = vsel %vm3468, %v3467, %v3462
        %v3470 = vadd.s32 %v3381, 4294967192
        %v3471 = vlaneseq
        %v3472 = vshrl.u32 %v3471, 7
        %v3473 = vsub.s32 %v3470, %v3472
        %v3474 = vrot.slane %v3311, %v3473
        %vm3475 = vcmask 917312
        %v3476 = vsel %vm3475, %v3474, %v3469
        %v3477 = vadd.s32 %v3381, 4294967184
        %v3478 = vlaneseq
        %v3479 = vshrl.u32 %v3478, 7
        %v3480 = vsub.s32 %v3477, %v3479
        %v3481 = vrot.slane %v3313, %v3480
        %vm3482 = vcmask 982912
        %v3483 = vsel %vm3482, %v3481, %v3476
        %v3484 = vadd.s32 %v3381, 4294967176
        %v3485 = vlaneseq
        %v3486 = vshrl.u32 %v3485, 7
        %v3487 = vsub.s32 %v3484, %v3486
        %v3488 = vrot.slane %v3315, %v3487
        %vm3489 = vcmask 1048512
        %v3490 = vsel %vm3489, %v3488, %v3483
        %v3491 = vlaneseq
        %v3492 = vshrl.u32 %v3491, 7
        %v3493 = vsub.s32 %v3381, %v3492
        %v3494 = vrot.slane %v3317, %v3493
        %v3495 = vlaneseq
        %v3496 = vshrl.u32 %v3495, 7
        %v3497 = vsub.s32 %v3386, %v3496
        %v3498 = vrot.slane %v3319, %v3497
        %v3499 = vsel %vm3391, %v3498, %v3494
        %v3500 = vlaneseq
        %v3501 = vshrl.u32 %v3500, 7
        %v3502 = vsub.s32 %v3393, %v3501
        %v3503 = vrot.slane %v3321, %v3502
        %v3504 = vsel %vm3398, %v3503, %v3499
        %v3505 = vlaneseq
        %v3506 = vshrl.u32 %v3505, 7
        %v3507 = vsub.s32 %v3400, %v3506
        %v3508 = vrot.slane %v3323, %v3507
        %v3509 = vsel %vm3405, %v3508, %v3504
        %v3510 = vlaneseq
        %v3511 = vshrl.u32 %v3510, 7
        %v3512 = vsub.s32 %v3407, %v3511
        %v3513 = vrot.slane %v3325, %v3512
        %v3514 = vsel %vm3412, %v3513, %v3509
        %v3515 = vlaneseq
        %v3516 = vshrl.u32 %v3515, 7
        %v3517 = vsub.s32 %v3414, %v3516
        %v3518 = vrot.slane %v3327, %v3517
        %v3519 = vsel %vm3419, %v3518, %v3514
        %v3520 = vlaneseq
        %v3521 = vshrl.u32 %v3520, 7
        %v3522 = vsub.s32 %v3421, %v3521
        %v3523 = vrot.slane %v3329, %v3522
        %v3524 = vsel %vm3426, %v3523, %v3519
        %v3525 = vlaneseq
        %v3526 = vshrl.u32 %v3525, 7
        %v3527 = vsub.s32 %v3428, %v3526
        %v3528 = vrot.slane %v3331, %v3527
        %v3529 = vsel %vm3433, %v3528, %v3524
        %v3530 = vlaneseq
        %v3531 = vshrl.u32 %v3530, 7
        %v3532 = vsub.s32 %v3435, %v3531
        %v3533 = vrot.slane %v3333, %v3532
        %v3534 = vsel %vm3440, %v3533, %v3529
        %v3535 = vlaneseq
        %v3536 = vshrl.u32 %v3535, 7
        %v3537 = vsub.s32 %v3442, %v3536
        %v3538 = vrot.slane %v3335, %v3537
        %v3539 = vsel %vm3447, %v3538, %v3534
        %v3540 = vlaneseq
        %v3541 = vshrl.u32 %v3540, 7
        %v3542 = vsub.s32 %v3449, %v3541
        %v3543 = vrot.slane %v3337, %v3542
        %v3544 = vsel %vm3454, %v3543, %v3539
        %v3545 = vlaneseq
        %v3546 = vshrl.u32 %v3545, 7
        %v3547 = vsub.s32 %v3456, %v3546
        %v3548 = vrot.slane %v3339, %v3547
        %v3549 = vsel %vm3461, %v3548, %v3544
        %v3550 = vlaneseq
        %v3551 = vshrl.u32 %v3550, 7
        %v3552 = vsub.s32 %v3463, %v3551
        %v3553 = vrot.slane %v3341, %v3552
        %v3554 = vsel %vm3468, %v3553, %v3549
        %v3555 = vlaneseq
        %v3556 = vshrl.u32 %v3555, 7
        %v3557 = vsub.s32 %v3470, %v3556
        %v3558 = vrot.slane %v3343, %v3557
        %v3559 = vsel %vm3475, %v3558, %v3554
        %v3560 = vlaneseq
        %v3561 = vshrl.u32 %v3560, 7
        %v3562 = vsub.s32 %v3477, %v3561
        %v3563 = vrot.slane %v3345, %v3562
        %v3564 = vsel %vm3482, %v3563, %v3559
        %v3565 = vlaneseq
        %v3566 = vshrl.u32 %v3565, 7
        %v3567 = vsub.s32 %v3484, %v3566
        %v3568 = vrot.slane %v3347, %v3567
        %v3569 = vsel %vm3489, %v3568, %v3564
        %vm3570 = vcmask 1041409
        %v3571 = vsel %vm3570, %v3569, %v3490
        %3573 = vst [vmem:[%s372] sm:$0x3] %v3571
        %s3574 = sand.u32 %s188, 1
        %s3575 = scalar_lea.sflag [#allocation5], %s3574
        %s3576 = sand.u32 %s188, 1
        %s3577 = smul.addr %s3576, 2
        %s3578 = scalar_lea.vmem [#allocation14], %s3577
        // Predicated region
        $region73: #{tpu_custom_call.1} parent=47 // pred_check
          %p3579 = pneg %p198
        $region74: #{tpu_custom_call.1} parent=47 // pred_check_branch
          %3581 = sbr.rel (%p3579) target = $region76
        $region75: #{tpu_custom_call.1} parent=47 // pred_region
          %s3583 = ssub.s32 32, 32
          %3584 = vsyncadd %s3575, %s3583
          %s3585 = smul.addr %s28, 32
          %s3586 = scalar_lea.hbm %s7, %s3585
          %s3588 = sshll.u32 %s3578, 4
          %s3589 = int_to_ptr.vmem [resolvable:$true] %s3588
          %3591 = dma.vmem_to_hbm [thread:$0]  %s3589, 32, %s3586, %s3575
        $region76: #{tpu_custom_call.1} parent=47 // pred_fallthru
          _
      $region48: #{tpu_custom_call.1} parent=5 // pred_fallthru
        _
      %p3592 = scmp.le.s32.totalorder 2, %s23
      // Predicated region
      $region77: #{tpu_custom_call.1} parent=5 // pred_check
        %p3593 = pneg %p3592
      $region78: #{tpu_custom_call.1} parent=5 // pred_check_branch
        %3595 = sbr.rel (%p3593) target = $region80
      $region79: #{tpu_custom_call.1} parent=5 // pred_region
        %s3596 = ssub.s32 %s23, 2
        // Predicated region
        $region81: #{tpu_custom_call.1} parent=79 // pred_check
          %p3597 = pneg %p204
        $region82: #{tpu_custom_call.1} parent=79 // pred_check_branch
          %3599 = sbr.rel (%p3597) target = $region84
        $region83: #{tpu_custom_call.1} parent=79 // pred_region
          %s3600 = sand.u32 %s189, 1
          %s3601 = scalar_lea.sflag [#allocation5], %s3600
          %s3602 = sand.u32 %s189, 1
          %s3603 = smul.addr %s3602, 2
          %s3604 = scalar_lea.vmem [#allocation14], %s3603
          %3605 = dma.done %s3601, 32
        $region84: #{tpu_custom_call.1} parent=79 // pred_fallthru
          _
      $region80: #{tpu_custom_call.1} parent=5 // pred_fallthru
        _
    $region6: #{tpu_custom_call.1} parent=1 // loop_footer
      %s27 = sadd.s32 1, %s23
    $region7: #{tpu_custom_call.1} parent=1 // loop_footer_branch
      %22 = sbr.rel target = $region3
    $region8: #{tpu_custom_call.1} parent=1 // loop_exit
      _
    %3606 = vsyncpa [#allocation4], 1
    %s3607 = scalar_lea.sflag [#allocation4], 1
    %3608 = vsyncpa %s3607, 1
    %3609 = vsyncpa [#allocation7], 1
    %3610 = vsyncpa [#allocation10], 1
    %3611 = vsyncpa [#allocation13], 1
    %3612 = vsyncpa [#allocation5], 1
    %s3613 = scalar_lea.sflag [#allocation5], 1
    %3614 = vsyncpa %s3613, 1

</llo_original>
